<compile_context>
chip_gen: v6e
topology: v6e:2x2x1
jax: 0.10.0
libtpu: 0.0.40
codegen_flags: <defaults>
</compile_context>

<pallas_src>
import jax
import jax.numpy as jnp
from jax.experimental import pallas as pl
from jax.experimental.pallas import tpu as pltpu

# ----- small synthetic config (mirrors SenLen / dimC / EncodedDim / dimE) -----
B = 2              # batch
SENLEN = 8         # SenLen (sequence length)
HID = 32           # dimC (BERT hidden size)
NHEAD = 4
DHEAD = HID // NHEAD
FFN = 64           # intermediate size
NLAYERS = 2
VOCAB = 100
ENCODED_DIM = 2 * HID      # EncodedDim = 2 * dimC
DIM_E = 8                  # dimE (number of output classes)


# --------------------------- fused Pallas kernel ------------------------------

def discriminator_kernel(emb_ref, mask_ref, maskL_ref, maskR_ref,
                         emb_g_ref, emb_b_ref,
                         wqkv_ref, bqkv_ref, wo_ref, bo_ref,
                         ln1_g_ref, ln1_b_ref, w1_ref, b1_ref, w2_ref, b2_ref,
                         ln2_g_ref, ln2_b_ref, mw_ref, mb_ref, o_ref):
    """One batch element per grid step: full BERT encoder + DM pooling + classifier."""
    scale = 1.0 / (DHEAD ** 0.5)

    def layernorm(x, g, b):
        mu = jnp.mean(x, axis=-1, keepdims=True)
        var = jnp.mean(jnp.square(x - mu), axis=-1, keepdims=True)
        return (x - mu) * jax.lax.rsqrt(var + 1e-12) * g + b

    def softmax_rows(s):
        s = s - jnp.max(s, axis=-1, keepdims=True)
        e = jnp.exp(s)
        return e * pl.reciprocal(jnp.sum(e, axis=-1, keepdims=True), approx=True)

    # embedding LayerNorm (embedding sum arrives precomputed, lane-dense (S, H))
    x = layernorm(emb_ref[...], emb_g_ref[...], emb_b_ref[...])          # (S, H)

    # additive attention-mask bias, rebuilt in-kernel from the (1, S) mask
    neg_bias = (1.0 - mask_ref[...]) * -10000.0                          # (1, S)

    for l in range(NLAYERS):
        # ---- self-attention: packed QKV matmul, per-head softmax/context,
        #      output projection accumulated per head (no concat / transpose) ----
        qkv = jnp.dot(x, wqkv_ref[l],
                      preferred_element_type=jnp.float32) + bqkv_ref[l]  # (S, 3H)
        wo_l = wo_ref[l]                                                 # (H, H)
        attn = jnp.zeros((SENLEN, HID), jnp.float32)
        for h in range(NHEAD):
            q = qkv[:, h * DHEAD:(h + 1) * DHEAD]
            k = qkv[:, HID + h * DHEAD:HID + (h + 1) * DHEAD]
            v = qkv[:, 2 * HID + h * DHEAD:2 * HID + (h + 1) * DHEAD]
            s = jnp.einsum('qd,kd->qk', q, k,
                           preferred_element_type=jnp.float32) * scale + neg_bias
            p = softmax_rows(s)                                          # (S, S)
            ctx = jnp.dot(p, v, preferred_element_type=jnp.float32)      # (S, DHEAD)
            attn = attn + jnp.dot(ctx, wo_l[h * DHEAD:(h + 1) * DHEAD, :],
                                  preferred_element_type=jnp.float32)
        x = layernorm(x + attn + bo_ref[l], ln1_g_ref[l], ln1_b_ref[l])

        # ---- feed-forward ----
        h1 = jnp.dot(x, w1_ref[l], preferred_element_type=jnp.float32) + b1_ref[l]
        h1 = jax.nn.gelu(h1)   # tanh approximation (same as previous implementation)
        h2 = jnp.dot(h1, w2_ref[l], preferred_element_type=jnp.float32) + b2_ref[l]
        x = layernorm(x + h2, ln2_g_ref[l], ln2_b_ref[l])

    # ---- DMCNN-style masked max pooling over the sequence ----
    # L = conved*maskL + 1 ; R = conved*maskR + 1 ; pooled = cat(max_S L, max_S R) - 1
    L = x * maskL_ref[...] + 1.0                                         # (S, H)
    R = x * maskR_ref[...] + 1.0
    pL = jnp.max(L, axis=0, keepdims=True) - 1.0                         # (1, H)
    pR = jnp.max(R, axis=0, keepdims=True) - 1.0                         # (1, H)

    # ---- classifier: logits = [pL, pR] @ M + b, softmax (no concat needed) ----
    mw = mw_ref[...]                                                     # (2H, dimE)
    logits = (jnp.dot(pL, mw[:HID, :], preferred_element_type=jnp.float32)
              + jnp.dot(pR, mw[HID:, :], preferred_element_type=jnp.float32)
              + mb_ref[...])                                             # (1, dimE)
    o_ref[...] = softmax_rows(logits)


# --------------------------- parameters --------------------------------------

def init_params(key):
    keys = jax.random.split(key, 4 + NLAYERS)

    def nrm(k, shape):
        return (0.02 * jax.random.normal(k, shape)).astype(jnp.float32)

    params = {
        'word_emb': nrm(keys[0], (VOCAB, HID)),
        'pos_emb':  nrm(keys[1], (SENLEN, HID)),
        'type_emb': nrm(keys[2], (2, HID)),
        'emb_ln_g': jnp.ones((1, HID), jnp.float32),
        'emb_ln_b': jnp.zeros((1, HID), jnp.float32),
        'M_w': nrm(keys[3], (ENCODED_DIM, DIM_E)),
        'M_b': jnp.zeros((1, DIM_E), jnp.float32),
    }
    wqkv, wo, w1, w2 = [], [], [], []
    for i in range(NLAYERS):
        lk = jax.random.split(keys[4 + i], 6)
        wq = nrm(lk[0], (HID, HID))
        wk = nrm(lk[1], (HID, HID))
        wv = nrm(lk[2], (HID, HID))
        wqkv.append(jnp.concatenate([wq, wk, wv], axis=1))   # packed (H, 3H)
        wo.append(nrm(lk[3], (HID, HID)))
        w1.append(nrm(lk[4], (HID, FFN)))
        w2.append(nrm(lk[5], (FFN, HID)))
    params['wqkv'] = jnp.stack(wqkv)                                   # (L, H, 3H)
    params['bqkv'] = jnp.zeros((NLAYERS, 1, 3 * HID), jnp.float32)
    params['wo']   = jnp.stack(wo)
    params['bo']   = jnp.zeros((NLAYERS, 1, HID), jnp.float32)
    params['ln1_g'] = jnp.ones((NLAYERS, 1, HID), jnp.float32)
    params['ln1_b'] = jnp.zeros((NLAYERS, 1, HID), jnp.float32)
    params['w1']   = jnp.stack(w1)
    params['b1']   = jnp.zeros((NLAYERS, 1, FFN), jnp.float32)
    params['w2']   = jnp.stack(w2)
    params['b2']   = jnp.zeros((NLAYERS, 1, HID), jnp.float32)
    params['ln2_g'] = jnp.ones((NLAYERS, 1, HID), jnp.float32)
    params['ln2_b'] = jnp.zeros((NLAYERS, 1, HID), jnp.float32)
    return params


# --------------------------- forward pass -------------------------------------

def discriminator_forward(params, inp, in_mask, maskL, maskR):
    # Embedding gather + position/type add kept as one cheap XLA glue op feeding
    # the fused kernel (the gather has no block-rectangular DMA pattern).
    emb = (params['word_emb'][inp]
           + params['pos_emb'][None, :, :]
           + params['type_emb'][0][None, None, :]).astype(jnp.float32)  # (B, S, H)
    emb2d = emb.reshape(B * SENLEN, HID)
    mask3 = in_mask.reshape(B, 1, SENLEN).astype(jnp.float32)
    maskL3 = maskL.reshape(B, SENLEN, 1).astype(jnp.float32)
    maskR3 = maskR.reshape(B, SENLEN, 1).astype(jnp.float32)

    def rep(arr):  # full-array (layer-stacked weight) block, identical every grid step
        nd = arr.ndim
        return pl.BlockSpec(arr.shape, lambda b, _nd=nd: (0,) * _nd)

    weight_args = (params['emb_ln_g'], params['emb_ln_b'],
                   params['wqkv'], params['bqkv'], params['wo'], params['bo'],
                   params['ln1_g'], params['ln1_b'], params['w1'], params['b1'],
                   params['w2'], params['b2'], params['ln2_g'], params['ln2_b'],
                   params['M_w'], params['M_b'])

    in_specs = [
        pl.BlockSpec((SENLEN, HID), lambda b: (b, 0)),          # embeddings (one batch row-block)
        pl.BlockSpec((None, 1, SENLEN), lambda b: (b, 0, 0)),   # attention mask -> (1, S)
        pl.BlockSpec((None, SENLEN, 1), lambda b: (b, 0, 0)),   # maskL -> (S, 1)
        pl.BlockSpec((None, SENLEN, 1), lambda b: (b, 0, 0)),   # maskR -> (S, 1)
    ] + [rep(w) for w in weight_args]

    out = pl.pallas_call(
        discriminator_kernel,
        out_shape=jax.ShapeDtypeStruct((B, 1, DIM_E), jnp.float32),
        grid=(B,),
        in_specs=in_specs,
        out_specs=pl.BlockSpec((None, 1, DIM_E), lambda b: (b, 0, 0)),
        compiler_params=pltpu.CompilerParams(
            dimension_semantics=("parallel",)),
    )(emb2d, mask3, maskL3, maskR3, *weight_args)
    return out.reshape(B, DIM_E)


# --------------------------- pure-JAX reference --------------------------------

def reference_forward(params, inp, in_mask, maskL, maskR):
    emb = (params['word_emb'][inp] + params['pos_emb'][None, :, :]
           + params['type_emb'][0][None, None, :])

    def ln(x, g, b):
        mu = jnp.mean(x, -1, keepdims=True)
        var = jnp.mean(jnp.square(x - mu), -1, keepdims=True)
        return (x - mu) * jax.lax.rsqrt(var + 1e-12) * g + b

    x = ln(emb, params['emb_ln_g'], params['emb_ln_b'])                  # (B, S, H)
    bias = ((1.0 - in_mask) * -10000.0)[:, None, None, :]                # (B,1,1,S)
    for l in range(NLAYERS):
        qkv = x @ params['wqkv'][l] + params['bqkv'][l]
        q, k, v = qkv[..., :HID], qkv[..., HID:2 * HID], qkv[..., 2 * HID:]

        def heads(t):
            return t.reshape(B, SENLEN, NHEAD, DHEAD).transpose(0, 2, 1, 3)

        s = jnp.einsum('bhqd,bhkd->bhqk', heads(q), heads(k)) / (DHEAD ** 0.5) + bias
        p = jax.nn.softmax(s, axis=-1)
        ctx = jnp.einsum('bhqk,bhkd->bhqd', p, heads(v)).transpose(0, 2, 1, 3)
        ctx = ctx.reshape(B, SENLEN, HID)
        x = ln(x + ctx @ params['wo'][l] + params['bo'][l],
               params['ln1_g'][l], params['ln1_b'][l])
        h = jax.nn.gelu(x @ params['w1'][l] + params['b1'][l])
        x = ln(x + h @ params['w2'][l] + params['b2'][l],
               params['ln2_g'][l], params['ln2_b'][l])
    L = x * maskL[:, :, None] + 1.0
    R = x * maskR[:, :, None] + 1.0
    pooled = jnp.concatenate([L.max(axis=1), R.max(axis=1)], axis=-1) - 1.0
    logits = pooled @ params['M_w'] + params['M_b']
    return jax.nn.softmax(logits, axis=-1)


# --------------------------- main ---------------------------------------------

if __name__ == "__main__":
    key = jax.random.PRNGKey(0)
    pkey, ikey = jax.random.split(key)
    params = init_params(pkey)

    inp = jax.random.randint(ikey, (B, SENLEN), 0, VOCAB, dtype=jnp.int32)
    in_mask = jnp.ones((B, SENLEN), jnp.float32)
    pos = jnp.arange(SENLEN)[None, :]
    trigger = jnp.array([[3], [5]])                      # deterministic trigger positions
    maskL = (pos <= trigger).astype(jnp.float32)         # (B, S)
    maskR = (pos >= trigger).astype(jnp.float32)         # (B, S)

    fwd = jax.jit(discriminator_forward)
    out = jax.block_until_ready(fwd(params, inp, in_mask, maskL, maskR))
    assert out.shape == (B, DIM_E)
    assert bool(jnp.all(jnp.isfinite(out)))

    ref = reference_forward(params, inp, in_mask, maskL, maskR)
    assert float(jnp.max(jnp.abs(out - ref))) < 1e-2     # approx-reciprocal tolerance
    print("KERNEL_OK")
</pallas_src>

<mosaic_0001>
module attributes {stable_mosaic.version = 11 : i64} {
  func.func @discriminator_kernel(%arg0: i32, %arg1: memref<8x32xf32, #tpu.memory_space<vmem>>, %arg2: memref<1x1x8xf32, #tpu.memory_space<vmem>>, %arg3: memref<1x8x1xf32, #tpu.memory_space<vmem>>, %arg4: memref<1x8x1xf32, #tpu.memory_space<vmem>>, %arg5: memref<1x32xf32, #tpu.memory_space<vmem>>, %arg6: memref<1x32xf32, #tpu.memory_space<vmem>>, %arg7: memref<2x32x96xf32, #tpu.memory_space<vmem>>, %arg8: memref<2x1x96xf32, #tpu.memory_space<vmem>>, %arg9: memref<2x32x32xf32, #tpu.memory_space<vmem>>, %arg10: memref<2x1x32xf32, #tpu.memory_space<vmem>>, %arg11: memref<2x1x32xf32, #tpu.memory_space<vmem>>, %arg12: memref<2x1x32xf32, #tpu.memory_space<vmem>>, %arg13: memref<2x32x64xf32, #tpu.memory_space<vmem>>, %arg14: memref<2x1x64xf32, #tpu.memory_space<vmem>>, %arg15: memref<2x64x32xf32, #tpu.memory_space<vmem>>, %arg16: memref<2x1x32xf32, #tpu.memory_space<vmem>>, %arg17: memref<2x1x32xf32, #tpu.memory_space<vmem>>, %arg18: memref<2x1x32xf32, #tpu.memory_space<vmem>>, %arg19: memref<64x8xf32, #tpu.memory_space<vmem>>, %arg20: memref<1x8xf32, #tpu.memory_space<vmem>>, %arg21: memref<1x1x8xf32, #tpu.memory_space<vmem>>) attributes {dimension_semantics = [#tpu.dimension_semantics<parallel>], iteration_bounds = array<i64: 2>, scalar_prefetch = 0 : i64, scratch_operands = 0 : i64, tpu.core_type = #tpu.core_type<tc>, window_params = [{transform_indices = @transform_0, window_bounds = array<i64: 8, 32>}, {transform_indices = @transform_1, window_bounds = array<i64: 1, 1, 8>}, {transform_indices = @transform_2, window_bounds = array<i64: 1, 8, 1>}, {transform_indices = @transform_3, window_bounds = array<i64: 1, 8, 1>}, {pipeline_mode = #tpu.pipeline_mode<synchronous>, transform_indices = @transform_4, window_bounds = array<i64: 1, 32>}, {pipeline_mode = #tpu.pipeline_mode<synchronous>, transform_indices = @transform_5, window_bounds = array<i64: 1, 32>}, {pipeline_mode = #tpu.pipeline_mode<synchronous>, transform_indices = @transform_6, window_bounds = array<i64: 2, 32, 96>}, {pipeline_mode = #tpu.pipeline_mode<synchronous>, transform_indices = @transform_7, window_bounds = array<i64: 2, 1, 96>}, {pipeline_mode = #tpu.pipeline_mode<synchronous>, transform_indices = @transform_8, window_bounds = array<i64: 2, 32, 32>}, {pipeline_mode = #tpu.pipeline_mode<synchronous>, transform_indices = @transform_9, window_bounds = array<i64: 2, 1, 32>}, {pipeline_mode = #tpu.pipeline_mode<synchronous>, transform_indices = @transform_10, window_bounds = array<i64: 2, 1, 32>}, {pipeline_mode = #tpu.pipeline_mode<synchronous>, transform_indices = @transform_11, window_bounds = array<i64: 2, 1, 32>}, {pipeline_mode = #tpu.pipeline_mode<synchronous>, transform_indices = @transform_12, window_bounds = array<i64: 2, 32, 64>}, {pipeline_mode = #tpu.pipeline_mode<synchronous>, transform_indices = @transform_13, window_bounds = array<i64: 2, 1, 64>}, {pipeline_mode = #tpu.pipeline_mode<synchronous>, transform_indices = @transform_14, window_bounds = array<i64: 2, 64, 32>}, {pipeline_mode = #tpu.pipeline_mode<synchronous>, transform_indices = @transform_15, window_bounds = array<i64: 2, 1, 32>}, {pipeline_mode = #tpu.pipeline_mode<synchronous>, transform_indices = @transform_16, window_bounds = array<i64: 2, 1, 32>}, {pipeline_mode = #tpu.pipeline_mode<synchronous>, transform_indices = @transform_17, window_bounds = array<i64: 2, 1, 32>}, {pipeline_mode = #tpu.pipeline_mode<synchronous>, transform_indices = @transform_18, window_bounds = array<i64: 64, 8>}, {pipeline_mode = #tpu.pipeline_mode<synchronous>, transform_indices = @transform_19, window_bounds = array<i64: 1, 8>}, {transform_indices = @transform_20, window_bounds = array<i64: 1, 1, 8>}]} {
    %c0 = arith.constant 0 : index
    %c0_0 = arith.constant 0 : index
    %0 = vector.load %arg1[%c0, %c0_0] : memref<8x32xf32, #tpu.memory_space<vmem>>, vector<8x32xf32>
    %c0_1 = arith.constant 0 : index
    %c0_2 = arith.constant 0 : index
    %1 = vector.load %arg5[%c0_1, %c0_2] : memref<1x32xf32, #tpu.memory_space<vmem>>, vector<1x32xf32>
    %c0_3 = arith.constant 0 : index
    %c0_4 = arith.constant 0 : index
    %2 = vector.load %arg6[%c0_3, %c0_4] : memref<1x32xf32, #tpu.memory_space<vmem>>, vector<1x32xf32>
    %cst = arith.constant dense<0.000000e+00> : vector<8xf32>
    %3 = vector.multi_reduction <add>, %0, %cst [1] : vector<8x32xf32> to vector<8xf32>
    %4 = vector.shape_cast %3 : vector<8xf32> to vector<8x1xf32>
    %cst_5 = arith.constant 3.200000e+01 : f32
    %5 = vector.broadcast %cst_5 : f32 to vector<8x1xf32>
    %6 = arith.divf %4, %5 : vector<8x1xf32>
    %7 = vector.broadcast %6 : vector<8x1xf32> to vector<8x32xf32>
    %8 = arith.subf %0, %7 : vector<8x32xf32>
    %9 = arith.mulf %8, %8 : vector<8x32xf32>
    %cst_6 = arith.constant dense<0.000000e+00> : vector<8xf32>
    %10 = vector.multi_reduction <add>, %9, %cst_6 [1] : vector<8x32xf32> to vector<8xf32>
    %11 = vector.shape_cast %10 : vector<8xf32> to vector<8x1xf32>
    %cst_7 = arith.constant 3.200000e+01 : f32
    %12 = vector.broadcast %cst_7 : f32 to vector<8x1xf32>
    %13 = arith.divf %11, %12 : vector<8x1xf32>
    %14 = vector.broadcast %6 : vector<8x1xf32> to vector<8x32xf32>
    %15 = arith.subf %0, %14 : vector<8x32xf32>
    %cst_8 = arith.constant 9.99999996E-13 : f32
    %16 = vector.broadcast %cst_8 : f32 to vector<8x1xf32>
    %17 = arith.addf %13, %16 : vector<8x1xf32>
    %18 = math.rsqrt %17 : vector<8x1xf32>
    %19 = vector.broadcast %18 : vector<8x1xf32> to vector<8x32xf32>
    %20 = arith.mulf %15, %19 : vector<8x32xf32>
    %21 = vector.broadcast %1 : vector<1x32xf32> to vector<8x32xf32>
    %22 = arith.mulf %20, %21 : vector<8x32xf32>
    %23 = vector.broadcast %2 : vector<1x32xf32> to vector<8x32xf32>
    %24 = arith.addf %22, %23 : vector<8x32xf32>
    %c0_9 = arith.constant 0 : index
    %c0_10 = arith.constant 0 : index
    %c0_11 = arith.constant 0 : index
    %25 = vector.load %arg2[%c0_9, %c0_10, %c0_11] : memref<1x1x8xf32, #tpu.memory_space<vmem>>, vector<1x1x8xf32>
    %26 = vector.shape_cast %25 : vector<1x1x8xf32> to vector<1x8xf32>
    %cst_12 = arith.constant 1.000000e+00 : f32
    %27 = vector.broadcast %cst_12 : f32 to vector<1x8xf32>
    %28 = arith.subf %27, %26 : vector<1x8xf32>
    %cst_13 = arith.constant -1.000000e+04 : f32
    %29 = vector.broadcast %cst_13 : f32 to vector<1x8xf32>
    %30 = arith.mulf %28, %29 : vector<1x8xf32>
    %c0_14 = arith.constant 0 : index
    %c0_15 = arith.constant 0 : index
    %c0_16 = arith.constant 0 : index
    %31 = vector.load %arg7[%c0_14, %c0_15, %c0_16] : memref<2x32x96xf32, #tpu.memory_space<vmem>>, vector<1x32x96xf32>
    %32 = vector.shape_cast %31 : vector<1x32x96xf32> to vector<32x96xf32>
    %cst_17 = arith.constant dense<0.000000e+00> : vector<8x96xf32>
    %33 = tpu.matmul %24, %32, %cst_17 {dimension_numbers = #tpu.dot_dimension_numbers<[1], [0], [0], [1], [0, 0, 1, 1], [], []>} : vector<8x32xf32>, vector<32x96xf32>, vector<8x96xf32> -> vector<8x96xf32>
    %c0_18 = arith.constant 0 : index
    %c0_19 = arith.constant 0 : index
    %c0_20 = arith.constant 0 : index
    %34 = vector.load %arg8[%c0_18, %c0_19, %c0_20] : memref<2x1x96xf32, #tpu.memory_space<vmem>>, vector<1x1x96xf32>
    %35 = vector.shape_cast %34 : vector<1x1x96xf32> to vector<1x96xf32>
    %36 = vector.broadcast %35 : vector<1x96xf32> to vector<8x96xf32>
    %37 = arith.addf %33, %36 : vector<8x96xf32>
    %c0_21 = arith.constant 0 : index
    %c0_22 = arith.constant 0 : index
    %c0_23 = arith.constant 0 : index
    %38 = vector.load %arg9[%c0_21, %c0_22, %c0_23] : memref<2x32x32xf32, #tpu.memory_space<vmem>>, vector<1x32x32xf32>
    %39 = vector.shape_cast %38 : vector<1x32x32xf32> to vector<32x32xf32>
    %cst_24 = arith.constant 0.000000e+00 : f32
    %40 = vector.broadcast %cst_24 : f32 to vector<8x32xf32>
    %41 = vector.extract_strided_slice %37 {offsets = [0, 0], sizes = [8, 8], strides = [1, 1]} : vector<8x96xf32> to vector<8x8xf32>
    %42 = vector.extract_strided_slice %37 {offsets = [0, 32], sizes = [8, 8], strides = [1, 1]} : vector<8x96xf32> to vector<8x8xf32>
    %43 = vector.extract_strided_slice %37 {offsets = [0, 64], sizes = [8, 8], strides = [1, 1]} : vector<8x96xf32> to vector<8x8xf32>
    "tpu.trace_start"() <{level = 10 : i32, message = "qd,kd->qk"}> : () -> ()
    %cst_25 = arith.constant dense<0.000000e+00> : vector<8x8xf32>
    %44 = tpu.matmul %41, %42, %cst_25 {dimension_numbers = #tpu.dot_dimension_numbers<[1], [1], [0], [0], [0, 0, 1, 0], [], []>} : vector<8x8xf32>, vector<8x8xf32>, vector<8x8xf32> -> vector<8x8xf32>
    "tpu.trace_stop"() : () -> ()
    %cst_26 = arith.constant 0.353553385 : f32
    %45 = vector.broadcast %cst_26 : f32 to vector<8x8xf32>
    %46 = arith.mulf %44, %45 : vector<8x8xf32>
    %47 = vector.broadcast %30 : vector<1x8xf32> to vector<8x8xf32>
    %48 = arith.addf %46, %47 : vector<8x8xf32>
    %cst_27 = arith.constant dense<0xFF800000> : vector<8xf32>
    %49 = vector.multi_reduction <maximumf>, %48, %cst_27 [1] : vector<8x8xf32> to vector<8xf32>
    %50 = vector.shape_cast %49 : vector<8xf32> to vector<8x1xf32>
    %51 = vector.broadcast %50 : vector<8x1xf32> to vector<8x8xf32>
    %52 = arith.subf %48, %51 : vector<8x8xf32>
    %53 = math.exp %52 : vector<8x8xf32>
    %cst_28 = arith.constant dense<0.000000e+00> : vector<8xf32>
    %54 = vector.multi_reduction <add>, %53, %cst_28 [1] : vector<8x8xf32> to vector<8xf32>
    %55 = vector.shape_cast %54 : vector<8xf32> to vector<8x1xf32>
    %56 = tpu.reciprocal %55 {approx = true} : vector<8x1xf32> -> vector<8x1xf32>
    %57 = vector.broadcast %56 : vector<8x1xf32> to vector<8x8xf32>
    %58 = arith.mulf %53, %57 : vector<8x8xf32>
    %cst_29 = arith.constant dense<0.000000e+00> : vector<8x8xf32>
    %59 = tpu.matmul %58, %43, %cst_29 {dimension_numbers = #tpu.dot_dimension_numbers<[1], [0], [0], [1], [0, 0, 1, 1], [], []>} : vector<8x8xf32>, vector<8x8xf32>, vector<8x8xf32> -> vector<8x8xf32>
    %60 = vector.extract_strided_slice %39 {offsets = [0, 0], sizes = [8, 32], strides = [1, 1]} : vector<32x32xf32> to vector<8x32xf32>
    %cst_30 = arith.constant dense<0.000000e+00> : vector<8x32xf32>
    %61 = tpu.matmul %59, %60, %cst_30 {dimension_numbers = #tpu.dot_dimension_numbers<[1], [0], [0], [1], [0, 0, 1, 1], [], []>} : vector<8x8xf32>, vector<8x32xf32>, vector<8x32xf32> -> vector<8x32xf32>
    %62 = arith.addf %40, %61 : vector<8x32xf32>
    %63 = vector.extract_strided_slice %37 {offsets = [0, 8], sizes = [8, 8], strides = [1, 1]} : vector<8x96xf32> to vector<8x8xf32>
    %64 = vector.extract_strided_slice %37 {offsets = [0, 40], sizes = [8, 8], strides = [1, 1]} : vector<8x96xf32> to vector<8x8xf32>
    %65 = vector.extract_strided_slice %37 {offsets = [0, 72], sizes = [8, 8], strides = [1, 1]} : vector<8x96xf32> to vector<8x8xf32>
    "tpu.trace_start"() <{level = 10 : i32, message = "qd,kd->qk"}> : () -> ()
    %cst_31 = arith.constant dense<0.000000e+00> : vector<8x8xf32>
    %66 = tpu.matmul %63, %64, %cst_31 {dimension_numbers = #tpu.dot_dimension_numbers<[1], [1], [0], [0], [0, 0, 1, 0], [], []>} : vector<8x8xf32>, vector<8x8xf32>, vector<8x8xf32> -> vector<8x8xf32>
    "tpu.trace_stop"() : () -> ()
    %cst_32 = arith.constant 0.353553385 : f32
    %67 = vector.broadcast %cst_32 : f32 to vector<8x8xf32>
    %68 = arith.mulf %66, %67 : vector<8x8xf32>
    %69 = vector.broadcast %30 : vector<1x8xf32> to vector<8x8xf32>
    %70 = arith.addf %68, %69 : vector<8x8xf32>
    %cst_33 = arith.constant dense<0xFF800000> : vector<8xf32>
    %71 = vector.multi_reduction <maximumf>, %70, %cst_33 [1] : vector<8x8xf32> to vector<8xf32>
    %72 = vector.shape_cast %71 : vector<8xf32> to vector<8x1xf32>
    %73 = vector.broadcast %72 : vector<8x1xf32> to vector<8x8xf32>
    %74 = arith.subf %70, %73 : vector<8x8xf32>
    %75 = math.exp %74 : vector<8x8xf32>
    %cst_34 = arith.constant dense<0.000000e+00> : vector<8xf32>
    %76 = vector.multi_reduction <add>, %75, %cst_34 [1] : vector<8x8xf32> to vector<8xf32>
    %77 = vector.shape_cast %76 : vector<8xf32> to vector<8x1xf32>
    %78 = tpu.reciprocal %77 {approx = true} : vector<8x1xf32> -> vector<8x1xf32>
    %79 = vector.broadcast %78 : vector<8x1xf32> to vector<8x8xf32>
    %80 = arith.mulf %75, %79 : vector<8x8xf32>
    %cst_35 = arith.constant dense<0.000000e+00> : vector<8x8xf32>
    %81 = tpu.matmul %80, %65, %cst_35 {dimension_numbers = #tpu.dot_dimension_numbers<[1], [0], [0], [1], [0, 0, 1, 1], [], []>} : vector<8x8xf32>, vector<8x8xf32>, vector<8x8xf32> -> vector<8x8xf32>
    %82 = vector.extract_strided_slice %39 {offsets = [8, 0], sizes = [8, 32], strides = [1, 1]} : vector<32x32xf32> to vector<8x32xf32>
    %cst_36 = arith.constant dense<0.000000e+00> : vector<8x32xf32>
    %83 = tpu.matmul %81, %82, %cst_36 {dimension_numbers = #tpu.dot_dimension_numbers<[1], [0], [0], [1], [0, 0, 1, 1], [], []>} : vector<8x8xf32>, vector<8x32xf32>, vector<8x32xf32> -> vector<8x32xf32>
    %84 = arith.addf %62, %83 : vector<8x32xf32>
    %85 = vector.extract_strided_slice %37 {offsets = [0, 16], sizes = [8, 8], strides = [1, 1]} : vector<8x96xf32> to vector<8x8xf32>
    %86 = vector.extract_strided_slice %37 {offsets = [0, 48], sizes = [8, 8], strides = [1, 1]} : vector<8x96xf32> to vector<8x8xf32>
    %87 = vector.extract_strided_slice %37 {offsets = [0, 80], sizes = [8, 8], strides = [1, 1]} : vector<8x96xf32> to vector<8x8xf32>
    "tpu.trace_start"() <{level = 10 : i32, message = "qd,kd->qk"}> : () -> ()
    %cst_37 = arith.constant dense<0.000000e+00> : vector<8x8xf32>
    %88 = tpu.matmul %85, %86, %cst_37 {dimension_numbers = #tpu.dot_dimension_numbers<[1], [1], [0], [0], [0, 0, 1, 0], [], []>} : vector<8x8xf32>, vector<8x8xf32>, vector<8x8xf32> -> vector<8x8xf32>
    "tpu.trace_stop"() : () -> ()
    %cst_38 = arith.constant 0.353553385 : f32
    %89 = vector.broadcast %cst_38 : f32 to vector<8x8xf32>
    %90 = arith.mulf %88, %89 : vector<8x8xf32>
    %91 = vector.broadcast %30 : vector<1x8xf32> to vector<8x8xf32>
    %92 = arith.addf %90, %91 : vector<8x8xf32>
    %cst_39 = arith.constant dense<0xFF800000> : vector<8xf32>
    %93 = vector.multi_reduction <maximumf>, %92, %cst_39 [1] : vector<8x8xf32> to vector<8xf32>
    %94 = vector.shape_cast %93 : vector<8xf32> to vector<8x1xf32>
    %95 = vector.broadcast %94 : vector<8x1xf32> to vector<8x8xf32>
    %96 = arith.subf %92, %95 : vector<8x8xf32>
    %97 = math.exp %96 : vector<8x8xf32>
    %cst_40 = arith.constant dense<0.000000e+00> : vector<8xf32>
    %98 = vector.multi_reduction <add>, %97, %cst_40 [1] : vector<8x8xf32> to vector<8xf32>
    %99 = vector.shape_cast %98 : vector<8xf32> to vector<8x1xf32>
    %100 = tpu.reciprocal %99 {approx = true} : vector<8x1xf32> -> vector<8x1xf32>
    %101 = vector.broadcast %100 : vector<8x1xf32> to vector<8x8xf32>
    %102 = arith.mulf %97, %101 : vector<8x8xf32>
    %cst_41 = arith.constant dense<0.000000e+00> : vector<8x8xf32>
    %103 = tpu.matmul %102, %87, %cst_41 {dimension_numbers = #tpu.dot_dimension_numbers<[1], [0], [0], [1], [0, 0, 1, 1], [], []>} : vector<8x8xf32>, vector<8x8xf32>, vector<8x8xf32> -> vector<8x8xf32>
    %104 = vector.extract_strided_slice %39 {offsets = [16, 0], sizes = [8, 32], strides = [1, 1]} : vector<32x32xf32> to vector<8x32xf32>
    %cst_42 = arith.constant dense<0.000000e+00> : vector<8x32xf32>
    %105 = tpu.matmul %103, %104, %cst_42 {dimension_numbers = #tpu.dot_dimension_numbers<[1], [0], [0], [1], [0, 0, 1, 1], [], []>} : vector<8x8xf32>, vector<8x32xf32>, vector<8x32xf32> -> vector<8x32xf32>
    %106 = arith.addf %84, %105 : vector<8x32xf32>
    %107 = vector.extract_strided_slice %37 {offsets = [0, 24], sizes = [8, 8], strides = [1, 1]} : vector<8x96xf32> to vector<8x8xf32>
    %108 = vector.extract_strided_slice %37 {offsets = [0, 56], sizes = [8, 8], strides = [1, 1]} : vector<8x96xf32> to vector<8x8xf32>
    %109 = vector.extract_strided_slice %37 {offsets = [0, 88], sizes = [8, 8], strides = [1, 1]} : vector<8x96xf32> to vector<8x8xf32>
    "tpu.trace_start"() <{level = 10 : i32, message = "qd,kd->qk"}> : () -> ()
    %cst_43 = arith.constant dense<0.000000e+00> : vector<8x8xf32>
    %110 = tpu.matmul %107, %108, %cst_43 {dimension_numbers = #tpu.dot_dimension_numbers<[1], [1], [0], [0], [0, 0, 1, 0], [], []>} : vector<8x8xf32>, vector<8x8xf32>, vector<8x8xf32> -> vector<8x8xf32>
    "tpu.trace_stop"() : () -> ()
    %cst_44 = arith.constant 0.353553385 : f32
    %111 = vector.broadcast %cst_44 : f32 to vector<8x8xf32>
    %112 = arith.mulf %110, %111 : vector<8x8xf32>
    %113 = vector.broadcast %30 : vector<1x8xf32> to vector<8x8xf32>
    %114 = arith.addf %112, %113 : vector<8x8xf32>
    %cst_45 = arith.constant dense<0xFF800000> : vector<8xf32>
    %115 = vector.multi_reduction <maximumf>, %114, %cst_45 [1] : vector<8x8xf32> to vector<8xf32>
    %116 = vector.shape_cast %115 : vector<8xf32> to vector<8x1xf32>
    %117 = vector.broadcast %116 : vector<8x1xf32> to vector<8x8xf32>
    %118 = arith.subf %114, %117 : vector<8x8xf32>
    %119 = math.exp %118 : vector<8x8xf32>
    %cst_46 = arith.constant dense<0.000000e+00> : vector<8xf32>
    %120 = vector.multi_reduction <add>, %119, %cst_46 [1] : vector<8x8xf32> to vector<8xf32>
    %121 = vector.shape_cast %120 : vector<8xf32> to vector<8x1xf32>
    %122 = tpu.reciprocal %121 {approx = true} : vector<8x1xf32> -> vector<8x1xf32>
    %123 = vector.broadcast %122 : vector<8x1xf32> to vector<8x8xf32>
    %124 = arith.mulf %119, %123 : vector<8x8xf32>
    %cst_47 = arith.constant dense<0.000000e+00> : vector<8x8xf32>
    %125 = tpu.matmul %124, %109, %cst_47 {dimension_numbers = #tpu.dot_dimension_numbers<[1], [0], [0], [1], [0, 0, 1, 1], [], []>} : vector<8x8xf32>, vector<8x8xf32>, vector<8x8xf32> -> vector<8x8xf32>
    %126 = vector.extract_strided_slice %39 {offsets = [24, 0], sizes = [8, 32], strides = [1, 1]} : vector<32x32xf32> to vector<8x32xf32>
    %cst_48 = arith.constant dense<0.000000e+00> : vector<8x32xf32>
    %127 = tpu.matmul %125, %126, %cst_48 {dimension_numbers = #tpu.dot_dimension_numbers<[1], [0], [0], [1], [0, 0, 1, 1], [], []>} : vector<8x8xf32>, vector<8x32xf32>, vector<8x32xf32> -> vector<8x32xf32>
    %128 = arith.addf %106, %127 : vector<8x32xf32>
    %129 = arith.addf %24, %128 : vector<8x32xf32>
    %c0_49 = arith.constant 0 : index
    %c0_50 = arith.constant 0 : index
    %c0_51 = arith.constant 0 : index
    %130 = vector.load %arg10[%c0_49, %c0_50, %c0_51] : memref<2x1x32xf32, #tpu.memory_space<vmem>>, vector<1x1x32xf32>
    %131 = vector.shape_cast %130 : vector<1x1x32xf32> to vector<1x32xf32>
    %132 = vector.broadcast %131 : vector<1x32xf32> to vector<8x32xf32>
    %133 = arith.addf %129, %132 : vector<8x32xf32>
    %c0_52 = arith.constant 0 : index
    %c0_53 = arith.constant 0 : index
    %c0_54 = arith.constant 0 : index
    %134 = vector.load %arg11[%c0_52, %c0_53, %c0_54] : memref<2x1x32xf32, #tpu.memory_space<vmem>>, vector<1x1x32xf32>
    %135 = vector.shape_cast %134 : vector<1x1x32xf32> to vector<1x32xf32>
    %c0_55 = arith.constant 0 : index
    %c0_56 = arith.constant 0 : index
    %c0_57 = arith.constant 0 : index
    %136 = vector.load %arg12[%c0_55, %c0_56, %c0_57] : memref<2x1x32xf32, #tpu.memory_space<vmem>>, vector<1x1x32xf32>
    %137 = vector.shape_cast %136 : vector<1x1x32xf32> to vector<1x32xf32>
    %cst_58 = arith.constant dense<0.000000e+00> : vector<8xf32>
    %138 = vector.multi_reduction <add>, %133, %cst_58 [1] : vector<8x32xf32> to vector<8xf32>
    %139 = vector.shape_cast %138 : vector<8xf32> to vector<8x1xf32>
    %cst_59 = arith.constant 3.200000e+01 : f32
    %140 = vector.broadcast %cst_59 : f32 to vector<8x1xf32>
    %141 = arith.divf %139, %140 : vector<8x1xf32>
    %142 = vector.broadcast %141 : vector<8x1xf32> to vector<8x32xf32>
    %143 = arith.subf %133, %142 : vector<8x32xf32>
    %144 = arith.mulf %143, %143 : vector<8x32xf32>
    %cst_60 = arith.constant dense<0.000000e+00> : vector<8xf32>
    %145 = vector.multi_reduction <add>, %144, %cst_60 [1] : vector<8x32xf32> to vector<8xf32>
    %146 = vector.shape_cast %145 : vector<8xf32> to vector<8x1xf32>
    %cst_61 = arith.constant 3.200000e+01 : f32
    %147 = vector.broadcast %cst_61 : f32 to vector<8x1xf32>
    %148 = arith.divf %146, %147 : vector<8x1xf32>
    %149 = vector.broadcast %141 : vector<8x1xf32> to vector<8x32xf32>
    %150 = arith.subf %133, %149 : vector<8x32xf32>
    %cst_62 = arith.constant 9.99999996E-13 : f32
    %151 = vector.broadcast %cst_62 : f32 to vector<8x1xf32>
    %152 = arith.addf %148, %151 : vector<8x1xf32>
    %153 = math.rsqrt %152 : vector<8x1xf32>
    %154 = vector.broadcast %153 : vector<8x1xf32> to vector<8x32xf32>
    %155 = arith.mulf %150, %154 : vector<8x32xf32>
    %156 = vector.broadcast %135 : vector<1x32xf32> to vector<8x32xf32>
    %157 = arith.mulf %155, %156 : vector<8x32xf32>
    %158 = vector.broadcast %137 : vector<1x32xf32> to vector<8x32xf32>
    %159 = arith.addf %157, %158 : vector<8x32xf32>
    %c0_63 = arith.constant 0 : index
    %c0_64 = arith.constant 0 : index
    %c0_65 = arith.constant 0 : index
    %160 = vector.load %arg13[%c0_63, %c0_64, %c0_65] : memref<2x32x64xf32, #tpu.memory_space<vmem>>, vector<1x32x64xf32>
    %161 = vector.shape_cast %160 : vector<1x32x64xf32> to vector<32x64xf32>
    %cst_66 = arith.constant dense<0.000000e+00> : vector<8x64xf32>
    %162 = tpu.matmul %159, %161, %cst_66 {dimension_numbers = #tpu.dot_dimension_numbers<[1], [0], [0], [1], [0, 0, 1, 1], [], []>} : vector<8x32xf32>, vector<32x64xf32>, vector<8x64xf32> -> vector<8x64xf32>
    %c0_67 = arith.constant 0 : index
    %c0_68 = arith.constant 0 : index
    %c0_69 = arith.constant 0 : index
    %163 = vector.load %arg14[%c0_67, %c0_68, %c0_69] : memref<2x1x64xf32, #tpu.memory_space<vmem>>, vector<1x1x64xf32>
    %164 = vector.shape_cast %163 : vector<1x1x64xf32> to vector<1x64xf32>
    %165 = vector.broadcast %164 : vector<1x64xf32> to vector<8x64xf32>
    %166 = arith.addf %162, %165 : vector<8x64xf32>
    %167 = arith.mulf %166, %166 : vector<8x64xf32>
    %168 = arith.mulf %166, %167 : vector<8x64xf32>
    %cst_70 = arith.constant 4.471500e-02 : f32
    %169 = vector.broadcast %cst_70 : f32 to vector<8x64xf32>
    %170 = arith.mulf %169, %168 : vector<8x64xf32>
    %171 = arith.addf %166, %170 : vector<8x64xf32>
    %cst_71 = arith.constant 0.797884583 : f32
    %172 = vector.broadcast %cst_71 : f32 to vector<8x64xf32>
    %173 = arith.mulf %172, %171 : vector<8x64xf32>
    %174 = math.tanh %173 : vector<8x64xf32>
    %cst_72 = arith.constant 1.000000e+00 : f32
    %175 = vector.broadcast %cst_72 : f32 to vector<8x64xf32>
    %176 = arith.addf %175, %174 : vector<8x64xf32>
    %cst_73 = arith.constant 5.000000e-01 : f32
    %177 = vector.broadcast %cst_73 : f32 to vector<8x64xf32>
    %178 = arith.mulf %177, %176 : vector<8x64xf32>
    %179 = arith.mulf %166, %178 : vector<8x64xf32>
    %c0_74 = arith.constant 0 : index
    %c0_75 = arith.constant 0 : index
    %c0_76 = arith.constant 0 : index
    %180 = vector.load %arg15[%c0_74, %c0_75, %c0_76] : memref<2x64x32xf32, #tpu.memory_space<vmem>>, vector<1x64x32xf32>
    %181 = vector.shape_cast %180 : vector<1x64x32xf32> to vector<64x32xf32>
    %cst_77 = arith.constant dense<0.000000e+00> : vector<8x32xf32>
    %182 = tpu.matmul %179, %181, %cst_77 {dimension_numbers = #tpu.dot_dimension_numbers<[1], [0], [0], [1], [0, 0, 1, 1], [], []>} : vector<8x64xf32>, vector<64x32xf32>, vector<8x32xf32> -> vector<8x32xf32>
    %c0_78 = arith.constant 0 : index
    %c0_79 = arith.constant 0 : index
    %c0_80 = arith.constant 0 : index
    %183 = vector.load %arg16[%c0_78, %c0_79, %c0_80] : memref<2x1x32xf32, #tpu.memory_space<vmem>>, vector<1x1x32xf32>
    %184 = vector.shape_cast %183 : vector<1x1x32xf32> to vector<1x32xf32>
    %185 = vector.broadcast %184 : vector<1x32xf32> to vector<8x32xf32>
    %186 = arith.addf %182, %185 : vector<8x32xf32>
    %187 = arith.addf %159, %186 : vector<8x32xf32>
    %c0_81 = arith.constant 0 : index
    %c0_82 = arith.constant 0 : index
    %c0_83 = arith.constant 0 : index
    %188 = vector.load %arg17[%c0_81, %c0_82, %c0_83] : memref<2x1x32xf32, #tpu.memory_space<vmem>>, vector<1x1x32xf32>
    %189 = vector.shape_cast %188 : vector<1x1x32xf32> to vector<1x32xf32>
    %c0_84 = arith.constant 0 : index
    %c0_85 = arith.constant 0 : index
    %c0_86 = arith.constant 0 : index
    %190 = vector.load %arg18[%c0_84, %c0_85, %c0_86] : memref<2x1x32xf32, #tpu.memory_space<vmem>>, vector<1x1x32xf32>
    %191 = vector.shape_cast %190 : vector<1x1x32xf32> to vector<1x32xf32>
    %cst_87 = arith.constant dense<0.000000e+00> : vector<8xf32>
    %192 = vector.multi_reduction <add>, %187, %cst_87 [1] : vector<8x32xf32> to vector<8xf32>
    %193 = vector.shape_cast %192 : vector<8xf32> to vector<8x1xf32>
    %cst_88 = arith.constant 3.200000e+01 : f32
    %194 = vector.broadcast %cst_88 : f32 to vector<8x1xf32>
    %195 = arith.divf %193, %194 : vector<8x1xf32>
    %196 = vector.broadcast %195 : vector<8x1xf32> to vector<8x32xf32>
    %197 = arith.subf %187, %196 : vector<8x32xf32>
    %198 = arith.mulf %197, %197 : vector<8x32xf32>
    %cst_89 = arith.constant dense<0.000000e+00> : vector<8xf32>
    %199 = vector.multi_reduction <add>, %198, %cst_89 [1] : vector<8x32xf32> to vector<8xf32>
    %200 = vector.shape_cast %199 : vector<8xf32> to vector<8x1xf32>
    %cst_90 = arith.constant 3.200000e+01 : f32
    %201 = vector.broadcast %cst_90 : f32 to vector<8x1xf32>
    %202 = arith.divf %200, %201 : vector<8x1xf32>
    %203 = vector.broadcast %195 : vector<8x1xf32> to vector<8x32xf32>
    %204 = arith.subf %187, %203 : vector<8x32xf32>
    %cst_91 = arith.constant 9.99999996E-13 : f32
    %205 = vector.broadcast %cst_91 : f32 to vector<8x1xf32>
    %206 = arith.addf %202, %205 : vector<8x1xf32>
    %207 = math.rsqrt %206 : vector<8x1xf32>
    %208 = vector.broadcast %207 : vector<8x1xf32> to vector<8x32xf32>
    %209 = arith.mulf %204, %208 : vector<8x32xf32>
    %210 = vector.broadcast %189 : vector<1x32xf32> to vector<8x32xf32>
    %211 = arith.mulf %209, %210 : vector<8x32xf32>
    %212 = vector.broadcast %191 : vector<1x32xf32> to vector<8x32xf32>
    %213 = arith.addf %211, %212 : vector<8x32xf32>
    %c1 = arith.constant 1 : index
    %c0_92 = arith.constant 0 : index
    %c0_93 = arith.constant 0 : index
    %214 = vector.load %arg7[%c1, %c0_92, %c0_93] : memref<2x32x96xf32, #tpu.memory_space<vmem>>, vector<1x32x96xf32>
    %215 = vector.shape_cast %214 : vector<1x32x96xf32> to vector<32x96xf32>
    %cst_94 = arith.constant dense<0.000000e+00> : vector<8x96xf32>
    %216 = tpu.matmul %213, %215, %cst_94 {dimension_numbers = #tpu.dot_dimension_numbers<[1], [0], [0], [1], [0, 0, 1, 1], [], []>} : vector<8x32xf32>, vector<32x96xf32>, vector<8x96xf32> -> vector<8x96xf32>
    %c1_95 = arith.constant 1 : index
    %c0_96 = arith.constant 0 : index
    %c0_97 = arith.constant 0 : index
    %217 = vector.load %arg8[%c1_95, %c0_96, %c0_97] : memref<2x1x96xf32, #tpu.memory_space<vmem>>, vector<1x1x96xf32>
    %218 = vector.shape_cast %217 : vector<1x1x96xf32> to vector<1x96xf32>
    %219 = vector.broadcast %218 : vector<1x96xf32> to vector<8x96xf32>
    %220 = arith.addf %216, %219 : vector<8x96xf32>
    %c1_98 = arith.constant 1 : index
    %c0_99 = arith.constant 0 : index
    %c0_100 = arith.constant 0 : index
    %221 = vector.load %arg9[%c1_98, %c0_99, %c0_100] : memref<2x32x32xf32, #tpu.memory_space<vmem>>, vector<1x32x32xf32>
    %222 = vector.shape_cast %221 : vector<1x32x32xf32> to vector<32x32xf32>
    %cst_101 = arith.constant 0.000000e+00 : f32
    %223 = vector.broadcast %cst_101 : f32 to vector<8x32xf32>
    %224 = vector.extract_strided_slice %220 {offsets = [0, 0], sizes = [8, 8], strides = [1, 1]} : vector<8x96xf32> to vector<8x8xf32>
    %225 = vector.extract_strided_slice %220 {offsets = [0, 32], sizes = [8, 8], strides = [1, 1]} : vector<8x96xf32> to vector<8x8xf32>
    %226 = vector.extract_strided_slice %220 {offsets = [0, 64], sizes = [8, 8], strides = [1, 1]} : vector<8x96xf32> to vector<8x8xf32>
    "tpu.trace_start"() <{level = 10 : i32, message = "qd,kd->qk"}> : () -> ()
    %cst_102 = arith.constant dense<0.000000e+00> : vector<8x8xf32>
    %227 = tpu.matmul %224, %225, %cst_102 {dimension_numbers = #tpu.dot_dimension_numbers<[1], [1], [0], [0], [0, 0, 1, 0], [], []>} : vector<8x8xf32>, vector<8x8xf32>, vector<8x8xf32> -> vector<8x8xf32>
    "tpu.trace_stop"() : () -> ()
    %cst_103 = arith.constant 0.353553385 : f32
    %228 = vector.broadcast %cst_103 : f32 to vector<8x8xf32>
    %229 = arith.mulf %227, %228 : vector<8x8xf32>
    %230 = vector.broadcast %30 : vector<1x8xf32> to vector<8x8xf32>
    %231 = arith.addf %229, %230 : vector<8x8xf32>
    %cst_104 = arith.constant dense<0xFF800000> : vector<8xf32>
    %232 = vector.multi_reduction <maximumf>, %231, %cst_104 [1] : vector<8x8xf32> to vector<8xf32>
    %233 = vector.shape_cast %232 : vector<8xf32> to vector<8x1xf32>
    %234 = vector.broadcast %233 : vector<8x1xf32> to vector<8x8xf32>
    %235 = arith.subf %231, %234 : vector<8x8xf32>
    %236 = math.exp %235 : vector<8x8xf32>
    %cst_105 = arith.constant dense<0.000000e+00> : vector<8xf32>
    %237 = vector.multi_reduction <add>, %236, %cst_105 [1] : vector<8x8xf32> to vector<8xf32>
    %238 = vector.shape_cast %237 : vector<8xf32> to vector<8x1xf32>
    %239 = tpu.reciprocal %238 {approx = true} : vector<8x1xf32> -> vector<8x1xf32>
    %240 = vector.broadcast %239 : vector<8x1xf32> to vector<8x8xf32>
    %241 = arith.mulf %236, %240 : vector<8x8xf32>
    %cst_106 = arith.constant dense<0.000000e+00> : vector<8x8xf32>
    %242 = tpu.matmul %241, %226, %cst_106 {dimension_numbers = #tpu.dot_dimension_numbers<[1], [0], [0], [1], [0, 0, 1, 1], [], []>} : vector<8x8xf32>, vector<8x8xf32>, vector<8x8xf32> -> vector<8x8xf32>
    %243 = vector.extract_strided_slice %222 {offsets = [0, 0], sizes = [8, 32], strides = [1, 1]} : vector<32x32xf32> to vector<8x32xf32>
    %cst_107 = arith.constant dense<0.000000e+00> : vector<8x32xf32>
    %244 = tpu.matmul %242, %243, %cst_107 {dimension_numbers = #tpu.dot_dimension_numbers<[1], [0], [0], [1], [0, 0, 1, 1], [], []>} : vector<8x8xf32>, vector<8x32xf32>, vector<8x32xf32> -> vector<8x32xf32>
    %245 = arith.addf %223, %244 : vector<8x32xf32>
    %246 = vector.extract_strided_slice %220 {offsets = [0, 8], sizes = [8, 8], strides = [1, 1]} : vector<8x96xf32> to vector<8x8xf32>
    %247 = vector.extract_strided_slice %220 {offsets = [0, 40], sizes = [8, 8], strides = [1, 1]} : vector<8x96xf32> to vector<8x8xf32>
    %248 = vector.extract_strided_slice %220 {offsets = [0, 72], sizes = [8, 8], strides = [1, 1]} : vector<8x96xf32> to vector<8x8xf32>
    "tpu.trace_start"() <{level = 10 : i32, message = "qd,kd->qk"}> : () -> ()
    %cst_108 = arith.constant dense<0.000000e+00> : vector<8x8xf32>
    %249 = tpu.matmul %246, %247, %cst_108 {dimension_numbers = #tpu.dot_dimension_numbers<[1], [1], [0], [0], [0, 0, 1, 0], [], []>} : vector<8x8xf32>, vector<8x8xf32>, vector<8x8xf32> -> vector<8x8xf32>
    "tpu.trace_stop"() : () -> ()
    %cst_109 = arith.constant 0.353553385 : f32
    %250 = vector.broadcast %cst_109 : f32 to vector<8x8xf32>
    %251 = arith.mulf %249, %250 : vector<8x8xf32>
    %252 = vector.broadcast %30 : vector<1x8xf32> to vector<8x8xf32>
    %253 = arith.addf %251, %252 : vector<8x8xf32>
    %cst_110 = arith.constant dense<0xFF800000> : vector<8xf32>
    %254 = vector.multi_reduction <maximumf>, %253, %cst_110 [1] : vector<8x8xf32> to vector<8xf32>
    %255 = vector.shape_cast %254 : vector<8xf32> to vector<8x1xf32>
    %256 = vector.broadcast %255 : vector<8x1xf32> to vector<8x8xf32>
    %257 = arith.subf %253, %256 : vector<8x8xf32>
    %258 = math.exp %257 : vector<8x8xf32>
    %cst_111 = arith.constant dense<0.000000e+00> : vector<8xf32>
    %259 = vector.multi_reduction <add>, %258, %cst_111 [1] : vector<8x8xf32> to vector<8xf32>
    %260 = vector.shape_cast %259 : vector<8xf32> to vector<8x1xf32>
    %261 = tpu.reciprocal %260 {approx = true} : vector<8x1xf32> -> vector<8x1xf32>
    %262 = vector.broadcast %261 : vector<8x1xf32> to vector<8x8xf32>
    %263 = arith.mulf %258, %262 : vector<8x8xf32>
    %cst_112 = arith.constant dense<0.000000e+00> : vector<8x8xf32>
    %264 = tpu.matmul %263, %248, %cst_112 {dimension_numbers = #tpu.dot_dimension_numbers<[1], [0], [0], [1], [0, 0, 1, 1], [], []>} : vector<8x8xf32>, vector<8x8xf32>, vector<8x8xf32> -> vector<8x8xf32>
    %265 = vector.extract_strided_slice %222 {offsets = [8, 0], sizes = [8, 32], strides = [1, 1]} : vector<32x32xf32> to vector<8x32xf32>
    %cst_113 = arith.constant dense<0.000000e+00> : vector<8x32xf32>
    %266 = tpu.matmul %264, %265, %cst_113 {dimension_numbers = #tpu.dot_dimension_numbers<[1], [0], [0], [1], [0, 0, 1, 1], [], []>} : vector<8x8xf32>, vector<8x32xf32>, vector<8x32xf32> -> vector<8x32xf32>
    %267 = arith.addf %245, %266 : vector<8x32xf32>
    %268 = vector.extract_strided_slice %220 {offsets = [0, 16], sizes = [8, 8], strides = [1, 1]} : vector<8x96xf32> to vector<8x8xf32>
    %269 = vector.extract_strided_slice %220 {offsets = [0, 48], sizes = [8, 8], strides = [1, 1]} : vector<8x96xf32> to vector<8x8xf32>
    %270 = vector.extract_strided_slice %220 {offsets = [0, 80], sizes = [8, 8], strides = [1, 1]} : vector<8x96xf32> to vector<8x8xf32>
    "tpu.trace_start"() <{level = 10 : i32, message = "qd,kd->qk"}> : () -> ()
    %cst_114 = arith.constant dense<0.000000e+00> : vector<8x8xf32>
    %271 = tpu.matmul %268, %269, %cst_114 {dimension_numbers = #tpu.dot_dimension_numbers<[1], [1], [0], [0], [0, 0, 1, 0], [], []>} : vector<8x8xf32>, vector<8x8xf32>, vector<8x8xf32> -> vector<8x8xf32>
    "tpu.trace_stop"() : () -> ()
    %cst_115 = arith.constant 0.353553385 : f32
    %272 = vector.broadcast %cst_115 : f32 to vector<8x8xf32>
    %273 = arith.mulf %271, %272 : vector<8x8xf32>
    %274 = vector.broadcast %30 : vector<1x8xf32> to vector<8x8xf32>
    %275 = arith.addf %273, %274 : vector<8x8xf32>
    %cst_116 = arith.constant dense<0xFF800000> : vector<8xf32>
    %276 = vector.multi_reduction <maximumf>, %275, %cst_116 [1] : vector<8x8xf32> to vector<8xf32>
    %277 = vector.shape_cast %276 : vector<8xf32> to vector<8x1xf32>
    %278 = vector.broadcast %277 : vector<8x1xf32> to vector<8x8xf32>
    %279 = arith.subf %275, %278 : vector<8x8xf32>
    %280 = math.exp %279 : vector<8x8xf32>
    %cst_117 = arith.constant dense<0.000000e+00> : vector<8xf32>
    %281 = vector.multi_reduction <add>, %280, %cst_117 [1] : vector<8x8xf32> to vector<8xf32>
    %282 = vector.shape_cast %281 : vector<8xf32> to vector<8x1xf32>
    %283 = tpu.reciprocal %282 {approx = true} : vector<8x1xf32> -> vector<8x1xf32>
    %284 = vector.broadcast %283 : vector<8x1xf32> to vector<8x8xf32>
    %285 = arith.mulf %280, %284 : vector<8x8xf32>
    %cst_118 = arith.constant dense<0.000000e+00> : vector<8x8xf32>
    %286 = tpu.matmul %285, %270, %cst_118 {dimension_numbers = #tpu.dot_dimension_numbers<[1], [0], [0], [1], [0, 0, 1, 1], [], []>} : vector<8x8xf32>, vector<8x8xf32>, vector<8x8xf32> -> vector<8x8xf32>
    %287 = vector.extract_strided_slice %222 {offsets = [16, 0], sizes = [8, 32], strides = [1, 1]} : vector<32x32xf32> to vector<8x32xf32>
    %cst_119 = arith.constant dense<0.000000e+00> : vector<8x32xf32>
    %288 = tpu.matmul %286, %287, %cst_119 {dimension_numbers = #tpu.dot_dimension_numbers<[1], [0], [0], [1], [0, 0, 1, 1], [], []>} : vector<8x8xf32>, vector<8x32xf32>, vector<8x32xf32> -> vector<8x32xf32>
    %289 = arith.addf %267, %288 : vector<8x32xf32>
    %290 = vector.extract_strided_slice %220 {offsets = [0, 24], sizes = [8, 8], strides = [1, 1]} : vector<8x96xf32> to vector<8x8xf32>
    %291 = vector.extract_strided_slice %220 {offsets = [0, 56], sizes = [8, 8], strides = [1, 1]} : vector<8x96xf32> to vector<8x8xf32>
    %292 = vector.extract_strided_slice %220 {offsets = [0, 88], sizes = [8, 8], strides = [1, 1]} : vector<8x96xf32> to vector<8x8xf32>
    "tpu.trace_start"() <{level = 10 : i32, message = "qd,kd->qk"}> : () -> ()
    %cst_120 = arith.constant dense<0.000000e+00> : vector<8x8xf32>
    %293 = tpu.matmul %290, %291, %cst_120 {dimension_numbers = #tpu.dot_dimension_numbers<[1], [1], [0], [0], [0, 0, 1, 0], [], []>} : vector<8x8xf32>, vector<8x8xf32>, vector<8x8xf32> -> vector<8x8xf32>
    "tpu.trace_stop"() : () -> ()
    %cst_121 = arith.constant 0.353553385 : f32
    %294 = vector.broadcast %cst_121 : f32 to vector<8x8xf32>
    %295 = arith.mulf %293, %294 : vector<8x8xf32>
    %296 = vector.broadcast %30 : vector<1x8xf32> to vector<8x8xf32>
    %297 = arith.addf %295, %296 : vector<8x8xf32>
    %cst_122 = arith.constant dense<0xFF800000> : vector<8xf32>
    %298 = vector.multi_reduction <maximumf>, %297, %cst_122 [1] : vector<8x8xf32> to vector<8xf32>
    %299 = vector.shape_cast %298 : vector<8xf32> to vector<8x1xf32>
    %300 = vector.broadcast %299 : vector<8x1xf32> to vector<8x8xf32>
    %301 = arith.subf %297, %300 : vector<8x8xf32>
    %302 = math.exp %301 : vector<8x8xf32>
    %cst_123 = arith.constant dense<0.000000e+00> : vector<8xf32>
    %303 = vector.multi_reduction <add>, %302, %cst_123 [1] : vector<8x8xf32> to vector<8xf32>
    %304 = vector.shape_cast %303 : vector<8xf32> to vector<8x1xf32>
    %305 = tpu.reciprocal %304 {approx = true} : vector<8x1xf32> -> vector<8x1xf32>
    %306 = vector.broadcast %305 : vector<8x1xf32> to vector<8x8xf32>
    %307 = arith.mulf %302, %306 : vector<8x8xf32>
    %cst_124 = arith.constant dense<0.000000e+00> : vector<8x8xf32>
    %308 = tpu.matmul %307, %292, %cst_124 {dimension_numbers = #tpu.dot_dimension_numbers<[1], [0], [0], [1], [0, 0, 1, 1], [], []>} : vector<8x8xf32>, vector<8x8xf32>, vector<8x8xf32> -> vector<8x8xf32>
    %309 = vector.extract_strided_slice %222 {offsets = [24, 0], sizes = [8, 32], strides = [1, 1]} : vector<32x32xf32> to vector<8x32xf32>
    %cst_125 = arith.constant dense<0.000000e+00> : vector<8x32xf32>
    %310 = tpu.matmul %308, %309, %cst_125 {dimension_numbers = #tpu.dot_dimension_numbers<[1], [0], [0], [1], [0, 0, 1, 1], [], []>} : vector<8x8xf32>, vector<8x32xf32>, vector<8x32xf32> -> vector<8x32xf32>
    %311 = arith.addf %289, %310 : vector<8x32xf32>
    %312 = arith.addf %213, %311 : vector<8x32xf32>
    %c1_126 = arith.constant 1 : index
    %c0_127 = arith.constant 0 : index
    %c0_128 = arith.constant 0 : index
    %313 = vector.load %arg10[%c1_126, %c0_127, %c0_128] : memref<2x1x32xf32, #tpu.memory_space<vmem>>, vector<1x1x32xf32>
    %314 = vector.shape_cast %313 : vector<1x1x32xf32> to vector<1x32xf32>
    %315 = vector.broadcast %314 : vector<1x32xf32> to vector<8x32xf32>
    %316 = arith.addf %312, %315 : vector<8x32xf32>
    %c1_129 = arith.constant 1 : index
    %c0_130 = arith.constant 0 : index
    %c0_131 = arith.constant 0 : index
    %317 = vector.load %arg11[%c1_129, %c0_130, %c0_131] : memref<2x1x32xf32, #tpu.memory_space<vmem>>, vector<1x1x32xf32>
    %318 = vector.shape_cast %317 : vector<1x1x32xf32> to vector<1x32xf32>
    %c1_132 = arith.constant 1 : index
    %c0_133 = arith.constant 0 : index
    %c0_134 = arith.constant 0 : index
    %319 = vector.load %arg12[%c1_132, %c0_133, %c0_134] : memref<2x1x32xf32, #tpu.memory_space<vmem>>, vector<1x1x32xf32>
    %320 = vector.shape_cast %319 : vector<1x1x32xf32> to vector<1x32xf32>
    %cst_135 = arith.constant dense<0.000000e+00> : vector<8xf32>
    %321 = vector.multi_reduction <add>, %316, %cst_135 [1] : vector<8x32xf32> to vector<8xf32>
    %322 = vector.shape_cast %321 : vector<8xf32> to vector<8x1xf32>
    %cst_136 = arith.constant 3.200000e+01 : f32
    %323 = vector.broadcast %cst_136 : f32 to vector<8x1xf32>
    %324 = arith.divf %322, %323 : vector<8x1xf32>
    %325 = vector.broadcast %324 : vector<8x1xf32> to vector<8x32xf32>
    %326 = arith.subf %316, %325 : vector<8x32xf32>
    %327 = arith.mulf %326, %326 : vector<8x32xf32>
    %cst_137 = arith.constant dense<0.000000e+00> : vector<8xf32>
    %328 = vector.multi_reduction <add>, %327, %cst_137 [1] : vector<8x32xf32> to vector<8xf32>
    %329 = vector.shape_cast %328 : vector<8xf32> to vector<8x1xf32>
    %cst_138 = arith.constant 3.200000e+01 : f32
    %330 = vector.broadcast %cst_138 : f32 to vector<8x1xf32>
    %331 = arith.divf %329, %330 : vector<8x1xf32>
    %332 = vector.broadcast %324 : vector<8x1xf32> to vector<8x32xf32>
    %333 = arith.subf %316, %332 : vector<8x32xf32>
    %cst_139 = arith.constant 9.99999996E-13 : f32
    %334 = vector.broadcast %cst_139 : f32 to vector<8x1xf32>
    %335 = arith.addf %331, %334 : vector<8x1xf32>
    %336 = math.rsqrt %335 : vector<8x1xf32>
    %337 = vector.broadcast %336 : vector<8x1xf32> to vector<8x32xf32>
    %338 = arith.mulf %333, %337 : vector<8x32xf32>
    %339 = vector.broadcast %318 : vector<1x32xf32> to vector<8x32xf32>
    %340 = arith.mulf %338, %339 : vector<8x32xf32>
    %341 = vector.broadcast %320 : vector<1x32xf32> to vector<8x32xf32>
    %342 = arith.addf %340, %341 : vector<8x32xf32>
    %c1_140 = arith.constant 1 : index
    %c0_141 = arith.constant 0 : index
    %c0_142 = arith.constant 0 : index
    %343 = vector.load %arg13[%c1_140, %c0_141, %c0_142] : memref<2x32x64xf32, #tpu.memory_space<vmem>>, vector<1x32x64xf32>
    %344 = vector.shape_cast %343 : vector<1x32x64xf32> to vector<32x64xf32>
    %cst_143 = arith.constant dense<0.000000e+00> : vector<8x64xf32>
    %345 = tpu.matmul %342, %344, %cst_143 {dimension_numbers = #tpu.dot_dimension_numbers<[1], [0], [0], [1], [0, 0, 1, 1], [], []>} : vector<8x32xf32>, vector<32x64xf32>, vector<8x64xf32> -> vector<8x64xf32>
    %c1_144 = arith.constant 1 : index
    %c0_145 = arith.constant 0 : index
    %c0_146 = arith.constant 0 : index
    %346 = vector.load %arg14[%c1_144, %c0_145, %c0_146] : memref<2x1x64xf32, #tpu.memory_space<vmem>>, vector<1x1x64xf32>
    %347 = vector.shape_cast %346 : vector<1x1x64xf32> to vector<1x64xf32>
    %348 = vector.broadcast %347 : vector<1x64xf32> to vector<8x64xf32>
    %349 = arith.addf %345, %348 : vector<8x64xf32>
    %350 = arith.mulf %349, %349 : vector<8x64xf32>
    %351 = arith.mulf %349, %350 : vector<8x64xf32>
    %cst_147 = arith.constant 4.471500e-02 : f32
    %352 = vector.broadcast %cst_147 : f32 to vector<8x64xf32>
    %353 = arith.mulf %352, %351 : vector<8x64xf32>
    %354 = arith.addf %349, %353 : vector<8x64xf32>
    %cst_148 = arith.constant 0.797884583 : f32
    %355 = vector.broadcast %cst_148 : f32 to vector<8x64xf32>
    %356 = arith.mulf %355, %354 : vector<8x64xf32>
    %357 = math.tanh %356 : vector<8x64xf32>
    %cst_149 = arith.constant 1.000000e+00 : f32
    %358 = vector.broadcast %cst_149 : f32 to vector<8x64xf32>
    %359 = arith.addf %358, %357 : vector<8x64xf32>
    %cst_150 = arith.constant 5.000000e-01 : f32
    %360 = vector.broadcast %cst_150 : f32 to vector<8x64xf32>
    %361 = arith.mulf %360, %359 : vector<8x64xf32>
    %362 = arith.mulf %349, %361 : vector<8x64xf32>
    %c1_151 = arith.constant 1 : index
    %c0_152 = arith.constant 0 : index
    %c0_153 = arith.constant 0 : index
    %363 = vector.load %arg15[%c1_151, %c0_152, %c0_153] : memref<2x64x32xf32, #tpu.memory_space<vmem>>, vector<1x64x32xf32>
    %364 = vector.shape_cast %363 : vector<1x64x32xf32> to vector<64x32xf32>
    %cst_154 = arith.constant dense<0.000000e+00> : vector<8x32xf32>
    %365 = tpu.matmul %362, %364, %cst_154 {dimension_numbers = #tpu.dot_dimension_numbers<[1], [0], [0], [1], [0, 0, 1, 1], [], []>} : vector<8x64xf32>, vector<64x32xf32>, vector<8x32xf32> -> vector<8x32xf32>
    %c1_155 = arith.constant 1 : index
    %c0_156 = arith.constant 0 : index
    %c0_157 = arith.constant 0 : index
    %366 = vector.load %arg16[%c1_155, %c0_156, %c0_157] : memref<2x1x32xf32, #tpu.memory_space<vmem>>, vector<1x1x32xf32>
    %367 = vector.shape_cast %366 : vector<1x1x32xf32> to vector<1x32xf32>
    %368 = vector.broadcast %367 : vector<1x32xf32> to vector<8x32xf32>
    %369 = arith.addf %365, %368 : vector<8x32xf32>
    %370 = arith.addf %342, %369 : vector<8x32xf32>
    %c1_158 = arith.constant 1 : index
    %c0_159 = arith.constant 0 : index
    %c0_160 = arith.constant 0 : index
    %371 = vector.load %arg17[%c1_158, %c0_159, %c0_160] : memref<2x1x32xf32, #tpu.memory_space<vmem>>, vector<1x1x32xf32>
    %372 = vector.shape_cast %371 : vector<1x1x32xf32> to vector<1x32xf32>
    %c1_161 = arith.constant 1 : index
    %c0_162 = arith.constant 0 : index
    %c0_163 = arith.constant 0 : index
    %373 = vector.load %arg18[%c1_161, %c0_162, %c0_163] : memref<2x1x32xf32, #tpu.memory_space<vmem>>, vector<1x1x32xf32>
    %374 = vector.shape_cast %373 : vector<1x1x32xf32> to vector<1x32xf32>
    %cst_164 = arith.constant dense<0.000000e+00> : vector<8xf32>
    %375 = vector.multi_reduction <add>, %370, %cst_164 [1] : vector<8x32xf32> to vector<8xf32>
    %376 = vector.shape_cast %375 : vector<8xf32> to vector<8x1xf32>
    %cst_165 = arith.constant 3.200000e+01 : f32
    %377 = vector.broadcast %cst_165 : f32 to vector<8x1xf32>
    %378 = arith.divf %376, %377 : vector<8x1xf32>
    %379 = vector.broadcast %378 : vector<8x1xf32> to vector<8x32xf32>
    %380 = arith.subf %370, %379 : vector<8x32xf32>
    %381 = arith.mulf %380, %380 : vector<8x32xf32>
    %cst_166 = arith.constant dense<0.000000e+00> : vector<8xf32>
    %382 = vector.multi_reduction <add>, %381, %cst_166 [1] : vector<8x32xf32> to vector<8xf32>
    %383 = vector.shape_cast %382 : vector<8xf32> to vector<8x1xf32>
    %cst_167 = arith.constant 3.200000e+01 : f32
    %384 = vector.broadcast %cst_167 : f32 to vector<8x1xf32>
    %385 = arith.divf %383, %384 : vector<8x1xf32>
    %386 = vector.broadcast %378 : vector<8x1xf32> to vector<8x32xf32>
    %387 = arith.subf %370, %386 : vector<8x32xf32>
    %cst_168 = arith.constant 9.99999996E-13 : f32
    %388 = vector.broadcast %cst_168 : f32 to vector<8x1xf32>
    %389 = arith.addf %385, %388 : vector<8x1xf32>
    %390 = math.rsqrt %389 : vector<8x1xf32>
    %391 = vector.broadcast %390 : vector<8x1xf32> to vector<8x32xf32>
    %392 = arith.mulf %387, %391 : vector<8x32xf32>
    %393 = vector.broadcast %372 : vector<1x32xf32> to vector<8x32xf32>
    %394 = arith.mulf %392, %393 : vector<8x32xf32>
    %395 = vector.broadcast %374 : vector<1x32xf32> to vector<8x32xf32>
    %396 = arith.addf %394, %395 : vector<8x32xf32>
    %c0_169 = arith.constant 0 : index
    %c0_170 = arith.constant 0 : index
    %c0_171 = arith.constant 0 : index
    %397 = vector.load %arg3[%c0_169, %c0_170, %c0_171] : memref<1x8x1xf32, #tpu.memory_space<vmem>>, vector<1x8x1xf32>
    %398 = vector.shape_cast %397 : vector<1x8x1xf32> to vector<8x1xf32>
    %399 = vector.broadcast %398 : vector<8x1xf32> to vector<8x32xf32>
    %400 = arith.mulf %396, %399 : vector<8x32xf32>
    %cst_172 = arith.constant 1.000000e+00 : f32
    %401 = vector.broadcast %cst_172 : f32 to vector<8x32xf32>
    %402 = arith.addf %400, %401 : vector<8x32xf32>
    %c0_173 = arith.constant 0 : index
    %c0_174 = arith.constant 0 : index
    %c0_175 = arith.constant 0 : index
    %403 = vector.load %arg4[%c0_173, %c0_174, %c0_175] : memref<1x8x1xf32, #tpu.memory_space<vmem>>, vector<1x8x1xf32>
    %404 = vector.shape_cast %403 : vector<1x8x1xf32> to vector<8x1xf32>
    %405 = vector.broadcast %404 : vector<8x1xf32> to vector<8x32xf32>
    %406 = arith.mulf %396, %405 : vector<8x32xf32>
    %cst_176 = arith.constant 1.000000e+00 : f32
    %407 = vector.broadcast %cst_176 : f32 to vector<8x32xf32>
    %408 = arith.addf %406, %407 : vector<8x32xf32>
    %cst_177 = arith.constant dense<0xFF800000> : vector<32xf32>
    %409 = vector.multi_reduction <maximumf>, %402, %cst_177 [0] : vector<8x32xf32> to vector<32xf32>
    %410 = vector.shape_cast %409 : vector<32xf32> to vector<1x32xf32>
    %cst_178 = arith.constant 1.000000e+00 : f32
    %411 = vector.broadcast %cst_178 : f32 to vector<1x32xf32>
    %412 = arith.subf %410, %411 : vector<1x32xf32>
    %cst_179 = arith.constant dense<0xFF800000> : vector<32xf32>
    %413 = vector.multi_reduction <maximumf>, %408, %cst_179 [0] : vector<8x32xf32> to vector<32xf32>
    %414 = vector.shape_cast %413 : vector<32xf32> to vector<1x32xf32>
    %cst_180 = arith.constant 1.000000e+00 : f32
    %415 = vector.broadcast %cst_180 : f32 to vector<1x32xf32>
    %416 = arith.subf %414, %415 : vector<1x32xf32>
    %c0_181 = arith.constant 0 : index
    %c0_182 = arith.constant 0 : index
    %417 = vector.load %arg19[%c0_181, %c0_182] : memref<64x8xf32, #tpu.memory_space<vmem>>, vector<64x8xf32>
    %418 = vector.extract_strided_slice %417 {offsets = [0, 0], sizes = [32, 8], strides = [1, 1]} : vector<64x8xf32> to vector<32x8xf32>
    %cst_183 = arith.constant dense<0.000000e+00> : vector<1x8xf32>
    %419 = tpu.matmul %412, %418, %cst_183 {dimension_numbers = #tpu.dot_dimension_numbers<[1], [0], [0], [1], [0, 0, 1, 1], [], []>} : vector<1x32xf32>, vector<32x8xf32>, vector<1x8xf32> -> vector<1x8xf32>
    %420 = vector.extract_strided_slice %417 {offsets = [32, 0], sizes = [32, 8], strides = [1, 1]} : vector<64x8xf32> to vector<32x8xf32>
    %cst_184 = arith.constant dense<0.000000e+00> : vector<1x8xf32>
    %421 = tpu.matmul %416, %420, %cst_184 {dimension_numbers = #tpu.dot_dimension_numbers<[1], [0], [0], [1], [0, 0, 1, 1], [], []>} : vector<1x32xf32>, vector<32x8xf32>, vector<1x8xf32> -> vector<1x8xf32>
    %422 = arith.addf %419, %421 : vector<1x8xf32>
    %c0_185 = arith.constant 0 : index
    %c0_186 = arith.constant 0 : index
    %423 = vector.load %arg20[%c0_185, %c0_186] : memref<1x8xf32, #tpu.memory_space<vmem>>, vector<1x8xf32>
    %424 = arith.addf %422, %423 : vector<1x8xf32>
    %cst_187 = arith.constant dense<0xFF800000> : vector<1xf32>
    %425 = vector.multi_reduction <maximumf>, %424, %cst_187 [1] : vector<1x8xf32> to vector<1xf32>
    %426 = vector.shape_cast %425 : vector<1xf32> to vector<1x1xf32>
    %427 = vector.broadcast %426 : vector<1x1xf32> to vector<1x8xf32>
    %428 = arith.subf %424, %427 : vector<1x8xf32>
    %429 = math.exp %428 : vector<1x8xf32>
    %cst_188 = arith.constant dense<0.000000e+00> : vector<1xf32>
    %430 = vector.multi_reduction <add>, %429, %cst_188 [1] : vector<1x8xf32> to vector<1xf32>
    %431 = vector.shape_cast %430 : vector<1xf32> to vector<1x1xf32>
    %432 = tpu.reciprocal %431 {approx = true} : vector<1x1xf32> -> vector<1x1xf32>
    %433 = vector.broadcast %432 : vector<1x1xf32> to vector<1x8xf32>
    %434 = arith.mulf %429, %433 : vector<1x8xf32>
    %c0_189 = arith.constant 0 : index
    %c0_190 = arith.constant 0 : index
    %c0_191 = arith.constant 0 : index
    %435 = vector.load %arg21[%c0_189, %c0_190, %c0_191] : memref<1x1x8xf32, #tpu.memory_space<vmem>>, vector<1x1x8xf32>
    %436 = vector.shape_cast %435 : vector<1x1x8xf32> to vector<1x8xf32>
    %437 = vector.shape_cast %434 : vector<1x8xf32> to vector<1x1x8xf32>
    tpu.vector_store %arg21[%c0_189, %c0_190, %c0_191], %437 {strides = array<i32>} : memref<1x1x8xf32, #tpu.memory_space<vmem>>, vector<1x1x8xf32>,
    return
  }
  func.func @transform_0(%arg0: i32) -> (i32, i32) {
    %c0_i32 = arith.constant 0 : i32
    %c0_i32_0 = arith.constant 0 : i32
    return %arg0, %c0_i32 : i32, i32
  }
  func.func @transform_1(%arg0: i32) -> (i32, i32, i32) {
    %c0_i32 = arith.constant 0 : i32
    %c0_i32_0 = arith.constant 0 : i32
    %c0_i32_1 = arith.constant 0 : i32
    return %arg0, %c0_i32, %c0_i32_0 : i32, i32, i32
  }
  func.func @transform_2(%arg0: i32) -> (i32, i32, i32) {
    %c0_i32 = arith.constant 0 : i32
    %c0_i32_0 = arith.constant 0 : i32
    %c0_i32_1 = arith.constant 0 : i32
    return %arg0, %c0_i32, %c0_i32_0 : i32, i32, i32
  }
  func.func @transform_3(%arg0: i32) -> (i32, i32, i32) {
    %c0_i32 = arith.constant 0 : i32
    %c0_i32_0 = arith.constant 0 : i32
    %c0_i32_1 = arith.constant 0 : i32
    return %arg0, %c0_i32, %c0_i32_0 : i32, i32, i32
  }
  func.func @transform_4(%arg0: i32) -> (i32, i32) {
    %c0_i32 = arith.constant 0 : i32
    %c0_i32_0 = arith.constant 0 : i32
    %c0_i32_1 = arith.constant 0 : i32
    return %c0_i32, %c0_i32_0 : i32, i32
  }
  func.func @transform_5(%arg0: i32) -> (i32, i32) {
    %c0_i32 = arith.constant 0 : i32
    %c0_i32_0 = arith.constant 0 : i32
    %c0_i32_1 = arith.constant 0 : i32
    return %c0_i32, %c0_i32_0 : i32, i32
  }
  func.func @transform_6(%arg0: i32) -> (i32, i32, i32) {
    %c0_i32 = arith.constant 0 : i32
    %c0_i32_0 = arith.constant 0 : i32
    %c0_i32_1 = arith.constant 0 : i32
    %c0_i32_2 = arith.constant 0 : i32
    return %c0_i32, %c0_i32_0, %c0_i32_1 : i32, i32, i32
  }
  func.func @transform_7(%arg0: i32) -> (i32, i32, i32) {
    %c0_i32 = arith.constant 0 : i32
    %c0_i32_0 = arith.constant 0 : i32
    %c0_i32_1 = arith.constant 0 : i32
    %c0_i32_2 = arith.constant 0 : i32
    return %c0_i32, %c0_i32_0, %c0_i32_1 : i32, i32, i32
  }
  func.func @transform_8(%arg0: i32) -> (i32, i32, i32) {
    %c0_i32 = arith.constant 0 : i32
    %c0_i32_0 = arith.constant 0 : i32
    %c0_i32_1 = arith.constant 0 : i32
    %c0_i32_2 = arith.constant 0 : i32
    return %c0_i32, %c0_i32_0, %c0_i32_1 : i32, i32, i32
  }
  func.func @transform_9(%arg0: i32) -> (i32, i32, i32) {
    %c0_i32 = arith.constant 0 : i32
    %c0_i32_0 = arith.constant 0 : i32
    %c0_i32_1 = arith.constant 0 : i32
    %c0_i32_2 = arith.constant 0 : i32
    return %c0_i32, %c0_i32_0, %c0_i32_1 : i32, i32, i32
  }
  func.func @transform_10(%arg0: i32) -> (i32, i32, i32) {
    %c0_i32 = arith.constant 0 : i32
    %c0_i32_0 = arith.constant 0 : i32
    %c0_i32_1 = arith.constant 0 : i32
    %c0_i32_2 = arith.constant 0 : i32
    return %c0_i32, %c0_i32_0, %c0_i32_1 : i32, i32, i32
  }
  func.func @transform_11(%arg0: i32) -> (i32, i32, i32) {
    %c0_i32 = arith.constant 0 : i32
    %c0_i32_0 = arith.constant 0 : i32
    %c0_i32_1 = arith.constant 0 : i32
    %c0_i32_2 = arith.constant 0 : i32
    return %c0_i32, %c0_i32_0, %c0_i32_1 : i32, i32, i32
  }
  func.func @transform_12(%arg0: i32) -> (i32, i32, i32) {
    %c0_i32 = arith.constant 0 : i32
    %c0_i32_0 = arith.constant 0 : i32
    %c0_i32_1 = arith.constant 0 : i32
    %c0_i32_2 = arith.constant 0 : i32
    return %c0_i32, %c0_i32_0, %c0_i32_1 : i32, i32, i32
  }
  func.func @transform_13(%arg0: i32) -> (i32, i32, i32) {
    %c0_i32 = arith.constant 0 : i32
    %c0_i32_0 = arith.constant 0 : i32
    %c0_i32_1 = arith.constant 0 : i32
    %c0_i32_2 = arith.constant 0 : i32
    return %c0_i32, %c0_i32_0, %c0_i32_1 : i32, i32, i32
  }
  func.func @transform_14(%arg0: i32) -> (i32, i32, i32) {
    %c0_i32 = arith.constant 0 : i32
    %c0_i32_0 = arith.constant 0 : i32
    %c0_i32_1 = arith.constant 0 : i32
    %c0_i32_2 = arith.constant 0 : i32
    return %c0_i32, %c0_i32_0, %c0_i32_1 : i32, i32, i32
  }
  func.func @transform_15(%arg0: i32) -> (i32, i32, i32) {
    %c0_i32 = arith.constant 0 : i32
    %c0_i32_0 = arith.constant 0 : i32
    %c0_i32_1 = arith.constant 0 : i32
    %c0_i32_2 = arith.constant 0 : i32
    return %c0_i32, %c0_i32_0, %c0_i32_1 : i32, i32, i32
  }
  func.func @transform_16(%arg0: i32) -> (i32, i32, i32) {
    %c0_i32 = arith.constant 0 : i32
    %c0_i32_0 = arith.constant 0 : i32
    %c0_i32_1 = arith.constant 0 : i32
    %c0_i32_2 = arith.constant 0 : i32
    return %c0_i32, %c0_i32_0, %c0_i32_1 : i32, i32, i32
  }
  func.func @transform_17(%arg0: i32) -> (i32, i32, i32) {
    %c0_i32 = arith.constant 0 : i32
    %c0_i32_0 = arith.constant 0 : i32
    %c0_i32_1 = arith.constant 0 : i32
    %c0_i32_2 = arith.constant 0 : i32
    return %c0_i32, %c0_i32_0, %c0_i32_1 : i32, i32, i32
  }
  func.func @transform_18(%arg0: i32) -> (i32, i32) {
    %c0_i32 = arith.constant 0 : i32
    %c0_i32_0 = arith.constant 0 : i32
    %c0_i32_1 = arith.constant 0 : i32
    return %c0_i32, %c0_i32_0 : i32, i32
  }
  func.func @transform_19(%arg0: i32) -> (i32, i32) {
    %c0_i32 = arith.constant 0 : i32
    %c0_i32_0 = arith.constant 0 : i32
    %c0_i32_1 = arith.constant 0 : i32
    return %c0_i32, %c0_i32_0 : i32, i32
  }
  func.func @transform_20(%arg0: i32) -> (i32, i32, i32) {
    %c0_i32 = arith.constant 0 : i32
    %c0_i32_0 = arith.constant 0 : i32
    %c0_i32_1 = arith.constant 0 : i32
    return %arg0, %c0_i32, %c0_i32_0 : i32, i32, i32
  }
}

</mosaic_0001>

<llo_original>
// kernel: discriminator_forward.1
$region0: #{discriminator_forward.1}
  #allocation0 [shape = 'u32[]', space=smem, size = 0x4, offset = 0x4, fixed_abs, tag = 'smem constant byte address 0x4 - core index']
  #allocation1 [shape = 'u32[144,128]{1,0:T(1,128)}', space=vmem, size = 0x12000, scoped, tag = 'internal scratch']
  %s0 = inlined_call_operand.vmem [shape: f32[16,32], index: 0, kind: input, shape index: {}]
  %s1 = inlined_call_operand.vmem [shape: f32[2,1,8], index: 1, kind: input, shape index: {}]
  %s2 = inlined_call_operand.vmem [shape: f32[2,8,1], index: 2, kind: input, shape index: {}]
  %s3 = inlined_call_operand.vmem [shape: f32[2,8,1], index: 3, kind: input, shape index: {}]
  %s4 = inlined_call_operand.vmem [shape: f32[1,32], index: 4, kind: input, shape index: {}]
  %s5 = inlined_call_operand.vmem [shape: f32[1,32], index: 5, kind: input, shape index: {}]
  %s6 = inlined_call_operand.vmem [shape: f32[2,32,96], index: 6, kind: input, shape index: {}]
  %s7 = inlined_call_operand.vmem [shape: f32[2,1,96], index: 7, kind: input, shape index: {}]
  %s8 = inlined_call_operand.vmem [shape: f32[2,32,32], index: 8, kind: input, shape index: {}]
  %s9 = inlined_call_operand.vmem [shape: f32[2,1,32], index: 9, kind: input, shape index: {}]
  %s10 = inlined_call_operand.vmem [shape: f32[2,1,32], index: 10, kind: input, shape index: {}]
  %s11 = inlined_call_operand.vmem [shape: f32[2,1,32], index: 11, kind: input, shape index: {}]
  %s12 = inlined_call_operand.vmem [shape: f32[2,32,64], index: 12, kind: input, shape index: {}]
  %s13 = inlined_call_operand.vmem [shape: f32[2,1,64], index: 13, kind: input, shape index: {}]
  %s14 = inlined_call_operand.vmem [shape: f32[2,64,32], index: 14, kind: input, shape index: {}]
  %s15 = inlined_call_operand.vmem [shape: f32[2,1,32], index: 15, kind: input, shape index: {}]
  %s16 = inlined_call_operand.vmem [shape: f32[2,1,32], index: 16, kind: input, shape index: {}]
  %s17 = inlined_call_operand.vmem [shape: f32[2,1,32], index: 17, kind: input, shape index: {}]
  %s18 = inlined_call_operand.vmem [shape: f32[64,8], index: 18, kind: input, shape index: {}]
  %s19 = inlined_call_operand.vmem [shape: f32[1,8], index: 19, kind: input, shape index: {}]
  %s20 = inlined_call_operand.hbm [shape: f32[2,1,8], index: 20, kind: output, shape index: {}]
  %s21 = sld [smem:[#allocation0]]
  $region113: #{discriminator_forward.1} parent=0
    _
  %s23 = ssub.s32 1, %s21
  %s24 = scalar_select 0, %s23, %s21
  $region1: #{discriminator_forward.1} parent=0
    #allocation2 [shape = 'u8[1024]{0}', space=vmem, size = 0x400, scoped, tag = 'output window, operand 0']
    #allocation3 [shape = 's32[2]{0}', space=sflag, size = 0x8, scoped, tag = 'scoped memory for discriminator_forward.1']
    %25 = vsyncpa [#allocation3], 0
    %s26 = scalar_lea.sflag [#allocation3], 1
    %27 = vsyncpa %s26, 0
    loop: start=0, step=1, limit=4
    $region2: #{discriminator_forward.1} parent=1 // loop_pre_header
      _
    $region3: #{discriminator_forward.1} parent=1 // loop_header
      %s29 = sphi 0, %s33
      %p30 = scmp.ge.s32.totalorder %s29, 4
      %s39 = sphi 0, %s41
      %s42 = sphi 0, %s39
      %s43 = sphi 0, %s42
      %s59 = sphi 0, %s43
      %s65 = sphi 0, %s67
      %s68 = sphi 0, %s65
      %s69 = sphi 0, %s68
      %s85 = sphi 0, %s69
      %s91 = sphi 0, %s93
      %s94 = sphi 0, %s91
      %s95 = sphi 0, %s94
      %s111 = sphi 0, %s95
      %s117 = sphi 0, %s119
      %s120 = sphi 0, %s117
      %s121 = sphi 0, %s120
      %s137 = sphi 0, %s121
      %s141 = sphi 0, %s141
      %s143 = sphi 0, %s141
      %s144 = sphi 0, %s143
      %s158 = sphi 0, %s144
      %s162 = sphi 0, %s162
      %s164 = sphi 0, %s162
      %s165 = sphi 0, %s164
      %s179 = sphi 0, %s165
      %s183 = sphi 0, %s183
      %s185 = sphi 0, %s183
      %s186 = sphi 0, %s185
      %s200 = sphi 0, %s186
      %s204 = sphi 0, %s204
      %s206 = sphi 0, %s204
      %s207 = sphi 0, %s206
      %s221 = sphi 0, %s207
      %s225 = sphi 0, %s225
      %s227 = sphi 0, %s225
      %s228 = sphi 0, %s227
      %s242 = sphi 0, %s228
      %s246 = sphi 0, %s246
      %s248 = sphi 0, %s246
      %s249 = sphi 0, %s248
      %s263 = sphi 0, %s249
      %s267 = sphi 0, %s267
      %s269 = sphi 0, %s267
      %s270 = sphi 0, %s269
      %s284 = sphi 0, %s270
      %s288 = sphi 0, %s288
      %s290 = sphi 0, %s288
      %s291 = sphi 0, %s290
      %s305 = sphi 0, %s291
      %s309 = sphi 0, %s309
      %s311 = sphi 0, %s309
      %s312 = sphi 0, %s311
      %s326 = sphi 0, %s312
      %s330 = sphi 0, %s330
      %s332 = sphi 0, %s330
      %s333 = sphi 0, %s332
      %s347 = sphi 0, %s333
      %s351 = sphi 0, %s351
      %s353 = sphi 0, %s351
      %s354 = sphi 0, %s353
      %s368 = sphi 0, %s354
      %s372 = sphi 0, %s372
      %s374 = sphi 0, %s372
      %s375 = sphi 0, %s374
      %s389 = sphi 0, %s375
      %s393 = sphi 0, %s393
      %s395 = sphi 0, %s393
      %s396 = sphi 0, %s395
      %s410 = sphi 0, %s396
      %s414 = sphi 0, %s414
      %s416 = sphi 0, %s414
      %s417 = sphi 0, %s416
      %s431 = sphi 0, %s417
      %s435 = sphi 0, %s435
      %s437 = sphi 0, %s435
      %s438 = sphi 0, %s437
      %s452 = sphi 0, %s438
      %s456 = sphi 0, %s456
      %s458 = sphi 0, %s456
      %s459 = sphi 0, %s458
      %s473 = sphi 0, %s459
      %s479 = sphi 0, %s481
      %s482 = sphi 0, %s479
      %s483 = sphi 0, %s482
      %s499 = sphi 0, %s483
    $region4: #{discriminator_forward.1} parent=1 // loop_header_branch
      %32 = sbr.rel (%p30) target = $region8
    $region5: #{discriminator_forward.1} parent=1 // loop_body
      %s34 = ssub.s32 %s29, 1
      %s35 = ssub.s32 %s29, 2
      %s36 = sadd.s32 %s29, 1
      %s37 = ssub.s32 %s29, %s36
      %p38 = scmp.eq.s32.totalorder %s37, 0
      %s40 = sadd.s32 %s39, 1
      %s41 = scalar_select %p38, %s39, %s40
      %p44 = pneg %p38
      %p45 = scmp.eq.s32.totalorder %s29, 1
      %p46 = por %p44, %p45
      %p47 = scmp.ne.s32.totalorder %s39, %s42
      %p48 = scmp.eq.s32.totalorder %s29, 0
      %p49 = por %p47, %p48
      %p50 = scmp.ne.s32.totalorder %s39, %s42
      %p51 = scmp.eq.s32.totalorder %s34, 1
      %p52 = por %p50, %p51
      %p53 = scmp.ne.s32.totalorder %s42, %s43
      %p54 = scmp.eq.s32.totalorder %s34, 0
      %p55 = por %p53, %p54
      %p56 = scmp.ne.s32.totalorder %s42, %s43
      %p57 = scmp.eq.s32.totalorder %s35, 1
      %p58 = por %p56, %p57
      %p60 = scmp.ne.s32.totalorder %s43, %s59
      %p61 = scmp.eq.s32.totalorder %s35, 0
      %p62 = por %p60, %p61
      %s63 = ssub.s32 %s29, %s36
      %p64 = scmp.eq.s32.totalorder %s63, 0
      %s66 = sadd.s32 %s65, 1
      %s67 = scalar_select %p64, %s65, %s66
      %p70 = pneg %p64
      %p71 = scmp.eq.s32.totalorder %s29, 1
      %p72 = por %p70, %p71
      %p73 = scmp.ne.s32.totalorder %s65, %s68
      %p74 = scmp.eq.s32.totalorder %s29, 0
      %p75 = por %p73, %p74
      %p76 = scmp.ne.s32.totalorder %s65, %s68
      %p77 = scmp.eq.s32.totalorder %s34, 1
      %p78 = por %p76, %p77
      %p79 = scmp.ne.s32.totalorder %s68, %s69
      %p80 = scmp.eq.s32.totalorder %s34, 0
      %p81 = por %p79, %p80
      %p82 = scmp.ne.s32.totalorder %s68, %s69
      %p83 = scmp.eq.s32.totalorder %s35, 1
      %p84 = por %p82, %p83
      %p86 = scmp.ne.s32.totalorder %s69, %s85
      %p87 = scmp.eq.s32.totalorder %s35, 0
      %p88 = por %p86, %p87
      %s89 = ssub.s32 %s29, %s36
      %p90 = scmp.eq.s32.totalorder %s89, 0
      %s92 = sadd.s32 %s91, 1
      %s93 = scalar_select %p90, %s91, %s92
      %p96 = pneg %p90
      %p97 = scmp.eq.s32.totalorder %s29, 1
      %p98 = por %p96, %p97
      %p99 = scmp.ne.s32.totalorder %s91, %s94
      %p100 = scmp.eq.s32.totalorder %s29, 0
      %p101 = por %p99, %p100
      %p102 = scmp.ne.s32.totalorder %s91, %s94
      %p103 = scmp.eq.s32.totalorder %s34, 1
      %p104 = por %p102, %p103
      %p105 = scmp.ne.s32.totalorder %s94, %s95
      %p106 = scmp.eq.s32.totalorder %s34, 0
      %p107 = por %p105, %p106
      %p108 = scmp.ne.s32.totalorder %s94, %s95
      %p109 = scmp.eq.s32.totalorder %s35, 1
      %p110 = por %p108, %p109
      %p112 = scmp.ne.s32.totalorder %s95, %s111
      %p113 = scmp.eq.s32.totalorder %s35, 0
      %p114 = por %p112, %p113
      %s115 = ssub.s32 %s29, %s36
      %p116 = scmp.eq.s32.totalorder %s115, 0
      %s118 = sadd.s32 %s117, 1
      %s119 = scalar_select %p116, %s117, %s118
      %p122 = pneg %p116
      %p123 = scmp.eq.s32.totalorder %s29, 1
      %p124 = por %p122, %p123
      %p125 = scmp.ne.s32.totalorder %s117, %s120
      %p126 = scmp.eq.s32.totalorder %s29, 0
      %p127 = por %p125, %p126
      %p128 = scmp.ne.s32.totalorder %s117, %s120
      %p129 = scmp.eq.s32.totalorder %s34, 1
      %p130 = por %p128, %p129
      %p131 = scmp.ne.s32.totalorder %s120, %s121
      %p132 = scmp.eq.s32.totalorder %s34, 0
      %p133 = por %p131, %p132
      %p134 = scmp.ne.s32.totalorder %s120, %s121
      %p135 = scmp.eq.s32.totalorder %s35, 1
      %p136 = por %p134, %p135
      %p138 = scmp.ne.s32.totalorder %s121, %s137
      %p139 = scmp.eq.s32.totalorder %s35, 0
      %p140 = por %p138, %p139
      %s142 = sadd.s32 %s141, 1
      %p145 = scmp.eq.s32.totalorder %s29, 1
      %p146 = scmp.ne.s32.totalorder %s141, %s143
      %p147 = scmp.eq.s32.totalorder %s29, 0
      %p148 = por %p146, %p147
      %p149 = scmp.ne.s32.totalorder %s141, %s143
      %p150 = scmp.eq.s32.totalorder %s34, 1
      %p151 = por %p149, %p150
      %p152 = scmp.ne.s32.totalorder %s143, %s144
      %p153 = scmp.eq.s32.totalorder %s34, 0
      %p154 = por %p152, %p153
      %p155 = scmp.ne.s32.totalorder %s143, %s144
      %p156 = scmp.eq.s32.totalorder %s35, 1
      %p157 = por %p155, %p156
      %p159 = scmp.ne.s32.totalorder %s144, %s158
      %p160 = scmp.eq.s32.totalorder %s35, 0
      %p161 = por %p159, %p160
      %s163 = sadd.s32 %s162, 1
      %p166 = scmp.eq.s32.totalorder %s29, 1
      %p167 = scmp.ne.s32.totalorder %s162, %s164
      %p168 = scmp.eq.s32.totalorder %s29, 0
      %p169 = por %p167, %p168
      %p170 = scmp.ne.s32.totalorder %s162, %s164
      %p171 = scmp.eq.s32.totalorder %s34, 1
      %p172 = por %p170, %p171
      %p173 = scmp.ne.s32.totalorder %s164, %s165
      %p174 = scmp.eq.s32.totalorder %s34, 0
      %p175 = por %p173, %p174
      %p176 = scmp.ne.s32.totalorder %s164, %s165
      %p177 = scmp.eq.s32.totalorder %s35, 1
      %p178 = por %p176, %p177
      %p180 = scmp.ne.s32.totalorder %s165, %s179
      %p181 = scmp.eq.s32.totalorder %s35, 0
      %p182 = por %p180, %p181
      %s184 = sadd.s32 %s183, 1
      %p187 = scmp.eq.s32.totalorder %s29, 1
      %p188 = scmp.ne.s32.totalorder %s183, %s185
      %p189 = scmp.eq.s32.totalorder %s29, 0
      %p190 = por %p188, %p189
      %p191 = scmp.ne.s32.totalorder %s183, %s185
      %p192 = scmp.eq.s32.totalorder %s34, 1
      %p193 = por %p191, %p192
      %p194 = scmp.ne.s32.totalorder %s185, %s186
      %p195 = scmp.eq.s32.totalorder %s34, 0
      %p196 = por %p194, %p195
      %p197 = scmp.ne.s32.totalorder %s185, %s186
      %p198 = scmp.eq.s32.totalorder %s35, 1
      %p199 = por %p197, %p198
      %p201 = scmp.ne.s32.totalorder %s186, %s200
      %p202 = scmp.eq.s32.totalorder %s35, 0
      %p203 = por %p201, %p202
      %s205 = sadd.s32 %s204, 1
      %p208 = scmp.eq.s32.totalorder %s29, 1
      %p209 = scmp.ne.s32.totalorder %s204, %s206
      %p210 = scmp.eq.s32.totalorder %s29, 0
      %p211 = por %p209, %p210
      %p212 = scmp.ne.s32.totalorder %s204, %s206
      %p213 = scmp.eq.s32.totalorder %s34, 1
      %p214 = por %p212, %p213
      %p215 = scmp.ne.s32.totalorder %s206, %s207
      %p216 = scmp.eq.s32.totalorder %s34, 0
      %p217 = por %p215, %p216
      %p218 = scmp.ne.s32.totalorder %s206, %s207
      %p219 = scmp.eq.s32.totalorder %s35, 1
      %p220 = por %p218, %p219
      %p222 = scmp.ne.s32.totalorder %s207, %s221
      %p223 = scmp.eq.s32.totalorder %s35, 0
      %p224 = por %p222, %p223
      %s226 = sadd.s32 %s225, 1
      %p229 = scmp.eq.s32.totalorder %s29, 1
      %p230 = scmp.ne.s32.totalorder %s225, %s227
      %p231 = scmp.eq.s32.totalorder %s29, 0
      %p232 = por %p230, %p231
      %p233 = scmp.ne.s32.totalorder %s225, %s227
      %p234 = scmp.eq.s32.totalorder %s34, 1
      %p235 = por %p233, %p234
      %p236 = scmp.ne.s32.totalorder %s227, %s228
      %p237 = scmp.eq.s32.totalorder %s34, 0
      %p238 = por %p236, %p237
      %p239 = scmp.ne.s32.totalorder %s227, %s228
      %p240 = scmp.eq.s32.totalorder %s35, 1
      %p241 = por %p239, %p240
      %p243 = scmp.ne.s32.totalorder %s228, %s242
      %p244 = scmp.eq.s32.totalorder %s35, 0
      %p245 = por %p243, %p244
      %s247 = sadd.s32 %s246, 1
      %p250 = scmp.eq.s32.totalorder %s29, 1
      %p251 = scmp.ne.s32.totalorder %s246, %s248
      %p252 = scmp.eq.s32.totalorder %s29, 0
      %p253 = por %p251, %p252
      %p254 = scmp.ne.s32.totalorder %s246, %s248
      %p255 = scmp.eq.s32.totalorder %s34, 1
      %p256 = por %p254, %p255
      %p257 = scmp.ne.s32.totalorder %s248, %s249
      %p258 = scmp.eq.s32.totalorder %s34, 0
      %p259 = por %p257, %p258
      %p260 = scmp.ne.s32.totalorder %s248, %s249
      %p261 = scmp.eq.s32.totalorder %s35, 1
      %p262 = por %p260, %p261
      %p264 = scmp.ne.s32.totalorder %s249, %s263
      %p265 = scmp.eq.s32.totalorder %s35, 0
      %p266 = por %p264, %p265
      %s268 = sadd.s32 %s267, 1
      %p271 = scmp.eq.s32.totalorder %s29, 1
      %p272 = scmp.ne.s32.totalorder %s267, %s269
      %p273 = scmp.eq.s32.totalorder %s29, 0
      %p274 = por %p272, %p273
      %p275 = scmp.ne.s32.totalorder %s267, %s269
      %p276 = scmp.eq.s32.totalorder %s34, 1
      %p277 = por %p275, %p276
      %p278 = scmp.ne.s32.totalorder %s269, %s270
      %p279 = scmp.eq.s32.totalorder %s34, 0
      %p280 = por %p278, %p279
      %p281 = scmp.ne.s32.totalorder %s269, %s270
      %p282 = scmp.eq.s32.totalorder %s35, 1
      %p283 = por %p281, %p282
      %p285 = scmp.ne.s32.totalorder %s270, %s284
      %p286 = scmp.eq.s32.totalorder %s35, 0
      %p287 = por %p285, %p286
      %s289 = sadd.s32 %s288, 1
      %p292 = scmp.eq.s32.totalorder %s29, 1
      %p293 = scmp.ne.s32.totalorder %s288, %s290
      %p294 = scmp.eq.s32.totalorder %s29, 0
      %p295 = por %p293, %p294
      %p296 = scmp.ne.s32.totalorder %s288, %s290
      %p297 = scmp.eq.s32.totalorder %s34, 1
      %p298 = por %p296, %p297
      %p299 = scmp.ne.s32.totalorder %s290, %s291
      %p300 = scmp.eq.s32.totalorder %s34, 0
      %p301 = por %p299, %p300
      %p302 = scmp.ne.s32.totalorder %s290, %s291
      %p303 = scmp.eq.s32.totalorder %s35, 1
      %p304 = por %p302, %p303
      %p306 = scmp.ne.s32.totalorder %s291, %s305
      %p307 = scmp.eq.s32.totalorder %s35, 0
      %p308 = por %p306, %p307
      %s310 = sadd.s32 %s309, 1
      %p313 = scmp.eq.s32.totalorder %s29, 1
      %p314 = scmp.ne.s32.totalorder %s309, %s311
      %p315 = scmp.eq.s32.totalorder %s29, 0
      %p316 = por %p314, %p315
      %p317 = scmp.ne.s32.totalorder %s309, %s311
      %p318 = scmp.eq.s32.totalorder %s34, 1
      %p319 = por %p317, %p318
      %p320 = scmp.ne.s32.totalorder %s311, %s312
      %p321 = scmp.eq.s32.totalorder %s34, 0
      %p322 = por %p320, %p321
      %p323 = scmp.ne.s32.totalorder %s311, %s312
      %p324 = scmp.eq.s32.totalorder %s35, 1
      %p325 = por %p323, %p324
      %p327 = scmp.ne.s32.totalorder %s312, %s326
      %p328 = scmp.eq.s32.totalorder %s35, 0
      %p329 = por %p327, %p328
      %s331 = sadd.s32 %s330, 1
      %p334 = scmp.eq.s32.totalorder %s29, 1
      %p335 = scmp.ne.s32.totalorder %s330, %s332
      %p336 = scmp.eq.s32.totalorder %s29, 0
      %p337 = por %p335, %p336
      %p338 = scmp.ne.s32.totalorder %s330, %s332
      %p339 = scmp.eq.s32.totalorder %s34, 1
      %p340 = por %p338, %p339
      %p341 = scmp.ne.s32.totalorder %s332, %s333
      %p342 = scmp.eq.s32.totalorder %s34, 0
      %p343 = por %p341, %p342
      %p344 = scmp.ne.s32.totalorder %s332, %s333
      %p345 = scmp.eq.s32.totalorder %s35, 1
      %p346 = por %p344, %p345
      %p348 = scmp.ne.s32.totalorder %s333, %s347
      %p349 = scmp.eq.s32.totalorder %s35, 0
      %p350 = por %p348, %p349
      %s352 = sadd.s32 %s351, 1
      %p355 = scmp.eq.s32.totalorder %s29, 1
      %p356 = scmp.ne.s32.totalorder %s351, %s353
      %p357 = scmp.eq.s32.totalorder %s29, 0
      %p358 = por %p356, %p357
      %p359 = scmp.ne.s32.totalorder %s351, %s353
      %p360 = scmp.eq.s32.totalorder %s34, 1
      %p361 = por %p359, %p360
      %p362 = scmp.ne.s32.totalorder %s353, %s354
      %p363 = scmp.eq.s32.totalorder %s34, 0
      %p364 = por %p362, %p363
      %p365 = scmp.ne.s32.totalorder %s353, %s354
      %p366 = scmp.eq.s32.totalorder %s35, 1
      %p367 = por %p365, %p366
      %p369 = scmp.ne.s32.totalorder %s354, %s368
      %p370 = scmp.eq.s32.totalorder %s35, 0
      %p371 = por %p369, %p370
      %s373 = sadd.s32 %s372, 1
      %p376 = scmp.eq.s32.totalorder %s29, 1
      %p377 = scmp.ne.s32.totalorder %s372, %s374
      %p378 = scmp.eq.s32.totalorder %s29, 0
      %p379 = por %p377, %p378
      %p380 = scmp.ne.s32.totalorder %s372, %s374
      %p381 = scmp.eq.s32.totalorder %s34, 1
      %p382 = por %p380, %p381
      %p383 = scmp.ne.s32.totalorder %s374, %s375
      %p384 = scmp.eq.s32.totalorder %s34, 0
      %p385 = por %p383, %p384
      %p386 = scmp.ne.s32.totalorder %s374, %s375
      %p387 = scmp.eq.s32.totalorder %s35, 1
      %p388 = por %p386, %p387
      %p390 = scmp.ne.s32.totalorder %s375, %s389
      %p391 = scmp.eq.s32.totalorder %s35, 0
      %p392 = por %p390, %p391
      %s394 = sadd.s32 %s393, 1
      %p397 = scmp.eq.s32.totalorder %s29, 1
      %p398 = scmp.ne.s32.totalorder %s393, %s395
      %p399 = scmp.eq.s32.totalorder %s29, 0
      %p400 = por %p398, %p399
      %p401 = scmp.ne.s32.totalorder %s393, %s395
      %p402 = scmp.eq.s32.totalorder %s34, 1
      %p403 = por %p401, %p402
      %p404 = scmp.ne.s32.totalorder %s395, %s396
      %p405 = scmp.eq.s32.totalorder %s34, 0
      %p406 = por %p404, %p405
      %p407 = scmp.ne.s32.totalorder %s395, %s396
      %p408 = scmp.eq.s32.totalorder %s35, 1
      %p409 = por %p407, %p408
      %p411 = scmp.ne.s32.totalorder %s396, %s410
      %p412 = scmp.eq.s32.totalorder %s35, 0
      %p413 = por %p411, %p412
      %s415 = sadd.s32 %s414, 1
      %p418 = scmp.eq.s32.totalorder %s29, 1
      %p419 = scmp.ne.s32.totalorder %s414, %s416
      %p420 = scmp.eq.s32.totalorder %s29, 0
      %p421 = por %p419, %p420
      %p422 = scmp.ne.s32.totalorder %s414, %s416
      %p423 = scmp.eq.s32.totalorder %s34, 1
      %p424 = por %p422, %p423
      %p425 = scmp.ne.s32.totalorder %s416, %s417
      %p426 = scmp.eq.s32.totalorder %s34, 0
      %p427 = por %p425, %p426
      %p428 = scmp.ne.s32.totalorder %s416, %s417
      %p429 = scmp.eq.s32.totalorder %s35, 1
      %p430 = por %p428, %p429
      %p432 = scmp.ne.s32.totalorder %s417, %s431
      %p433 = scmp.eq.s32.totalorder %s35, 0
      %p434 = por %p432, %p433
      %s436 = sadd.s32 %s435, 1
      %p439 = scmp.eq.s32.totalorder %s29, 1
      %p440 = scmp.ne.s32.totalorder %s435, %s437
      %p441 = scmp.eq.s32.totalorder %s29, 0
      %p442 = por %p440, %p441
      %p443 = scmp.ne.s32.totalorder %s435, %s437
      %p444 = scmp.eq.s32.totalorder %s34, 1
      %p445 = por %p443, %p444
      %p446 = scmp.ne.s32.totalorder %s437, %s438
      %p447 = scmp.eq.s32.totalorder %s34, 0
      %p448 = por %p446, %p447
      %p449 = scmp.ne.s32.totalorder %s437, %s438
      %p450 = scmp.eq.s32.totalorder %s35, 1
      %p451 = por %p449, %p450
      %p453 = scmp.ne.s32.totalorder %s438, %s452
      %p454 = scmp.eq.s32.totalorder %s35, 0
      %p455 = por %p453, %p454
      %s457 = sadd.s32 %s456, 1
      %p460 = scmp.eq.s32.totalorder %s29, 1
      %p461 = scmp.ne.s32.totalorder %s456, %s458
      %p462 = scmp.eq.s32.totalorder %s29, 0
      %p463 = por %p461, %p462
      %p464 = scmp.ne.s32.totalorder %s456, %s458
      %p465 = scmp.eq.s32.totalorder %s34, 1
      %p466 = por %p464, %p465
      %p467 = scmp.ne.s32.totalorder %s458, %s459
      %p468 = scmp.eq.s32.totalorder %s34, 0
      %p469 = por %p467, %p468
      %p470 = scmp.ne.s32.totalorder %s458, %s459
      %p471 = scmp.eq.s32.totalorder %s35, 1
      %p472 = por %p470, %p471
      %p474 = scmp.ne.s32.totalorder %s459, %s473
      %p475 = scmp.eq.s32.totalorder %s35, 0
      %p476 = por %p474, %p475
      %s477 = ssub.s32 %s29, %s36
      %p478 = scmp.eq.s32.totalorder %s477, 0
      %s480 = sadd.s32 %s479, 1
      %s481 = scalar_select %p478, %s479, %s480
      %p484 = pneg %p478
      %p485 = scmp.eq.s32.totalorder %s29, 1
      %p486 = por %p484, %p485
      %p487 = scmp.ne.s32.totalorder %s479, %s482
      %p488 = scmp.eq.s32.totalorder %s29, 0
      %p489 = por %p487, %p488
      %p490 = scmp.ne.s32.totalorder %s479, %s482
      %p491 = scmp.eq.s32.totalorder %s34, 1
      %p492 = por %p490, %p491
      %p493 = scmp.ne.s32.totalorder %s482, %s483
      %p494 = scmp.eq.s32.totalorder %s34, 0
      %p495 = por %p493, %p494
      %p496 = scmp.ne.s32.totalorder %s482, %s483
      %p497 = scmp.eq.s32.totalorder %s35, 1
      %p498 = por %p496, %p497
      %p500 = scmp.ne.s32.totalorder %s483, %s499
      %p501 = scmp.eq.s32.totalorder %s35, 0
      %p502 = por %p500, %p501
      %p503 = scmp.le.s32.totalorder 1, %s29
      %p504 = scmp.lt.s32.totalorder %s29, 3
      %p505 = pnand %p503, %p504
      %p506 = pneg %p505
      // Predicated region
      $region9: #{discriminator_forward.1} parent=5 // pred_check
        _
      $region10: #{discriminator_forward.1} parent=5 // pred_check_branch
        %508 = sbr.rel (%p505) target = $region12
      $region11: #{discriminator_forward.1} parent=5 // pred_region
        %s509 = ssub.s32 %s29, 1
        // Predicated region
        $region13: #{discriminator_forward.1} parent=11 // pred_check
          %p510 = pneg %p154
        $region14: #{discriminator_forward.1} parent=11 // pred_check_branch
          %512 = sbr.rel (%p510) target = $region16
        $region15: #{discriminator_forward.1} parent=11 // pred_region
          _
        $region16: #{discriminator_forward.1} parent=11 // pred_fallthru
          _
        // Predicated region
        $region17: #{discriminator_forward.1} parent=11 // pred_check
          %p513 = pneg %p175
        $region18: #{discriminator_forward.1} parent=11 // pred_check_branch
          %515 = sbr.rel (%p513) target = $region20
        $region19: #{discriminator_forward.1} parent=11 // pred_region
          _
        $region20: #{discriminator_forward.1} parent=11 // pred_fallthru
          _
        // Predicated region
        $region21: #{discriminator_forward.1} parent=11 // pred_check
          %p516 = pneg %p196
        $region22: #{discriminator_forward.1} parent=11 // pred_check_branch
          %518 = sbr.rel (%p516) target = $region24
        $region23: #{discriminator_forward.1} parent=11 // pred_region
          _
        $region24: #{discriminator_forward.1} parent=11 // pred_fallthru
          _
        // Predicated region
        $region25: #{discriminator_forward.1} parent=11 // pred_check
          %p519 = pneg %p217
        $region26: #{discriminator_forward.1} parent=11 // pred_check_branch
          %521 = sbr.rel (%p519) target = $region28
        $region27: #{discriminator_forward.1} parent=11 // pred_region
          _
        $region28: #{discriminator_forward.1} parent=11 // pred_fallthru
          _
        // Predicated region
        $region29: #{discriminator_forward.1} parent=11 // pred_check
          %p522 = pneg %p238
        $region30: #{discriminator_forward.1} parent=11 // pred_check_branch
          %524 = sbr.rel (%p522) target = $region32
        $region31: #{discriminator_forward.1} parent=11 // pred_region
          _
        $region32: #{discriminator_forward.1} parent=11 // pred_fallthru
          _
        // Predicated region
        $region33: #{discriminator_forward.1} parent=11 // pred_check
          %p525 = pneg %p259
        $region34: #{discriminator_forward.1} parent=11 // pred_check_branch
          %527 = sbr.rel (%p525) target = $region36
        $region35: #{discriminator_forward.1} parent=11 // pred_region
          _
        $region36: #{discriminator_forward.1} parent=11 // pred_fallthru
          _
        // Predicated region
        $region37: #{discriminator_forward.1} parent=11 // pred_check
          %p528 = pneg %p280
        $region38: #{discriminator_forward.1} parent=11 // pred_check_branch
          %530 = sbr.rel (%p528) target = $region40
        $region39: #{discriminator_forward.1} parent=11 // pred_region
          _
        $region40: #{discriminator_forward.1} parent=11 // pred_fallthru
          _
        // Predicated region
        $region41: #{discriminator_forward.1} parent=11 // pred_check
          %p531 = pneg %p301
        $region42: #{discriminator_forward.1} parent=11 // pred_check_branch
          %533 = sbr.rel (%p531) target = $region44
        $region43: #{discriminator_forward.1} parent=11 // pred_region
          _
        $region44: #{discriminator_forward.1} parent=11 // pred_fallthru
          _
        // Predicated region
        $region45: #{discriminator_forward.1} parent=11 // pred_check
          %p534 = pneg %p322
        $region46: #{discriminator_forward.1} parent=11 // pred_check_branch
          %536 = sbr.rel (%p534) target = $region48
        $region47: #{discriminator_forward.1} parent=11 // pred_region
          _
        $region48: #{discriminator_forward.1} parent=11 // pred_fallthru
          _
        // Predicated region
        $region49: #{discriminator_forward.1} parent=11 // pred_check
          %p537 = pneg %p343
        $region50: #{discriminator_forward.1} parent=11 // pred_check_branch
          %539 = sbr.rel (%p537) target = $region52
        $region51: #{discriminator_forward.1} parent=11 // pred_region
          _
        $region52: #{discriminator_forward.1} parent=11 // pred_fallthru
          _
        // Predicated region
        $region53: #{discriminator_forward.1} parent=11 // pred_check
          %p540 = pneg %p364
        $region54: #{discriminator_forward.1} parent=11 // pred_check_branch
          %542 = sbr.rel (%p540) target = $region56
        $region55: #{discriminator_forward.1} parent=11 // pred_region
          _
        $region56: #{discriminator_forward.1} parent=11 // pred_fallthru
          _
        // Predicated region
        $region57: #{discriminator_forward.1} parent=11 // pred_check
          %p543 = pneg %p385
        $region58: #{discriminator_forward.1} parent=11 // pred_check_branch
          %545 = sbr.rel (%p543) target = $region60
        $region59: #{discriminator_forward.1} parent=11 // pred_region
          _
        $region60: #{discriminator_forward.1} parent=11 // pred_fallthru
          _
        // Predicated region
        $region61: #{discriminator_forward.1} parent=11 // pred_check
          %p546 = pneg %p406
        $region62: #{discriminator_forward.1} parent=11 // pred_check_branch
          %548 = sbr.rel (%p546) target = $region64
        $region63: #{discriminator_forward.1} parent=11 // pred_region
          _
        $region64: #{discriminator_forward.1} parent=11 // pred_fallthru
          _
        // Predicated region
        $region65: #{discriminator_forward.1} parent=11 // pred_check
          %p549 = pneg %p427
        $region66: #{discriminator_forward.1} parent=11 // pred_check_branch
          %551 = sbr.rel (%p549) target = $region68
        $region67: #{discriminator_forward.1} parent=11 // pred_region
          _
        $region68: #{discriminator_forward.1} parent=11 // pred_fallthru
          _
        // Predicated region
        $region69: #{discriminator_forward.1} parent=11 // pred_check
          %p552 = pneg %p448
        $region70: #{discriminator_forward.1} parent=11 // pred_check_branch
          %554 = sbr.rel (%p552) target = $region72
        $region71: #{discriminator_forward.1} parent=11 // pred_region
          _
        $region72: #{discriminator_forward.1} parent=11 // pred_fallthru
          _
        // Predicated region
        $region73: #{discriminator_forward.1} parent=11 // pred_check
          %p555 = pneg %p469
        $region74: #{discriminator_forward.1} parent=11 // pred_check_branch
          %557 = sbr.rel (%p555) target = $region76
        $region75: #{discriminator_forward.1} parent=11 // pred_region
          _
        $region76: #{discriminator_forward.1} parent=11 // pred_fallthru
          _
      $region12: #{discriminator_forward.1} parent=5 // pred_fallthru
        _
      %p558 = scmp.lt.s32.totalorder %s29, 2
      // Predicated region
      $region77: #{discriminator_forward.1} parent=5 // pred_check
        %p559 = pneg %p558
      $region78: #{discriminator_forward.1} parent=5 // pred_check_branch
        %561 = sbr.rel (%p559) target = $region80
      $region79: #{discriminator_forward.1} parent=5 // pred_region
        // Predicated region
        $region81: #{discriminator_forward.1} parent=79 // pred_check
          %p562 = pneg %p49
        $region82: #{discriminator_forward.1} parent=79 // pred_check_branch
          %564 = sbr.rel (%p562) target = $region84
        $region83: #{discriminator_forward.1} parent=79 // pred_region
          %p565 = scmp.lt.s32.totalorder %s29, 1
          %s566 = scalar_select %p565, %s29, 1
          %s567 = smul.addr %s566, 8
          %s568 = scalar_lea.vmem %s0, %s567
        $region84: #{discriminator_forward.1} parent=79 // pred_fallthru
          _
        // Predicated region
        $region85: #{discriminator_forward.1} parent=79 // pred_check
          %p569 = pneg %p75
        $region86: #{discriminator_forward.1} parent=79 // pred_check_branch
          %571 = sbr.rel (%p569) target = $region88
        $region87: #{discriminator_forward.1} parent=79 // pred_region
          %p572 = scmp.lt.s32.totalorder %s29, 1
          %s573 = scalar_select %p572, %s29, 1
          %s574 = scalar_lea.vmem %s1, %s573
        $region88: #{discriminator_forward.1} parent=79 // pred_fallthru
          _
        // Predicated region
        $region89: #{discriminator_forward.1} parent=79 // pred_check
          %p575 = pneg %p101
        $region90: #{discriminator_forward.1} parent=79 // pred_check_branch
          %577 = sbr.rel (%p575) target = $region92
        $region91: #{discriminator_forward.1} parent=79 // pred_region
          %p578 = scmp.lt.s32.totalorder %s29, 1
          %s579 = scalar_select %p578, %s29, 1
          %s580 = smul.addr %s579, 8
          %s581 = scalar_lea.vmem %s2, %s580
        $region92: #{discriminator_forward.1} parent=79 // pred_fallthru
          _
        // Predicated region
        $region93: #{discriminator_forward.1} parent=79 // pred_check
          %p582 = pneg %p127
        $region94: #{discriminator_forward.1} parent=79 // pred_check_branch
          %584 = sbr.rel (%p582) target = $region96
        $region95: #{discriminator_forward.1} parent=79 // pred_region
          %p585 = scmp.lt.s32.totalorder %s29, 1
          %s586 = scalar_select %p585, %s29, 1
          %s587 = smul.addr %s586, 8
          %s588 = scalar_lea.vmem %s3, %s587
        $region96: #{discriminator_forward.1} parent=79 // pred_fallthru
          _
      $region80: #{discriminator_forward.1} parent=5 // pred_fallthru
        _
      %p589 = scmp.le.s32.totalorder 1, %s29
      %p590 = scmp.lt.s32.totalorder %s29, 3
      %p591 = pnand %p589, %p590
      %p592 = pneg %p591
      // Predicated region
      $region97: #{discriminator_forward.1} parent=5 // pred_check
        _
      $region98: #{discriminator_forward.1} parent=5 // pred_check_branch
        %594 = sbr.rel (%p591) target = $region100
      $region99: #{discriminator_forward.1} parent=5 // pred_region
        %s595 = ssub.s32 %s29, 1
        %p596 = scmp.lt.s32.totalorder %s34, 1
        %s597 = scalar_select %p596, %s34, 1
        %s598 = smul.addr %s597, 8
        %s599 = scalar_lea.vmem %s0, %s598
        %p600 = pneg %p55
        %p601 = pneg %p52
        %p602 = scmp.lt.s32.totalorder %s34, 1
        %s603 = scalar_select %p602, %s34, 1
        %s604 = scalar_lea.vmem %s1, %s603
        %p605 = pneg %p81
        %p606 = pneg %p78
        %p607 = scmp.lt.s32.totalorder %s34, 1
        %s608 = scalar_select %p607, %s34, 1
        %s609 = smul.addr %s608, 8
        %s610 = scalar_lea.vmem %s2, %s609
        %p611 = pneg %p107
        %p612 = pneg %p104
        %p613 = scmp.lt.s32.totalorder %s34, 1
        %s614 = scalar_select %p613, %s34, 1
        %s615 = smul.addr %s614, 8
        %s616 = scalar_lea.vmem %s3, %s615
        %p617 = pneg %p133
        %p618 = pneg %p130
        %p619 = pneg %p154
        %p620 = pneg %p151
        %p621 = pneg %p175
        %p622 = pneg %p172
        %p623 = pneg %p196
        %p624 = pneg %p193
        %p625 = pneg %p217
        %p626 = pneg %p214
        %p627 = pneg %p238
        %p628 = pneg %p235
        %p629 = pneg %p259
        %p630 = pneg %p256
        %p631 = pneg %p280
        %p632 = pneg %p277
        %p633 = pneg %p301
        %p634 = pneg %p298
        %p635 = pneg %p322
        %p636 = pneg %p319
        %p637 = pneg %p343
        %p638 = pneg %p340
        %p639 = pneg %p364
        %p640 = pneg %p361
        %p641 = pneg %p385
        %p642 = pneg %p382
        %p643 = pneg %p406
        %p644 = pneg %p403
        %p645 = pneg %p427
        %p646 = pneg %p424
        %p647 = pneg %p448
        %p648 = pneg %p445
        %p649 = pneg %p469
        %p650 = pneg %p466
        %p651 = pneg %p495
        %p652 = pneg %p492
        %s653 = sand.u32 %s482, 1
        %s654 = scalar_lea.sflag [#allocation3], %s653
        %s655 = sand.u32 %s482, 1
        %s656 = scalar_lea.vmem [#allocation2], %s655
        %p657 = scmp.lt.s32.totalorder %s34, 1
        %s658 = scalar_select %p657, %s34, 1
        %s659 = smul.addr %s658, 8
        %s660 = scalar_lea.vmem %s0, %s659
        %p661 = scmp.lt.s32.totalorder %s34, 1
        %s662 = scalar_select %p661, %s34, 1
        %s663 = scalar_lea.vmem %s1, %s662
        %p664 = scmp.lt.s32.totalorder %s34, 1
        %s665 = scalar_select %p664, %s34, 1
        %s666 = smul.addr %s665, 8
        %s667 = scalar_lea.vmem %s2, %s666
        %p668 = scmp.lt.s32.totalorder %s34, 1
        %s669 = scalar_select %p668, %s34, 1
        %s670 = smul.addr %s669, 8
        %s671 = scalar_lea.vmem %s3, %s670
        %v672 = vld [vmem:[%s660] sm:$0xff]
        %v673 = vld [vmem:[%s4] sm:$0x1]
        %v674 = vld [vmem:[%s5] sm:$0x1]
        %vm675 = vcmask 261120
        %v676 = vsel %vm675, %v672, 0.0
        %677 = vadd.xlane.f32.xlu0 %v676
        %v678 = vpop.xlane.xlu0 %677
        %v679 = vrcp.pop 32.0
        %v680 = vmul.f32 %v678, %v679
        %v681 = vsub.f32 %v672, %v680
        %v682 = vmul.f32 %v681, %v681
        %v683 = vsel %vm675, %v682, 0.0
        %684 = vadd.xlane.f32.xlu0 %v683
        %v685 = vpop.xlane.xlu0 %684
        %v686 = vmul.f32 %v685, %v679
        %v687 = vadd.f32 %v686, 1e-12
        %v688 = vrsqrt.pop %v687
        %v689 = vmul.f32 %v681, %v688
        %v691 = vlaneseq
        %v692 = vshrl.u32 %v691, 7
        %v693 = vsub.s32 0, %v692
        %v694 = vrot.slane %v673, %v693
        %v696 = vmul.f32 %v689, %v694
        %v698 = vlaneseq
        %v699 = vshrl.u32 %v698, 7
        %v700 = vsub.s32 0, %v699
        %v701 = vrot.slane %v674, %v700
        %v703 = vadd.f32 %v696, %v701
        %v704 = vld [vmem:[%s663] sm:$0x1]
        %v705 = vsub.f32 1.0, %v704
        %v706 = vmul.f32 %v705, -10000.0
        %v707 = vld [vmem:[%s6] sm:$0xff]
        %v708 = vld [vmem:[%s6 + $0x8] sm:$0xff]
        %v709 = vld [vmem:[%s6 + $0x10] sm:$0xff]
        %v710 = vld [vmem:[%s6 + $0x18] sm:$0xff]
        %v711 = vld [vmem:[%s7] sm:$0x1]
        %v713 = vlaneseq
        %v714 = vshrl.u32 %v713, 7
        %v715 = vsub.s32 0, %v714
        %v716 = vrot.slane %v711, %v715
        %v719 = vsel %vm675, %v703, 0
        %721 = vmatprep.subr.mxu0 0.0
        %722 = vmatpush1.msra.mxu0 0.0
        %723 = vmatprep.subr.mxu0 0.0
        %724 = vmatpush1.msra.mxu0 0.0
        %725 = vmatprep.subr.mxu0 0.0
        %726 = vmatpush1.msra.mxu0 0.0
        %727 = vmatprep.subr.mxu0 0.0
        %728 = vmatpush1.msra.mxu0 0.0
        %729 = vmatprep.subr.mxu0 0.0
        %730 = vmatpush1.msra.mxu0 0.0
        %731 = vmatprep.subr.mxu0 0.0
        %732 = vmatpush1.msra.mxu0 0.0
        %733 = vmatprep.subr.mxu0 0.0
        %734 = vmatpush1.msra.mxu0 0.0
        %735 = vmatprep.subr.mxu0 0.0
        %736 = vmatpush1.msra.mxu0 0.0
        %737 = vmatprep.subr.mxu0 0.0
        %738 = vmatpush1.msra.mxu0 0.0
        %739 = vmatprep.subr.mxu0 0.0
        %740 = vmatpush1.msra.mxu0 0.0
        %741 = vmatprep.subr.mxu0 0.0
        %742 = vmatpush1.msra.mxu0 0.0
        %743 = vmatprep.subr.mxu0 0.0
        %744 = vmatpush1.msra.mxu0 0.0
        %745 = vmatprep.subr.mxu0 0.0
        %746 = vmatpush1.msra.mxu0 %v710
        %747 = vmatprep.subr.mxu0 0.0
        %748 = vmatpush1.msra.mxu0 %v709
        %749 = vmatprep.subr.mxu0 0.0
        %750 = vmatpush1.msra.mxu0 %v708
        %751 = vmatprep.subr.mxu0 0.0
        %752 = vmatpush1.msra.mxu0 %v707
        %753 = vmatprep.subr.mxu0 0.0
        %754 = vmatpush2.msra.mxu0 0.0
        %755 = vmatprep.subr.mxu0 0.0
        %756 = vmatpush2.msra.mxu0 0.0
        %757 = vmatprep.subr.mxu0 0.0
        %758 = vmatpush2.msra.mxu0 0.0
        %759 = vmatprep.subr.mxu0 0.0
        %760 = vmatpush2.msra.mxu0 0.0
        %761 = vmatprep.subr.mxu0 0.0
        %762 = vmatpush2.msra.mxu0 0.0
        %763 = vmatprep.subr.mxu0 0.0
        %764 = vmatpush2.msra.mxu0 0.0
        %765 = vmatprep.subr.mxu0 0.0
        %766 = vmatpush2.msra.mxu0 0.0
        %767 = vmatprep.subr.mxu0 0.0
        %768 = vmatpush2.msra.mxu0 0.0
        %769 = vmatprep.subr.mxu0 0.0
        %770 = vmatpush2.msra.mxu0 0.0
        %771 = vmatprep.subr.mxu0 0.0
        %772 = vmatpush2.msra.mxu0 0.0
        %773 = vmatprep.subr.mxu0 0.0
        %774 = vmatpush2.msra.mxu0 0.0
        %775 = vmatprep.subr.mxu0 0.0
        %776 = vmatpush2.msra.mxu0 0.0
        %777 = vmatprep.subr.mxu0 0.0
        %778 = vmatpush2.msra.mxu0 0.0
        %779 = vmatprep.subr.mxu0 0.0
        %780 = vmatpush2.msra.mxu0 0.0
        %781 = vmatprep.subr.mxu0 0.0
        %782 = vmatpush2.msra.mxu0 0.0
        %783 = vmatprep.subr.mxu0 0.0
        %784 = vmatpush2.msra.mxu0 0.0
        %785 = vmatprep.mubr.f32.mxu0 0.0
        %786 = vmatmul.mubr.f32.gmra.mxu0 %v719
        %v787 = vpop.f32.mrf.mxu0
        %v788 = vadd.f32 %v716, %v787
        %v789 = vpop.f32.mrf.mxu0
        %790 = vdwg.mxu0
        %v791 = vld [vmem:[%s8] sm:$0xff]
        %v792 = vld [vmem:[%s8 + $0x8] sm:$0xff]
        %v793 = vld [vmem:[%s8 + $0x10] sm:$0xff]
        %v794 = vld [vmem:[%s8 + $0x18] sm:$0xff]
        %796 = vrot.lane.b32.xlu0 %v788, 96
        %v797 = vpop.permute.xlu0 %796
        %vm798 = vcmask 64512
        %v799 = vsel %vm798, %v788, 0
        %v801 = vsel %vm798, %v797, 0
        %803 = vmatprep.subr.mxu0 0.0
        %804 = vmatpush1.xpose.msra.mxu0 0.0
        %805 = vmatprep.subr.mxu0 0.0
        %806 = vmatpush1.xpose.msra.mxu0 0.0
        %807 = vmatprep.subr.mxu0 0.0
        %808 = vmatpush1.xpose.msra.mxu0 0.0
        %809 = vmatprep.subr.mxu0 0.0
        %810 = vmatpush1.xpose.msra.mxu0 0.0
        %811 = vmatprep.subr.mxu0 0.0
        %812 = vmatpush1.xpose.msra.mxu0 0.0
        %813 = vmatprep.subr.mxu0 0.0
        %814 = vmatpush1.xpose.msra.mxu0 0.0
        %815 = vmatprep.subr.mxu0 0.0
        %816 = vmatpush1.xpose.msra.mxu0 0.0
        %817 = vmatprep.subr.mxu0 0.0
        %818 = vmatpush1.xpose.msra.mxu0 0.0
        %819 = vmatprep.subr.mxu0 0.0
        %820 = vmatpush1.xpose.msra.mxu0 0.0
        %821 = vmatprep.subr.mxu0 0.0
        %822 = vmatpush1.xpose.msra.mxu0 0.0
        %823 = vmatprep.subr.mxu0 0.0
        %824 = vmatpush1.xpose.msra.mxu0 0.0
        %825 = vmatprep.subr.mxu0 0.0
        %826 = vmatpush1.xpose.msra.mxu0 0.0
        %827 = vmatprep.subr.mxu0 0.0
        %828 = vmatpush1.xpose.msra.mxu0 0.0
        %829 = vmatprep.subr.mxu0 0.0
        %830 = vmatpush1.xpose.msra.mxu0 0.0
        %831 = vmatprep.subr.mxu0 0.0
        %832 = vmatpush1.xpose.msra.mxu0 0.0
        %833 = vmatprep.subr.mxu0 0.0
        %834 = vmatpush1.xpose.msra.mxu0 %v801
        %835 = vmatprep.subr.mxu0 0.0
        %836 = vmatpush2.xpose.msra.mxu0 0.0
        %837 = vmatprep.subr.mxu0 0.0
        %838 = vmatpush2.xpose.msra.mxu0 0.0
        %839 = vmatprep.subr.mxu0 0.0
        %840 = vmatpush2.xpose.msra.mxu0 0.0
        %841 = vmatprep.subr.mxu0 0.0
        %842 = vmatpush2.xpose.msra.mxu0 0.0
        %843 = vmatprep.subr.mxu0 0.0
        %844 = vmatpush2.xpose.msra.mxu0 0.0
        %845 = vmatprep.subr.mxu0 0.0
        %846 = vmatpush2.xpose.msra.mxu0 0.0
        %847 = vmatprep.subr.mxu0 0.0
        %848 = vmatpush2.xpose.msra.mxu0 0.0
        %849 = vmatprep.subr.mxu0 0.0
        %850 = vmatpush2.xpose.msra.mxu0 0.0
        %851 = vmatprep.subr.mxu0 0.0
        %852 = vmatpush2.xpose.msra.mxu0 0.0
        %853 = vmatprep.subr.mxu0 0.0
        %854 = vmatpush2.xpose.msra.mxu0 0.0
        %855 = vmatprep.subr.mxu0 0.0
        %856 = vmatpush2.xpose.msra.mxu0 0.0
        %857 = vmatprep.subr.mxu0 0.0
        %858 = vmatpush2.xpose.msra.mxu0 0.0
        %859 = vmatprep.subr.mxu0 0.0
        %860 = vmatpush2.xpose.msra.mxu0 0.0
        %861 = vmatprep.subr.mxu0 0.0
        %862 = vmatpush2.xpose.msra.mxu0 0.0
        %863 = vmatprep.subr.mxu0 0.0
        %864 = vmatpush2.xpose.msra.mxu0 0.0
        %865 = vmatprep.subr.mxu0 0.0
        %866 = vmatpush2.xpose.msra.mxu0 0.0
        %867 = vmatprep.mubr.f32.mxu0 0.0
        %868 = vmatmul.mubr.f32.gmra.mxu0 %v799
        %v869 = vpop.f32.mrf.mxu0
        %v870 = vadd.f32 0.0, %v869
        %v871 = vpop.f32.mrf.mxu0
        %872 = vdwg.mxu0
        %v873 = vmul.f32 %v870, 0.35355338
        %v875 = vlaneseq
        %v876 = vshrl.u32 %v875, 7
        %v877 = vsub.s32 0, %v876
        %v878 = vrot.slane %v706, %v877
        %v880 = vadd.f32 %v873, %v878
        %v881 = vsel %vm798, %v880, -inf
        %882 = vmax.xlane.f32.xlu0 %v881
        %v883 = vpop.xlane.xlu0 %882
        %v884 = vsub.f32 %v880, %v883
        %v885 = vmul.f32 %v884, 1.442695
        %v886 = vpow.pop %v885
        %v887 = vsel %vm798, %v886, 0.0
        %888 = vadd.xlane.f32.xlu0 %v887
        %v889 = vpop.xlane.xlu0 %888
        %v890 = vrcp.pop %v889
        %v891 = vmul.f32 %v886, %v890
        %892 = vrot.lane.b32.xlu0 %v788, 64
        %v893 = vpop.permute.xlu0 %892
        %v896 = vsel %vm798, %v891, 0
        %898 = vmatprep.subr.mxu0 0.0
        %899 = vmatpush1.msra.mxu0 0.0
        %900 = vmatprep.subr.mxu0 0.0
        %901 = vmatpush1.msra.mxu0 0.0
        %902 = vmatprep.subr.mxu0 0.0
        %903 = vmatpush1.msra.mxu0 0.0
        %904 = vmatprep.subr.mxu0 0.0
        %905 = vmatpush1.msra.mxu0 0.0
        %906 = vmatprep.subr.mxu0 0.0
        %907 = vmatpush1.msra.mxu0 0.0
        %908 = vmatprep.subr.mxu0 0.0
        %909 = vmatpush1.msra.mxu0 0.0
        %910 = vmatprep.subr.mxu0 0.0
        %911 = vmatpush1.msra.mxu0 0.0
        %912 = vmatprep.subr.mxu0 0.0
        %913 = vmatpush1.msra.mxu0 0.0
        %914 = vmatprep.subr.mxu0 0.0
        %915 = vmatpush1.msra.mxu0 0.0
        %916 = vmatprep.subr.mxu0 0.0
        %917 = vmatpush1.msra.mxu0 0.0
        %918 = vmatprep.subr.mxu0 0.0
        %919 = vmatpush1.msra.mxu0 0.0
        %920 = vmatprep.subr.mxu0 0.0
        %921 = vmatpush1.msra.mxu0 0.0
        %922 = vmatprep.subr.mxu0 0.0
        %923 = vmatpush1.msra.mxu0 0.0
        %924 = vmatprep.subr.mxu0 0.0
        %925 = vmatpush1.msra.mxu0 0.0
        %926 = vmatprep.subr.mxu0 0.0
        %927 = vmatpush1.msra.mxu0 0.0
        %928 = vmatprep.subr.mxu0 0.0
        %929 = vmatpush1.msra.mxu0 %v893
        %930 = vmatprep.subr.mxu0 0.0
        %931 = vmatpush2.msra.mxu0 0.0
        %932 = vmatprep.subr.mxu0 0.0
        %933 = vmatpush2.msra.mxu0 0.0
        %934 = vmatprep.subr.mxu0 0.0
        %935 = vmatpush2.msra.mxu0 0.0
        %936 = vmatprep.subr.mxu0 0.0
        %937 = vmatpush2.msra.mxu0 0.0
        %938 = vmatprep.subr.mxu0 0.0
        %939 = vmatpush2.msra.mxu0 0.0
        %940 = vmatprep.subr.mxu0 0.0
        %941 = vmatpush2.msra.mxu0 0.0
        %942 = vmatprep.subr.mxu0 0.0
        %943 = vmatpush2.msra.mxu0 0.0
        %944 = vmatprep.subr.mxu0 0.0
        %945 = vmatpush2.msra.mxu0 0.0
        %946 = vmatprep.subr.mxu0 0.0
        %947 = vmatpush2.msra.mxu0 0.0
        %948 = vmatprep.subr.mxu0 0.0
        %949 = vmatpush2.msra.mxu0 0.0
        %950 = vmatprep.subr.mxu0 0.0
        %951 = vmatpush2.msra.mxu0 0.0
        %952 = vmatprep.subr.mxu0 0.0
        %953 = vmatpush2.msra.mxu0 0.0
        %954 = vmatprep.subr.mxu0 0.0
        %955 = vmatpush2.msra.mxu0 0.0
        %956 = vmatprep.subr.mxu0 0.0
        %957 = vmatpush2.msra.mxu0 0.0
        %958 = vmatprep.subr.mxu0 0.0
        %959 = vmatpush2.msra.mxu0 0.0
        %960 = vmatprep.subr.mxu0 0.0
        %961 = vmatpush2.msra.mxu0 0.0
        %962 = vmatprep.mubr.f32.mxu0 0.0
        %963 = vmatmul.mubr.f32.gmra.mxu0 %v896
        %v964 = vpop.f32.mrf.mxu0
        %v965 = vadd.f32 0.0, %v964
        %v966 = vpop.f32.mrf.mxu0
        %967 = vdwg.mxu0
        %968 = vrot.lane.b32.xlu0 %v788, 120
        %v969 = vpop.permute.xlu0 %968
        %970 = vrot.lane.b32.xlu0 %v788, 88
        %v971 = vpop.permute.xlu0 %970
        %v972 = vsel %vm798, %v969, 0
        %v974 = vsel %vm798, %v971, 0
        %976 = vmatprep.subr.mxu0 0.0
        %977 = vmatpush1.xpose.msra.mxu0 0.0
        %978 = vmatprep.subr.mxu0 0.0
        %979 = vmatpush1.xpose.msra.mxu0 0.0
        %980 = vmatprep.subr.mxu0 0.0
        %981 = vmatpush1.xpose.msra.mxu0 0.0
        %982 = vmatprep.subr.mxu0 0.0
        %983 = vmatpush1.xpose.msra.mxu0 0.0
        %984 = vmatprep.subr.mxu0 0.0
        %985 = vmatpush1.xpose.msra.mxu0 0.0
        %986 = vmatprep.subr.mxu0 0.0
        %987 = vmatpush1.xpose.msra.mxu0 0.0
        %988 = vmatprep.subr.mxu0 0.0
        %989 = vmatpush1.xpose.msra.mxu0 0.0
        %990 = vmatprep.subr.mxu0 0.0
        %991 = vmatpush1.xpose.msra.mxu0 0.0
        %992 = vmatprep.subr.mxu0 0.0
        %993 = vmatpush1.xpose.msra.mxu0 0.0
        %994 = vmatprep.subr.mxu0 0.0
        %995 = vmatpush1.xpose.msra.mxu0 0.0
        %996 = vmatprep.subr.mxu0 0.0
        %997 = vmatpush1.xpose.msra.mxu0 0.0
        %998 = vmatprep.subr.mxu0 0.0
        %999 = vmatpush1.xpose.msra.mxu0 0.0
        %1000 = vmatprep.subr.mxu0 0.0
        %1001 = vmatpush1.xpose.msra.mxu0 0.0
        %1002 = vmatprep.subr.mxu0 0.0
        %1003 = vmatpush1.xpose.msra.mxu0 0.0
        %1004 = vmatprep.subr.mxu0 0.0
        %1005 = vmatpush1.xpose.msra.mxu0 0.0
        %1006 = vmatprep.subr.mxu0 0.0
        %1007 = vmatpush1.xpose.msra.mxu0 %v974
        %1008 = vmatprep.subr.mxu0 0.0
        %1009 = vmatpush2.xpose.msra.mxu0 0.0
        %1010 = vmatprep.subr.mxu0 0.0
        %1011 = vmatpush2.xpose.msra.mxu0 0.0
        %1012 = vmatprep.subr.mxu0 0.0
        %1013 = vmatpush2.xpose.msra.mxu0 0.0
        %1014 = vmatprep.subr.mxu0 0.0
        %1015 = vmatpush2.xpose.msra.mxu0 0.0
        %1016 = vmatprep.subr.mxu0 0.0
        %1017 = vmatpush2.xpose.msra.mxu0 0.0
        %1018 = vmatprep.subr.mxu0 0.0
        %1019 = vmatpush2.xpose.msra.mxu0 0.0
        %1020 = vmatprep.subr.mxu0 0.0
        %1021 = vmatpush2.xpose.msra.mxu0 0.0
        %1022 = vmatprep.subr.mxu0 0.0
        %1023 = vmatpush2.xpose.msra.mxu0 0.0
        %1024 = vmatprep.subr.mxu0 0.0
        %1025 = vmatpush2.xpose.msra.mxu0 0.0
        %1026 = vmatprep.subr.mxu0 0.0
        %1027 = vmatpush2.xpose.msra.mxu0 0.0
        %1028 = vmatprep.subr.mxu0 0.0
        %1029 = vmatpush2.xpose.msra.mxu0 0.0
        %1030 = vmatprep.subr.mxu0 0.0
        %1031 = vmatpush2.xpose.msra.mxu0 0.0
        %1032 = vmatprep.subr.mxu0 0.0
        %1033 = vmatpush2.xpose.msra.mxu0 0.0
        %1034 = vmatprep.subr.mxu0 0.0
        %1035 = vmatpush2.xpose.msra.mxu0 0.0
        %1036 = vmatprep.subr.mxu0 0.0
        %1037 = vmatpush2.xpose.msra.mxu0 0.0
        %1038 = vmatprep.subr.mxu0 0.0
        %1039 = vmatpush2.xpose.msra.mxu0 0.0
        %1040 = vmatprep.mubr.f32.mxu0 0.0
        %1041 = vmatmul.mubr.f32.gmra.mxu0 %v972
        %v1042 = vpop.f32.mrf.mxu0
        %v1043 = vadd.f32 0.0, %v1042
        %v1044 = vpop.f32.mrf.mxu0
        %1045 = vdwg.mxu0
        %v1046 = vmul.f32 %v1043, 0.35355338
        %v1047 = vadd.f32 %v1046, %v878
        %v1048 = vsel %vm798, %v1047, -inf
        %1049 = vmax.xlane.f32.xlu0 %v1048
        %v1050 = vpop.xlane.xlu0 %1049
        %v1051 = vsub.f32 %v1047, %v1050
        %v1052 = vmul.f32 %v1051, 1.442695
        %v1053 = vpow.pop %v1052
        %v1054 = vsel %vm798, %v1053, 0.0
        %1055 = vadd.xlane.f32.xlu0 %v1054
        %v1056 = vpop.xlane.xlu0 %1055
        %v1057 = vrcp.pop %v1056
        %v1058 = vmul.f32 %v1053, %v1057
        %1059 = vrot.lane.b32.xlu0 %v788, 56
        %v1060 = vpop.permute.xlu0 %1059
        %v1063 = vsel %vm798, %v1058, 0
        %1065 = vmatprep.subr.mxu0 0.0
        %1066 = vmatpush1.msra.mxu0 0.0
        %1067 = vmatprep.subr.mxu0 0.0
        %1068 = vmatpush1.msra.mxu0 0.0
        %1069 = vmatprep.subr.mxu0 0.0
        %1070 = vmatpush1.msra.mxu0 0.0
        %1071 = vmatprep.subr.mxu0 0.0
        %1072 = vmatpush1.msra.mxu0 0.0
        %1073 = vmatprep.subr.mxu0 0.0
        %1074 = vmatpush1.msra.mxu0 0.0
        %1075 = vmatprep.subr.mxu0 0.0
        %1076 = vmatpush1.msra.mxu0 0.0
        %1077 = vmatprep.subr.mxu0 0.0
        %1078 = vmatpush1.msra.mxu0 0.0
        %1079 = vmatprep.subr.mxu0 0.0
        %1080 = vmatpush1.msra.mxu0 0.0
        %1081 = vmatprep.subr.mxu0 0.0
        %1082 = vmatpush1.msra.mxu0 0.0
        %1083 = vmatprep.subr.mxu0 0.0
        %1084 = vmatpush1.msra.mxu0 0.0
        %1085 = vmatprep.subr.mxu0 0.0
        %1086 = vmatpush1.msra.mxu0 0.0
        %1087 = vmatprep.subr.mxu0 0.0
        %1088 = vmatpush1.msra.mxu0 0.0
        %1089 = vmatprep.subr.mxu0 0.0
        %1090 = vmatpush1.msra.mxu0 0.0
        %1091 = vmatprep.subr.mxu0 0.0
        %1092 = vmatpush1.msra.mxu0 0.0
        %1093 = vmatprep.subr.mxu0 0.0
        %1094 = vmatpush1.msra.mxu0 0.0
        %1095 = vmatprep.subr.mxu0 0.0
        %1096 = vmatpush1.msra.mxu0 %v1060
        %1097 = vmatprep.subr.mxu0 0.0
        %1098 = vmatpush2.msra.mxu0 0.0
        %1099 = vmatprep.subr.mxu0 0.0
        %1100 = vmatpush2.msra.mxu0 0.0
        %1101 = vmatprep.subr.mxu0 0.0
        %1102 = vmatpush2.msra.mxu0 0.0
        %1103 = vmatprep.subr.mxu0 0.0
        %1104 = vmatpush2.msra.mxu0 0.0
        %1105 = vmatprep.subr.mxu0 0.0
        %1106 = vmatpush2.msra.mxu0 0.0
        %1107 = vmatprep.subr.mxu0 0.0
        %1108 = vmatpush2.msra.mxu0 0.0
        %1109 = vmatprep.subr.mxu0 0.0
        %1110 = vmatpush2.msra.mxu0 0.0
        %1111 = vmatprep.subr.mxu0 0.0
        %1112 = vmatpush2.msra.mxu0 0.0
        %1113 = vmatprep.subr.mxu0 0.0
        %1114 = vmatpush2.msra.mxu0 0.0
        %1115 = vmatprep.subr.mxu0 0.0
        %1116 = vmatpush2.msra.mxu0 0.0
        %1117 = vmatprep.subr.mxu0 0.0
        %1118 = vmatpush2.msra.mxu0 0.0
        %1119 = vmatprep.subr.mxu0 0.0
        %1120 = vmatpush2.msra.mxu0 0.0
        %1121 = vmatprep.subr.mxu0 0.0
        %1122 = vmatpush2.msra.mxu0 0.0
        %1123 = vmatprep.subr.mxu0 0.0
        %1124 = vmatpush2.msra.mxu0 0.0
        %1125 = vmatprep.subr.mxu0 0.0
        %1126 = vmatpush2.msra.mxu0 0.0
        %1127 = vmatprep.subr.mxu0 0.0
        %1128 = vmatpush2.msra.mxu0 0.0
        %1129 = vmatprep.mubr.f32.mxu0 0.0
        %1130 = vmatmul.mubr.f32.gmra.mxu0 %v1063
        %v1131 = vpop.f32.mrf.mxu0
        %v1132 = vadd.f32 0.0, %v1131
        %v1133 = vpop.f32.mrf.mxu0
        %1134 = vdwg.mxu0
        %v1136 = vsel %vm798, %v1132, 0
        %1138 = vmatprep.subr.mxu0 0.0
        %1139 = vmatpush1.msra.mxu0 0.0
        %1140 = vmatprep.subr.mxu0 0.0
        %1141 = vmatpush1.msra.mxu0 0.0
        %1142 = vmatprep.subr.mxu0 0.0
        %1143 = vmatpush1.msra.mxu0 0.0
        %1144 = vmatprep.subr.mxu0 0.0
        %1145 = vmatpush1.msra.mxu0 0.0
        %1146 = vmatprep.subr.mxu0 0.0
        %1147 = vmatpush1.msra.mxu0 0.0
        %1148 = vmatprep.subr.mxu0 0.0
        %1149 = vmatpush1.msra.mxu0 0.0
        %1150 = vmatprep.subr.mxu0 0.0
        %1151 = vmatpush1.msra.mxu0 0.0
        %1152 = vmatprep.subr.mxu0 0.0
        %1153 = vmatpush1.msra.mxu0 0.0
        %1154 = vmatprep.subr.mxu0 0.0
        %1155 = vmatpush1.msra.mxu0 0.0
        %1156 = vmatprep.subr.mxu0 0.0
        %1157 = vmatpush1.msra.mxu0 0.0
        %1158 = vmatprep.subr.mxu0 0.0
        %1159 = vmatpush1.msra.mxu0 0.0
        %1160 = vmatprep.subr.mxu0 0.0
        %1161 = vmatpush1.msra.mxu0 0.0
        %1162 = vmatprep.subr.mxu0 0.0
        %1163 = vmatpush1.msra.mxu0 0.0
        %1164 = vmatprep.subr.mxu0 0.0
        %1165 = vmatpush1.msra.mxu0 0.0
        %1166 = vmatprep.subr.mxu0 0.0
        %1167 = vmatpush1.msra.mxu0 0.0
        %1168 = vmatprep.subr.mxu0 0.0
        %1169 = vmatpush1.msra.mxu0 %v792
        %1170 = vmatprep.subr.mxu0 0.0
        %1171 = vmatpush2.msra.mxu0 0.0
        %1172 = vmatprep.subr.mxu0 0.0
        %1173 = vmatpush2.msra.mxu0 0.0
        %1174 = vmatprep.subr.mxu0 0.0
        %1175 = vmatpush2.msra.mxu0 0.0
        %1176 = vmatprep.subr.mxu0 0.0
        %1177 = vmatpush2.msra.mxu0 0.0
        %1178 = vmatprep.subr.mxu0 0.0
        %1179 = vmatpush2.msra.mxu0 0.0
        %1180 = vmatprep.subr.mxu0 0.0
        %1181 = vmatpush2.msra.mxu0 0.0
        %1182 = vmatprep.subr.mxu0 0.0
        %1183 = vmatpush2.msra.mxu0 0.0
        %1184 = vmatprep.subr.mxu0 0.0
        %1185 = vmatpush2.msra.mxu0 0.0
        %1186 = vmatprep.subr.mxu0 0.0
        %1187 = vmatpush2.msra.mxu0 0.0
        %1188 = vmatprep.subr.mxu0 0.0
        %1189 = vmatpush2.msra.mxu0 0.0
        %1190 = vmatprep.subr.mxu0 0.0
        %1191 = vmatpush2.msra.mxu0 0.0
        %1192 = vmatprep.subr.mxu0 0.0
        %1193 = vmatpush2.msra.mxu0 0.0
        %1194 = vmatprep.subr.mxu0 0.0
        %1195 = vmatpush2.msra.mxu0 0.0
        %1196 = vmatprep.subr.mxu0 0.0
        %1197 = vmatpush2.msra.mxu0 0.0
        %1198 = vmatprep.subr.mxu0 0.0
        %1199 = vmatpush2.msra.mxu0 0.0
        %1200 = vmatprep.subr.mxu0 0.0
        %1201 = vmatpush2.msra.mxu0 0.0
        %1202 = vmatprep.mubr.f32.mxu0 0.0
        %1203 = vmatmul.mubr.f32.gmra.mxu0 %v1136
        %v1204 = vpop.f32.mrf.mxu0
        %v1205 = vadd.f32 0.0, %v1204
        %v1206 = vpop.f32.mrf.mxu0
        %1207 = vdwg.mxu0
        %v1209 = vsel %vm798, %v965, 0
        %1211 = vmatprep.subr.mxu0 0.0
        %1212 = vmatpush1.msra.mxu0 0.0
        %1213 = vmatprep.subr.mxu0 0.0
        %1214 = vmatpush1.msra.mxu0 0.0
        %1215 = vmatprep.subr.mxu0 0.0
        %1216 = vmatpush1.msra.mxu0 0.0
        %1217 = vmatprep.subr.mxu0 0.0
        %1218 = vmatpush1.msra.mxu0 0.0
        %1219 = vmatprep.subr.mxu0 0.0
        %1220 = vmatpush1.msra.mxu0 0.0
        %1221 = vmatprep.subr.mxu0 0.0
        %1222 = vmatpush1.msra.mxu0 0.0
        %1223 = vmatprep.subr.mxu0 0.0
        %1224 = vmatpush1.msra.mxu0 0.0
        %1225 = vmatprep.subr.mxu0 0.0
        %1226 = vmatpush1.msra.mxu0 0.0
        %1227 = vmatprep.subr.mxu0 0.0
        %1228 = vmatpush1.msra.mxu0 0.0
        %1229 = vmatprep.subr.mxu0 0.0
        %1230 = vmatpush1.msra.mxu0 0.0
        %1231 = vmatprep.subr.mxu0 0.0
        %1232 = vmatpush1.msra.mxu0 0.0
        %1233 = vmatprep.subr.mxu0 0.0
        %1234 = vmatpush1.msra.mxu0 0.0
        %1235 = vmatprep.subr.mxu0 0.0
        %1236 = vmatpush1.msra.mxu0 0.0
        %1237 = vmatprep.subr.mxu0 0.0
        %1238 = vmatpush1.msra.mxu0 0.0
        %1239 = vmatprep.subr.mxu0 0.0
        %1240 = vmatpush1.msra.mxu0 0.0
        %1241 = vmatprep.subr.mxu0 0.0
        %1242 = vmatpush1.msra.mxu0 %v791
        %1243 = vmatprep.subr.mxu0 0.0
        %1244 = vmatpush2.msra.mxu0 0.0
        %1245 = vmatprep.subr.mxu0 0.0
        %1246 = vmatpush2.msra.mxu0 0.0
        %1247 = vmatprep.subr.mxu0 0.0
        %1248 = vmatpush2.msra.mxu0 0.0
        %1249 = vmatprep.subr.mxu0 0.0
        %1250 = vmatpush2.msra.mxu0 0.0
        %1251 = vmatprep.subr.mxu0 0.0
        %1252 = vmatpush2.msra.mxu0 0.0
        %1253 = vmatprep.subr.mxu0 0.0
        %1254 = vmatpush2.msra.mxu0 0.0
        %1255 = vmatprep.subr.mxu0 0.0
        %1256 = vmatpush2.msra.mxu0 0.0
        %1257 = vmatprep.subr.mxu0 0.0
        %1258 = vmatpush2.msra.mxu0 0.0
        %1259 = vmatprep.subr.mxu0 0.0
        %1260 = vmatpush2.msra.mxu0 0.0
        %1261 = vmatprep.subr.mxu0 0.0
        %1262 = vmatpush2.msra.mxu0 0.0
        %1263 = vmatprep.subr.mxu0 0.0
        %1264 = vmatpush2.msra.mxu0 0.0
        %1265 = vmatprep.subr.mxu0 0.0
        %1266 = vmatpush2.msra.mxu0 0.0
        %1267 = vmatprep.subr.mxu0 0.0
        %1268 = vmatpush2.msra.mxu0 0.0
        %1269 = vmatprep.subr.mxu0 0.0
        %1270 = vmatpush2.msra.mxu0 0.0
        %1271 = vmatprep.subr.mxu0 0.0
        %1272 = vmatpush2.msra.mxu0 0.0
        %1273 = vmatprep.subr.mxu0 0.0
        %1274 = vmatpush2.msra.mxu0 0.0
        %1275 = vmatprep.mubr.f32.mxu0 0.0
        %1276 = vmatmul.mubr.f32.gmra.mxu0 %v1209
        %v1277 = vpop.f32.mrf.mxu0
        %v1278 = vadd.f32 %v1205, %v1277
        %v1279 = vpop.f32.mrf.mxu0
        %1280 = vdwg.mxu0
        %1281 = vrot.lane.b32.xlu0 %v788, 112
        %v1282 = vpop.permute.xlu0 %1281
        %1283 = vrot.lane.b32.xlu0 %v788, 80
        %v1284 = vpop.permute.xlu0 %1283
        %v1285 = vsel %vm798, %v1282, 0
        %v1287 = vsel %vm798, %v1284, 0
        %1289 = vmatprep.subr.mxu0 0.0
        %1290 = vmatpush1.xpose.msra.mxu0 0.0
        %1291 = vmatprep.subr.mxu0 0.0
        %1292 = vmatpush1.xpose.msra.mxu0 0.0
        %1293 = vmatprep.subr.mxu0 0.0
        %1294 = vmatpush1.xpose.msra.mxu0 0.0
        %1295 = vmatprep.subr.mxu0 0.0
        %1296 = vmatpush1.xpose.msra.mxu0 0.0
        %1297 = vmatprep.subr.mxu0 0.0
        %1298 = vmatpush1.xpose.msra.mxu0 0.0
        %1299 = vmatprep.subr.mxu0 0.0
        %1300 = vmatpush1.xpose.msra.mxu0 0.0
        %1301 = vmatprep.subr.mxu0 0.0
        %1302 = vmatpush1.xpose.msra.mxu0 0.0
        %1303 = vmatprep.subr.mxu0 0.0
        %1304 = vmatpush1.xpose.msra.mxu0 0.0
        %1305 = vmatprep.subr.mxu0 0.0
        %1306 = vmatpush1.xpose.msra.mxu0 0.0
        %1307 = vmatprep.subr.mxu0 0.0
        %1308 = vmatpush1.xpose.msra.mxu0 0.0
        %1309 = vmatprep.subr.mxu0 0.0
        %1310 = vmatpush1.xpose.msra.mxu0 0.0
        %1311 = vmatprep.subr.mxu0 0.0
        %1312 = vmatpush1.xpose.msra.mxu0 0.0
        %1313 = vmatprep.subr.mxu0 0.0
        %1314 = vmatpush1.xpose.msra.mxu0 0.0
        %1315 = vmatprep.subr.mxu0 0.0
        %1316 = vmatpush1.xpose.msra.mxu0 0.0
        %1317 = vmatprep.subr.mxu0 0.0
        %1318 = vmatpush1.xpose.msra.mxu0 0.0
        %1319 = vmatprep.subr.mxu0 0.0
        %1320 = vmatpush1.xpose.msra.mxu0 %v1287
        %1321 = vmatprep.subr.mxu0 0.0
        %1322 = vmatpush2.xpose.msra.mxu0 0.0
        %1323 = vmatprep.subr.mxu0 0.0
        %1324 = vmatpush2.xpose.msra.mxu0 0.0
        %1325 = vmatprep.subr.mxu0 0.0
        %1326 = vmatpush2.xpose.msra.mxu0 0.0
        %1327 = vmatprep.subr.mxu0 0.0
        %1328 = vmatpush2.xpose.msra.mxu0 0.0
        %1329 = vmatprep.subr.mxu0 0.0
        %1330 = vmatpush2.xpose.msra.mxu0 0.0
        %1331 = vmatprep.subr.mxu0 0.0
        %1332 = vmatpush2.xpose.msra.mxu0 0.0
        %1333 = vmatprep.subr.mxu0 0.0
        %1334 = vmatpush2.xpose.msra.mxu0 0.0
        %1335 = vmatprep.subr.mxu0 0.0
        %1336 = vmatpush2.xpose.msra.mxu0 0.0
        %1337 = vmatprep.subr.mxu0 0.0
        %1338 = vmatpush2.xpose.msra.mxu0 0.0
        %1339 = vmatprep.subr.mxu0 0.0
        %1340 = vmatpush2.xpose.msra.mxu0 0.0
        %1341 = vmatprep.subr.mxu0 0.0
        %1342 = vmatpush2.xpose.msra.mxu0 0.0
        %1343 = vmatprep.subr.mxu0 0.0
        %1344 = vmatpush2.xpose.msra.mxu0 0.0
        %1345 = vmatprep.subr.mxu0 0.0
        %1346 = vmatpush2.xpose.msra.mxu0 0.0
        %1347 = vmatprep.subr.mxu0 0.0
        %1348 = vmatpush2.xpose.msra.mxu0 0.0
        %1349 = vmatprep.subr.mxu0 0.0
        %1350 = vmatpush2.xpose.msra.mxu0 0.0
        %1351 = vmatprep.subr.mxu0 0.0
        %1352 = vmatpush2.xpose.msra.mxu0 0.0
        %1353 = vmatprep.mubr.f32.mxu0 0.0
        %1354 = vmatmul.mubr.f32.gmra.mxu0 %v1285
        %v1355 = vpop.f32.mrf.mxu0
        %v1356 = vadd.f32 0.0, %v1355
        %v1357 = vpop.f32.mrf.mxu0
        %1358 = vdwg.mxu0
        %v1359 = vmul.f32 %v1356, 0.35355338
        %v1360 = vadd.f32 %v1359, %v878
        %v1361 = vsel %vm798, %v1360, -inf
        %1362 = vmax.xlane.f32.xlu0 %v1361
        %v1363 = vpop.xlane.xlu0 %1362
        %v1364 = vsub.f32 %v1360, %v1363
        %v1365 = vmul.f32 %v1364, 1.442695
        %v1366 = vpow.pop %v1365
        %v1367 = vsel %vm798, %v1366, 0.0
        %1368 = vadd.xlane.f32.xlu0 %v1367
        %v1369 = vpop.xlane.xlu0 %1368
        %v1370 = vrcp.pop %v1369
        %v1371 = vmul.f32 %v1366, %v1370
        %1372 = vrot.lane.b32.xlu0 %v788, 48
        %v1373 = vpop.permute.xlu0 %1372
        %v1376 = vsel %vm798, %v1371, 0
        %1378 = vmatprep.subr.mxu0 0.0
        %1379 = vmatpush1.msra.mxu0 0.0
        %1380 = vmatprep.subr.mxu0 0.0
        %1381 = vmatpush1.msra.mxu0 0.0
        %1382 = vmatprep.subr.mxu0 0.0
        %1383 = vmatpush1.msra.mxu0 0.0
        %1384 = vmatprep.subr.mxu0 0.0
        %1385 = vmatpush1.msra.mxu0 0.0
        %1386 = vmatprep.subr.mxu0 0.0
        %1387 = vmatpush1.msra.mxu0 0.0
        %1388 = vmatprep.subr.mxu0 0.0
        %1389 = vmatpush1.msra.mxu0 0.0
        %1390 = vmatprep.subr.mxu0 0.0
        %1391 = vmatpush1.msra.mxu0 0.0
        %1392 = vmatprep.subr.mxu0 0.0
        %1393 = vmatpush1.msra.mxu0 0.0
        %1394 = vmatprep.subr.mxu0 0.0
        %1395 = vmatpush1.msra.mxu0 0.0
        %1396 = vmatprep.subr.mxu0 0.0
        %1397 = vmatpush1.msra.mxu0 0.0
        %1398 = vmatprep.subr.mxu0 0.0
        %1399 = vmatpush1.msra.mxu0 0.0
        %1400 = vmatprep.subr.mxu0 0.0
        %1401 = vmatpush1.msra.mxu0 0.0
        %1402 = vmatprep.subr.mxu0 0.0
        %1403 = vmatpush1.msra.mxu0 0.0
        %1404 = vmatprep.subr.mxu0 0.0
        %1405 = vmatpush1.msra.mxu0 0.0
        %1406 = vmatprep.subr.mxu0 0.0
        %1407 = vmatpush1.msra.mxu0 0.0
        %1408 = vmatprep.subr.mxu0 0.0
        %1409 = vmatpush1.msra.mxu0 %v1373
        %1410 = vmatprep.subr.mxu0 0.0
        %1411 = vmatpush2.msra.mxu0 0.0
        %1412 = vmatprep.subr.mxu0 0.0
        %1413 = vmatpush2.msra.mxu0 0.0
        %1414 = vmatprep.subr.mxu0 0.0
        %1415 = vmatpush2.msra.mxu0 0.0
        %1416 = vmatprep.subr.mxu0 0.0
        %1417 = vmatpush2.msra.mxu0 0.0
        %1418 = vmatprep.subr.mxu0 0.0
        %1419 = vmatpush2.msra.mxu0 0.0
        %1420 = vmatprep.subr.mxu0 0.0
        %1421 = vmatpush2.msra.mxu0 0.0
        %1422 = vmatprep.subr.mxu0 0.0
        %1423 = vmatpush2.msra.mxu0 0.0
        %1424 = vmatprep.subr.mxu0 0.0
        %1425 = vmatpush2.msra.mxu0 0.0
        %1426 = vmatprep.subr.mxu0 0.0
        %1427 = vmatpush2.msra.mxu0 0.0
        %1428 = vmatprep.subr.mxu0 0.0
        %1429 = vmatpush2.msra.mxu0 0.0
        %1430 = vmatprep.subr.mxu0 0.0
        %1431 = vmatpush2.msra.mxu0 0.0
        %1432 = vmatprep.subr.mxu0 0.0
        %1433 = vmatpush2.msra.mxu0 0.0
        %1434 = vmatprep.subr.mxu0 0.0
        %1435 = vmatpush2.msra.mxu0 0.0
        %1436 = vmatprep.subr.mxu0 0.0
        %1437 = vmatpush2.msra.mxu0 0.0
        %1438 = vmatprep.subr.mxu0 0.0
        %1439 = vmatpush2.msra.mxu0 0.0
        %1440 = vmatprep.subr.mxu0 0.0
        %1441 = vmatpush2.msra.mxu0 0.0
        %1442 = vmatprep.mubr.f32.mxu0 0.0
        %1443 = vmatmul.mubr.f32.gmra.mxu0 %v1376
        %v1444 = vpop.f32.mrf.mxu0
        %v1445 = vadd.f32 0.0, %v1444
        %v1446 = vpop.f32.mrf.mxu0
        %1447 = vdwg.mxu0
        %v1449 = vsel %vm798, %v1445, 0
        %1451 = vmatprep.subr.mxu0 0.0
        %1452 = vmatpush1.msra.mxu0 0.0
        %1453 = vmatprep.subr.mxu0 0.0
        %1454 = vmatpush1.msra.mxu0 0.0
        %1455 = vmatprep.subr.mxu0 0.0
        %1456 = vmatpush1.msra.mxu0 0.0
        %1457 = vmatprep.subr.mxu0 0.0
        %1458 = vmatpush1.msra.mxu0 0.0
        %1459 = vmatprep.subr.mxu0 0.0
        %1460 = vmatpush1.msra.mxu0 0.0
        %1461 = vmatprep.subr.mxu0 0.0
        %1462 = vmatpush1.msra.mxu0 0.0
        %1463 = vmatprep.subr.mxu0 0.0
        %1464 = vmatpush1.msra.mxu0 0.0
        %1465 = vmatprep.subr.mxu0 0.0
        %1466 = vmatpush1.msra.mxu0 0.0
        %1467 = vmatprep.subr.mxu0 0.0
        %1468 = vmatpush1.msra.mxu0 0.0
        %1469 = vmatprep.subr.mxu0 0.0
        %1470 = vmatpush1.msra.mxu0 0.0
        %1471 = vmatprep.subr.mxu0 0.0
        %1472 = vmatpush1.msra.mxu0 0.0
        %1473 = vmatprep.subr.mxu0 0.0
        %1474 = vmatpush1.msra.mxu0 0.0
        %1475 = vmatprep.subr.mxu0 0.0
        %1476 = vmatpush1.msra.mxu0 0.0
        %1477 = vmatprep.subr.mxu0 0.0
        %1478 = vmatpush1.msra.mxu0 0.0
        %1479 = vmatprep.subr.mxu0 0.0
        %1480 = vmatpush1.msra.mxu0 0.0
        %1481 = vmatprep.subr.mxu0 0.0
        %1482 = vmatpush1.msra.mxu0 %v793
        %1483 = vmatprep.subr.mxu0 0.0
        %1484 = vmatpush2.msra.mxu0 0.0
        %1485 = vmatprep.subr.mxu0 0.0
        %1486 = vmatpush2.msra.mxu0 0.0
        %1487 = vmatprep.subr.mxu0 0.0
        %1488 = vmatpush2.msra.mxu0 0.0
        %1489 = vmatprep.subr.mxu0 0.0
        %1490 = vmatpush2.msra.mxu0 0.0
        %1491 = vmatprep.subr.mxu0 0.0
        %1492 = vmatpush2.msra.mxu0 0.0
        %1493 = vmatprep.subr.mxu0 0.0
        %1494 = vmatpush2.msra.mxu0 0.0
        %1495 = vmatprep.subr.mxu0 0.0
        %1496 = vmatpush2.msra.mxu0 0.0
        %1497 = vmatprep.subr.mxu0 0.0
        %1498 = vmatpush2.msra.mxu0 0.0
        %1499 = vmatprep.subr.mxu0 0.0
        %1500 = vmatpush2.msra.mxu0 0.0
        %1501 = vmatprep.subr.mxu0 0.0
        %1502 = vmatpush2.msra.mxu0 0.0
        %1503 = vmatprep.subr.mxu0 0.0
        %1504 = vmatpush2.msra.mxu0 0.0
        %1505 = vmatprep.subr.mxu0 0.0
        %1506 = vmatpush2.msra.mxu0 0.0
        %1507 = vmatprep.subr.mxu0 0.0
        %1508 = vmatpush2.msra.mxu0 0.0
        %1509 = vmatprep.subr.mxu0 0.0
        %1510 = vmatpush2.msra.mxu0 0.0
        %1511 = vmatprep.subr.mxu0 0.0
        %1512 = vmatpush2.msra.mxu0 0.0
        %1513 = vmatprep.subr.mxu0 0.0
        %1514 = vmatpush2.msra.mxu0 0.0
        %1515 = vmatprep.mubr.f32.mxu0 0.0
        %1516 = vmatmul.mubr.f32.gmra.mxu0 %v1449
        %v1517 = vpop.f32.mrf.mxu0
        %v1518 = vadd.f32 0.0, %v1517
        %v1519 = vpop.f32.mrf.mxu0
        %1520 = vdwg.mxu0
        %v1521 = vadd.f32 %v1278, %v1518
        %1522 = vrot.lane.b32.xlu0 %v788, 104
        %v1523 = vpop.permute.xlu0 %1522
        %1524 = vrot.lane.b32.xlu0 %v788, 72
        %v1525 = vpop.permute.xlu0 %1524
        %v1526 = vsel %vm798, %v1523, 0
        %v1528 = vsel %vm798, %v1525, 0
        %1530 = vmatprep.subr.mxu0 0.0
        %1531 = vmatpush1.xpose.msra.mxu0 0.0
        %1532 = vmatprep.subr.mxu0 0.0
        %1533 = vmatpush1.xpose.msra.mxu0 0.0
        %1534 = vmatprep.subr.mxu0 0.0
        %1535 = vmatpush1.xpose.msra.mxu0 0.0
        %1536 = vmatprep.subr.mxu0 0.0
        %1537 = vmatpush1.xpose.msra.mxu0 0.0
        %1538 = vmatprep.subr.mxu0 0.0
        %1539 = vmatpush1.xpose.msra.mxu0 0.0
        %1540 = vmatprep.subr.mxu0 0.0
        %1541 = vmatpush1.xpose.msra.mxu0 0.0
        %1542 = vmatprep.subr.mxu0 0.0
        %1543 = vmatpush1.xpose.msra.mxu0 0.0
        %1544 = vmatprep.subr.mxu0 0.0
        %1545 = vmatpush1.xpose.msra.mxu0 0.0
        %1546 = vmatprep.subr.mxu0 0.0
        %1547 = vmatpush1.xpose.msra.mxu0 0.0
        %1548 = vmatprep.subr.mxu0 0.0
        %1549 = vmatpush1.xpose.msra.mxu0 0.0
        %1550 = vmatprep.subr.mxu0 0.0
        %1551 = vmatpush1.xpose.msra.mxu0 0.0
        %1552 = vmatprep.subr.mxu0 0.0
        %1553 = vmatpush1.xpose.msra.mxu0 0.0
        %1554 = vmatprep.subr.mxu0 0.0
        %1555 = vmatpush1.xpose.msra.mxu0 0.0
        %1556 = vmatprep.subr.mxu0 0.0
        %1557 = vmatpush1.xpose.msra.mxu0 0.0
        %1558 = vmatprep.subr.mxu0 0.0
        %1559 = vmatpush1.xpose.msra.mxu0 0.0
        %1560 = vmatprep.subr.mxu0 0.0
        %1561 = vmatpush1.xpose.msra.mxu0 %v1528
        %1562 = vmatprep.subr.mxu0 0.0
        %1563 = vmatpush2.xpose.msra.mxu0 0.0
        %1564 = vmatprep.subr.mxu0 0.0
        %1565 = vmatpush2.xpose.msra.mxu0 0.0
        %1566 = vmatprep.subr.mxu0 0.0
        %1567 = vmatpush2.xpose.msra.mxu0 0.0
        %1568 = vmatprep.subr.mxu0 0.0
        %1569 = vmatpush2.xpose.msra.mxu0 0.0
        %1570 = vmatprep.subr.mxu0 0.0
        %1571 = vmatpush2.xpose.msra.mxu0 0.0
        %1572 = vmatprep.subr.mxu0 0.0
        %1573 = vmatpush2.xpose.msra.mxu0 0.0
        %1574 = vmatprep.subr.mxu0 0.0
        %1575 = vmatpush2.xpose.msra.mxu0 0.0
        %1576 = vmatprep.subr.mxu0 0.0
        %1577 = vmatpush2.xpose.msra.mxu0 0.0
        %1578 = vmatprep.subr.mxu0 0.0
        %1579 = vmatpush2.xpose.msra.mxu0 0.0
        %1580 = vmatprep.subr.mxu0 0.0
        %1581 = vmatpush2.xpose.msra.mxu0 0.0
        %1582 = vmatprep.subr.mxu0 0.0
        %1583 = vmatpush2.xpose.msra.mxu0 0.0
        %1584 = vmatprep.subr.mxu0 0.0
        %1585 = vmatpush2.xpose.msra.mxu0 0.0
        %1586 = vmatprep.subr.mxu0 0.0
        %1587 = vmatpush2.xpose.msra.mxu0 0.0
        %1588 = vmatprep.subr.mxu0 0.0
        %1589 = vmatpush2.xpose.msra.mxu0 0.0
        %1590 = vmatprep.subr.mxu0 0.0
        %1591 = vmatpush2.xpose.msra.mxu0 0.0
        %1592 = vmatprep.subr.mxu0 0.0
        %1593 = vmatpush2.xpose.msra.mxu0 0.0
        %1594 = vmatprep.mubr.f32.mxu0 0.0
        %1595 = vmatmul.mubr.f32.gmra.mxu0 %v1526
        %v1596 = vpop.f32.mrf.mxu0
        %v1597 = vadd.f32 0.0, %v1596
        %v1598 = vpop.f32.mrf.mxu0
        %1599 = vdwg.mxu0
        %v1600 = vmul.f32 %v1597, 0.35355338
        %v1601 = vadd.f32 %v1600, %v878
        %v1602 = vsel %vm798, %v1601, -inf
        %1603 = vmax.xlane.f32.xlu0 %v1602
        %v1604 = vpop.xlane.xlu0 %1603
        %v1605 = vsub.f32 %v1601, %v1604
        %v1606 = vmul.f32 %v1605, 1.442695
        %v1607 = vpow.pop %v1606
        %v1608 = vsel %vm798, %v1607, 0.0
        %1609 = vadd.xlane.f32.xlu0 %v1608
        %v1610 = vpop.xlane.xlu0 %1609
        %v1611 = vrcp.pop %v1610
        %v1612 = vmul.f32 %v1607, %v1611
        %1613 = vrot.lane.b32.xlu0 %v788, 40
        %v1614 = vpop.permute.xlu0 %1613
        %v1617 = vsel %vm798, %v1612, 0
        %1619 = vmatprep.subr.mxu0 0.0
        %1620 = vmatpush1.msra.mxu0 0.0
        %1621 = vmatprep.subr.mxu0 0.0
        %1622 = vmatpush1.msra.mxu0 0.0
        %1623 = vmatprep.subr.mxu0 0.0
        %1624 = vmatpush1.msra.mxu0 0.0
        %1625 = vmatprep.subr.mxu0 0.0
        %1626 = vmatpush1.msra.mxu0 0.0
        %1627 = vmatprep.subr.mxu0 0.0
        %1628 = vmatpush1.msra.mxu0 0.0
        %1629 = vmatprep.subr.mxu0 0.0
        %1630 = vmatpush1.msra.mxu0 0.0
        %1631 = vmatprep.subr.mxu0 0.0
        %1632 = vmatpush1.msra.mxu0 0.0
        %1633 = vmatprep.subr.mxu0 0.0
        %1634 = vmatpush1.msra.mxu0 0.0
        %1635 = vmatprep.subr.mxu0 0.0
        %1636 = vmatpush1.msra.mxu0 0.0
        %1637 = vmatprep.subr.mxu0 0.0
        %1638 = vmatpush1.msra.mxu0 0.0
        %1639 = vmatprep.subr.mxu0 0.0
        %1640 = vmatpush1.msra.mxu0 0.0
        %1641 = vmatprep.subr.mxu0 0.0
        %1642 = vmatpush1.msra.mxu0 0.0
        %1643 = vmatprep.subr.mxu0 0.0
        %1644 = vmatpush1.msra.mxu0 0.0
        %1645 = vmatprep.subr.mxu0 0.0
        %1646 = vmatpush1.msra.mxu0 0.0
        %1647 = vmatprep.subr.mxu0 0.0
        %1648 = vmatpush1.msra.mxu0 0.0
        %1649 = vmatprep.subr.mxu0 0.0
        %1650 = vmatpush1.msra.mxu0 %v1614
        %1651 = vmatprep.subr.mxu0 0.0
        %1652 = vmatpush2.msra.mxu0 0.0
        %1653 = vmatprep.subr.mxu0 0.0
        %1654 = vmatpush2.msra.mxu0 0.0
        %1655 = vmatprep.subr.mxu0 0.0
        %1656 = vmatpush2.msra.mxu0 0.0
        %1657 = vmatprep.subr.mxu0 0.0
        %1658 = vmatpush2.msra.mxu0 0.0
        %1659 = vmatprep.subr.mxu0 0.0
        %1660 = vmatpush2.msra.mxu0 0.0
        %1661 = vmatprep.subr.mxu0 0.0
        %1662 = vmatpush2.msra.mxu0 0.0
        %1663 = vmatprep.subr.mxu0 0.0
        %1664 = vmatpush2.msra.mxu0 0.0
        %1665 = vmatprep.subr.mxu0 0.0
        %1666 = vmatpush2.msra.mxu0 0.0
        %1667 = vmatprep.subr.mxu0 0.0
        %1668 = vmatpush2.msra.mxu0 0.0
        %1669 = vmatprep.subr.mxu0 0.0
        %1670 = vmatpush2.msra.mxu0 0.0
        %1671 = vmatprep.subr.mxu0 0.0
        %1672 = vmatpush2.msra.mxu0 0.0
        %1673 = vmatprep.subr.mxu0 0.0
        %1674 = vmatpush2.msra.mxu0 0.0
        %1675 = vmatprep.subr.mxu0 0.0
        %1676 = vmatpush2.msra.mxu0 0.0
        %1677 = vmatprep.subr.mxu0 0.0
        %1678 = vmatpush2.msra.mxu0 0.0
        %1679 = vmatprep.subr.mxu0 0.0
        %1680 = vmatpush2.msra.mxu0 0.0
        %1681 = vmatprep.subr.mxu0 0.0
        %1682 = vmatpush2.msra.mxu0 0.0
        %1683 = vmatprep.mubr.f32.mxu0 0.0
        %1684 = vmatmul.mubr.f32.gmra.mxu0 %v1617
        %v1685 = vpop.f32.mrf.mxu0
        %v1686 = vadd.f32 0.0, %v1685
        %v1687 = vpop.f32.mrf.mxu0
        %1688 = vdwg.mxu0
        %v1690 = vsel %vm798, %v1686, 0
        %1692 = vmatprep.subr.mxu0 0.0
        %1693 = vmatpush1.msra.mxu0 0.0
        %1694 = vmatprep.subr.mxu0 0.0
        %1695 = vmatpush1.msra.mxu0 0.0
        %1696 = vmatprep.subr.mxu0 0.0
        %1697 = vmatpush1.msra.mxu0 0.0
        %1698 = vmatprep.subr.mxu0 0.0
        %1699 = vmatpush1.msra.mxu0 0.0
        %1700 = vmatprep.subr.mxu0 0.0
        %1701 = vmatpush1.msra.mxu0 0.0
        %1702 = vmatprep.subr.mxu0 0.0
        %1703 = vmatpush1.msra.mxu0 0.0
        %1704 = vmatprep.subr.mxu0 0.0
        %1705 = vmatpush1.msra.mxu0 0.0
        %1706 = vmatprep.subr.mxu0 0.0
        %1707 = vmatpush1.msra.mxu0 0.0
        %1708 = vmatprep.subr.mxu0 0.0
        %1709 = vmatpush1.msra.mxu0 0.0
        %1710 = vmatprep.subr.mxu0 0.0
        %1711 = vmatpush1.msra.mxu0 0.0
        %1712 = vmatprep.subr.mxu0 0.0
        %1713 = vmatpush1.msra.mxu0 0.0
        %1714 = vmatprep.subr.mxu0 0.0
        %1715 = vmatpush1.msra.mxu0 0.0
        %1716 = vmatprep.subr.mxu0 0.0
        %1717 = vmatpush1.msra.mxu0 0.0
        %1718 = vmatprep.subr.mxu0 0.0
        %1719 = vmatpush1.msra.mxu0 0.0
        %1720 = vmatprep.subr.mxu0 0.0
        %1721 = vmatpush1.msra.mxu0 0.0
        %1722 = vmatprep.subr.mxu0 0.0
        %1723 = vmatpush1.msra.mxu0 %v794
        %1724 = vmatprep.subr.mxu0 0.0
        %1725 = vmatpush2.msra.mxu0 0.0
        %1726 = vmatprep.subr.mxu0 0.0
        %1727 = vmatpush2.msra.mxu0 0.0
        %1728 = vmatprep.subr.mxu0 0.0
        %1729 = vmatpush2.msra.mxu0 0.0
        %1730 = vmatprep.subr.mxu0 0.0
        %1731 = vmatpush2.msra.mxu0 0.0
        %1732 = vmatprep.subr.mxu0 0.0
        %1733 = vmatpush2.msra.mxu0 0.0
        %1734 = vmatprep.subr.mxu0 0.0
        %1735 = vmatpush2.msra.mxu0 0.0
        %1736 = vmatprep.subr.mxu0 0.0
        %1737 = vmatpush2.msra.mxu0 0.0
        %1738 = vmatprep.subr.mxu0 0.0
        %1739 = vmatpush2.msra.mxu0 0.0
        %1740 = vmatprep.subr.mxu0 0.0
        %1741 = vmatpush2.msra.mxu0 0.0
        %1742 = vmatprep.subr.mxu0 0.0
        %1743 = vmatpush2.msra.mxu0 0.0
        %1744 = vmatprep.subr.mxu0 0.0
        %1745 = vmatpush2.msra.mxu0 0.0
        %1746 = vmatprep.subr.mxu0 0.0
        %1747 = vmatpush2.msra.mxu0 0.0
        %1748 = vmatprep.subr.mxu0 0.0
        %1749 = vmatpush2.msra.mxu0 0.0
        %1750 = vmatprep.subr.mxu0 0.0
        %1751 = vmatpush2.msra.mxu0 0.0
        %1752 = vmatprep.subr.mxu0 0.0
        %1753 = vmatpush2.msra.mxu0 0.0
        %1754 = vmatprep.subr.mxu0 0.0
        %1755 = vmatpush2.msra.mxu0 0.0
        %1756 = vmatprep.mubr.f32.mxu0 0.0
        %1757 = vmatmul.mubr.f32.gmra.mxu0 %v1690
        %v1758 = vpop.f32.mrf.mxu0
        %v1759 = vadd.f32 0.0, %v1758
        %v1760 = vpop.f32.mrf.mxu0
        %1761 = vdwg.mxu0
        %v1762 = vadd.f32 %v1521, %v1759
        %v1763 = vadd.f32 %v703, %v1762
        %v1764 = vld [vmem:[%s9] sm:$0x1]
        %v1766 = vlaneseq
        %v1767 = vshrl.u32 %v1766, 7
        %v1768 = vsub.s32 0, %v1767
        %v1769 = vrot.slane %v1764, %v1768
        %v1771 = vadd.f32 %v1763, %v1769
        %v1772 = vld [vmem:[%s10] sm:$0x1]
        %v1773 = vld [vmem:[%s11] sm:$0x1]
        %v1774 = vsel %vm675, %v1771, 0.0
        %1775 = vadd.xlane.f32.xlu0 %v1774
        %v1776 = vpop.xlane.xlu0 %1775
        %v1777 = vmul.f32 %v1776, %v679
        %v1778 = vsub.f32 %v1771, %v1777
        %v1779 = vmul.f32 %v1778, %v1778
        %v1780 = vsel %vm675, %v1779, 0.0
        %1781 = vadd.xlane.f32.xlu0 %v1780
        %v1782 = vpop.xlane.xlu0 %1781
        %v1783 = vmul.f32 %v1782, %v679
        %v1784 = vadd.f32 %v1783, 1e-12
        %v1785 = vrsqrt.pop %v1784
        %v1786 = vmul.f32 %v1778, %v1785
        %v1788 = vlaneseq
        %v1789 = vshrl.u32 %v1788, 7
        %v1790 = vsub.s32 0, %v1789
        %v1791 = vrot.slane %v1772, %v1790
        %v1793 = vmul.f32 %v1786, %v1791
        %v1795 = vlaneseq
        %v1796 = vshrl.u32 %v1795, 7
        %v1797 = vsub.s32 0, %v1796
        %v1798 = vrot.slane %v1773, %v1797
        %v1800 = vadd.f32 %v1793, %v1798
        %v1801 = vld [vmem:[%s12] sm:$0xff]
        %v1802 = vld [vmem:[%s12 + $0x8] sm:$0xff]
        %v1803 = vld [vmem:[%s12 + $0x10] sm:$0xff]
        %v1804 = vld [vmem:[%s12 + $0x18] sm:$0xff]
        %v1805 = vld [vmem:[%s13] sm:$0x1]
        %v1807 = vlaneseq
        %v1808 = vshrl.u32 %v1807, 7
        %v1809 = vsub.s32 0, %v1808
        %v1810 = vrot.slane %v1805, %v1809
        %v1813 = vsel %vm675, %v1800, 0
        %1815 = vmatprep.subr.mxu0 0.0
        %1816 = vmatpush1.msra.mxu0 0.0
        %1817 = vmatprep.subr.mxu0 0.0
        %1818 = vmatpush1.msra.mxu0 0.0
        %1819 = vmatprep.subr.mxu0 0.0
        %1820 = vmatpush1.msra.mxu0 0.0
        %1821 = vmatprep.subr.mxu0 0.0
        %1822 = vmatpush1.msra.mxu0 0.0
        %1823 = vmatprep.subr.mxu0 0.0
        %1824 = vmatpush1.msra.mxu0 0.0
        %1825 = vmatprep.subr.mxu0 0.0
        %1826 = vmatpush1.msra.mxu0 0.0
        %1827 = vmatprep.subr.mxu0 0.0
        %1828 = vmatpush1.msra.mxu0 0.0
        %1829 = vmatprep.subr.mxu0 0.0
        %1830 = vmatpush1.msra.mxu0 0.0
        %1831 = vmatprep.subr.mxu0 0.0
        %1832 = vmatpush1.msra.mxu0 0.0
        %1833 = vmatprep.subr.mxu0 0.0
        %1834 = vmatpush1.msra.mxu0 0.0
        %1835 = vmatprep.subr.mxu0 0.0
        %1836 = vmatpush1.msra.mxu0 0.0
        %1837 = vmatprep.subr.mxu0 0.0
        %1838 = vmatpush1.msra.mxu0 0.0
        %1839 = vmatprep.subr.mxu0 0.0
        %1840 = vmatpush1.msra.mxu0 %v1804
        %1841 = vmatprep.subr.mxu0 0.0
        %1842 = vmatpush1.msra.mxu0 %v1803
        %1843 = vmatprep.subr.mxu0 0.0
        %1844 = vmatpush1.msra.mxu0 %v1802
        %1845 = vmatprep.subr.mxu0 0.0
        %1846 = vmatpush1.msra.mxu0 %v1801
        %1847 = vmatprep.subr.mxu0 0.0
        %1848 = vmatpush2.msra.mxu0 0.0
        %1849 = vmatprep.subr.mxu0 0.0
        %1850 = vmatpush2.msra.mxu0 0.0
        %1851 = vmatprep.subr.mxu0 0.0
        %1852 = vmatpush2.msra.mxu0 0.0
        %1853 = vmatprep.subr.mxu0 0.0
        %1854 = vmatpush2.msra.mxu0 0.0
        %1855 = vmatprep.subr.mxu0 0.0
        %1856 = vmatpush2.msra.mxu0 0.0
        %1857 = vmatprep.subr.mxu0 0.0
        %1858 = vmatpush2.msra.mxu0 0.0
        %1859 = vmatprep.subr.mxu0 0.0
        %1860 = vmatpush2.msra.mxu0 0.0
        %1861 = vmatprep.subr.mxu0 0.0
        %1862 = vmatpush2.msra.mxu0 0.0
        %1863 = vmatprep.subr.mxu0 0.0
        %1864 = vmatpush2.msra.mxu0 0.0
        %1865 = vmatprep.subr.mxu0 0.0
        %1866 = vmatpush2.msra.mxu0 0.0
        %1867 = vmatprep.subr.mxu0 0.0
        %1868 = vmatpush2.msra.mxu0 0.0
        %1869 = vmatprep.subr.mxu0 0.0
        %1870 = vmatpush2.msra.mxu0 0.0
        %1871 = vmatprep.subr.mxu0 0.0
        %1872 = vmatpush2.msra.mxu0 0.0
        %1873 = vmatprep.subr.mxu0 0.0
        %1874 = vmatpush2.msra.mxu0 0.0
        %1875 = vmatprep.subr.mxu0 0.0
        %1876 = vmatpush2.msra.mxu0 0.0
        %1877 = vmatprep.subr.mxu0 0.0
        %1878 = vmatpush2.msra.mxu0 0.0
        %1879 = vmatprep.mubr.f32.mxu0 0.0
        %1880 = vmatmul.mubr.f32.gmra.mxu0 %v1813
        %v1881 = vpop.f32.mrf.mxu0
        %v1882 = vadd.f32 %v1810, %v1881
        %v1883 = vpop.f32.mrf.mxu0
        %1884 = vdwg.mxu0
        %v1885 = vmul.f32 %v1882, %v1882
        %v1886 = vmul.f32 %v1882, %v1885
        %v1887 = vmul.f32 %v1886, 0.044715
        %v1888 = vadd.f32 %v1882, %v1887
        %v1889 = vmul.f32 %v1888, 0.7978846
        %v1890 = vtanh.pop %v1889
        %v1891 = vadd.f32 %v1890, 1.0
        %v1892 = vmul.f32 %v1891, 0.5
        %v1893 = vmul.f32 %v1882, %v1892
        %v1894 = vld [vmem:[%s14] sm:$0xff]
        %v1895 = vld [vmem:[%s14 + $0x8] sm:$0xff]
        %v1896 = vld [vmem:[%s14 + $0x10] sm:$0xff]
        %v1897 = vld [vmem:[%s14 + $0x18] sm:$0xff]
        %v1898 = vld [vmem:[%s14 + $0x20] sm:$0xff]
        %v1899 = vld [vmem:[%s14 + $0x28] sm:$0xff]
        %v1900 = vld [vmem:[%s14 + $0x30] sm:$0xff]
        %v1901 = vld [vmem:[%s14 + $0x38] sm:$0xff]
        %v1902 = vld [vmem:[%s15] sm:$0x1]
        %v1904 = vlaneseq
        %v1905 = vshrl.u32 %v1904, 7
        %v1906 = vsub.s32 0, %v1905
        %v1907 = vrot.slane %v1902, %v1906
        %vm1909 = vcmask 523264
        %v1911 = vsel %vm1909, %v1893, 0
        %1913 = vmatprep.subr.mxu0 0.0
        %1914 = vmatpush1.msra.mxu0 0.0
        %1915 = vmatprep.subr.mxu0 0.0
        %1916 = vmatpush1.msra.mxu0 0.0
        %1917 = vmatprep.subr.mxu0 0.0
        %1918 = vmatpush1.msra.mxu0 0.0
        %1919 = vmatprep.subr.mxu0 0.0
        %1920 = vmatpush1.msra.mxu0 0.0
        %1921 = vmatprep.subr.mxu0 0.0
        %1922 = vmatpush1.msra.mxu0 0.0
        %1923 = vmatprep.subr.mxu0 0.0
        %1924 = vmatpush1.msra.mxu0 0.0
        %1925 = vmatprep.subr.mxu0 0.0
        %1926 = vmatpush1.msra.mxu0 0.0
        %1927 = vmatprep.subr.mxu0 0.0
        %1928 = vmatpush1.msra.mxu0 0.0
        %1929 = vmatprep.subr.mxu0 0.0
        %1930 = vmatpush1.msra.mxu0 %v1901
        %1931 = vmatprep.subr.mxu0 0.0
        %1932 = vmatpush1.msra.mxu0 %v1900
        %1933 = vmatprep.subr.mxu0 0.0
        %1934 = vmatpush1.msra.mxu0 %v1899
        %1935 = vmatprep.subr.mxu0 0.0
        %1936 = vmatpush1.msra.mxu0 %v1898
        %1937 = vmatprep.subr.mxu0 0.0
        %1938 = vmatpush1.msra.mxu0 %v1897
        %1939 = vmatprep.subr.mxu0 0.0
        %1940 = vmatpush1.msra.mxu0 %v1896
        %1941 = vmatprep.subr.mxu0 0.0
        %1942 = vmatpush1.msra.mxu0 %v1895
        %1943 = vmatprep.subr.mxu0 0.0
        %1944 = vmatpush1.msra.mxu0 %v1894
        %1945 = vmatprep.subr.mxu0 0.0
        %1946 = vmatpush2.msra.mxu0 0.0
        %1947 = vmatprep.subr.mxu0 0.0
        %1948 = vmatpush2.msra.mxu0 0.0
        %1949 = vmatprep.subr.mxu0 0.0
        %1950 = vmatpush2.msra.mxu0 0.0
        %1951 = vmatprep.subr.mxu0 0.0
        %1952 = vmatpush2.msra.mxu0 0.0
        %1953 = vmatprep.subr.mxu0 0.0
        %1954 = vmatpush2.msra.mxu0 0.0
        %1955 = vmatprep.subr.mxu0 0.0
        %1956 = vmatpush2.msra.mxu0 0.0
        %1957 = vmatprep.subr.mxu0 0.0
        %1958 = vmatpush2.msra.mxu0 0.0
        %1959 = vmatprep.subr.mxu0 0.0
        %1960 = vmatpush2.msra.mxu0 0.0
        %1961 = vmatprep.subr.mxu0 0.0
        %1962 = vmatpush2.msra.mxu0 0.0
        %1963 = vmatprep.subr.mxu0 0.0
        %1964 = vmatpush2.msra.mxu0 0.0
        %1965 = vmatprep.subr.mxu0 0.0
        %1966 = vmatpush2.msra.mxu0 0.0
        %1967 = vmatprep.subr.mxu0 0.0
        %1968 = vmatpush2.msra.mxu0 0.0
        %1969 = vmatprep.subr.mxu0 0.0
        %1970 = vmatpush2.msra.mxu0 0.0
        %1971 = vmatprep.subr.mxu0 0.0
        %1972 = vmatpush2.msra.mxu0 0.0
        %1973 = vmatprep.subr.mxu0 0.0
        %1974 = vmatpush2.msra.mxu0 0.0
        %1975 = vmatprep.subr.mxu0 0.0
        %1976 = vmatpush2.msra.mxu0 0.0
        %1977 = vmatprep.mubr.f32.mxu0 0.0
        %1978 = vmatmul.mubr.f32.gmra.mxu0 %v1911
        %v1979 = vpop.f32.mrf.mxu0
        %v1980 = vadd.f32 %v1907, %v1979
        %v1981 = vpop.f32.mrf.mxu0
        %1982 = vdwg.mxu0
        %v1983 = vadd.f32 %v1800, %v1980
        %v1984 = vld [vmem:[%s16] sm:$0x1]
        %v1985 = vld [vmem:[%s17] sm:$0x1]
        %v1986 = vsel %vm675, %v1983, 0.0
        %1987 = vadd.xlane.f32.xlu0 %v1986
        %v1988 = vpop.xlane.xlu0 %1987
        %v1989 = vmul.f32 %v1988, %v679
        %v1990 = vsub.f32 %v1983, %v1989
        %v1991 = vmul.f32 %v1990, %v1990
        %v1992 = vsel %vm675, %v1991, 0.0
        %1993 = vadd.xlane.f32.xlu0 %v1992
        %v1994 = vpop.xlane.xlu0 %1993
        %v1995 = vmul.f32 %v1994, %v679
        %v1996 = vadd.f32 %v1995, 1e-12
        %v1997 = vrsqrt.pop %v1996
        %v1998 = vmul.f32 %v1990, %v1997
        %v2000 = vlaneseq
        %v2001 = vshrl.u32 %v2000, 7
        %v2002 = vsub.s32 0, %v2001
        %v2003 = vrot.slane %v1984, %v2002
        %v2005 = vmul.f32 %v1998, %v2003
        %v2007 = vlaneseq
        %v2008 = vshrl.u32 %v2007, 7
        %v2009 = vsub.s32 0, %v2008
        %v2010 = vrot.slane %v1985, %v2009
        %v2012 = vadd.f32 %v2005, %v2010
        %s2013 = scalar_lea.vmem %s6, 32
        %v2014 = vld [vmem:[%s2013] sm:$0xff]
        %v2015 = vld [vmem:[%s2013 + $0x8] sm:$0xff]
        %v2016 = vld [vmem:[%s2013 + $0x10] sm:$0xff]
        %v2017 = vld [vmem:[%s2013 + $0x18] sm:$0xff]
        %s2018 = scalar_lea.vmem %s7, 1
        %v2019 = vld [vmem:[%s2018] sm:$0x1]
        %v2021 = vlaneseq
        %v2022 = vshrl.u32 %v2021, 7
        %v2023 = vsub.s32 0, %v2022
        %v2024 = vrot.slane %v2019, %v2023
        %v2027 = vsel %vm675, %v2012, 0
        %2029 = vmatprep.subr.mxu0 0.0
        %2030 = vmatpush1.msra.mxu0 0.0
        %2031 = vmatprep.subr.mxu0 0.0
        %2032 = vmatpush1.msra.mxu0 0.0
        %2033 = vmatprep.subr.mxu0 0.0
        %2034 = vmatpush1.msra.mxu0 0.0
        %2035 = vmatprep.subr.mxu0 0.0
        %2036 = vmatpush1.msra.mxu0 0.0
        %2037 = vmatprep.subr.mxu0 0.0
        %2038 = vmatpush1.msra.mxu0 0.0
        %2039 = vmatprep.subr.mxu0 0.0
        %2040 = vmatpush1.msra.mxu0 0.0
        %2041 = vmatprep.subr.mxu0 0.0
        %2042 = vmatpush1.msra.mxu0 0.0
        %2043 = vmatprep.subr.mxu0 0.0
        %2044 = vmatpush1.msra.mxu0 0.0
        %2045 = vmatprep.subr.mxu0 0.0
        %2046 = vmatpush1.msra.mxu0 0.0
        %2047 = vmatprep.subr.mxu0 0.0
        %2048 = vmatpush1.msra.mxu0 0.0
        %2049 = vmatprep.subr.mxu0 0.0
        %2050 = vmatpush1.msra.mxu0 0.0
        %2051 = vmatprep.subr.mxu0 0.0
        %2052 = vmatpush1.msra.mxu0 0.0
        %2053 = vmatprep.subr.mxu0 0.0
        %2054 = vmatpush1.msra.mxu0 %v2017
        %2055 = vmatprep.subr.mxu0 0.0
        %2056 = vmatpush1.msra.mxu0 %v2016
        %2057 = vmatprep.subr.mxu0 0.0
        %2058 = vmatpush1.msra.mxu0 %v2015
        %2059 = vmatprep.subr.mxu0 0.0
        %2060 = vmatpush1.msra.mxu0 %v2014
        %2061 = vmatprep.subr.mxu0 0.0
        %2062 = vmatpush2.msra.mxu0 0.0
        %2063 = vmatprep.subr.mxu0 0.0
        %2064 = vmatpush2.msra.mxu0 0.0
        %2065 = vmatprep.subr.mxu0 0.0
        %2066 = vmatpush2.msra.mxu0 0.0
        %2067 = vmatprep.subr.mxu0 0.0
        %2068 = vmatpush2.msra.mxu0 0.0
        %2069 = vmatprep.subr.mxu0 0.0
        %2070 = vmatpush2.msra.mxu0 0.0
        %2071 = vmatprep.subr.mxu0 0.0
        %2072 = vmatpush2.msra.mxu0 0.0
        %2073 = vmatprep.subr.mxu0 0.0
        %2074 = vmatpush2.msra.mxu0 0.0
        %2075 = vmatprep.subr.mxu0 0.0
        %2076 = vmatpush2.msra.mxu0 0.0
        %2077 = vmatprep.subr.mxu0 0.0
        %2078 = vmatpush2.msra.mxu0 0.0
        %2079 = vmatprep.subr.mxu0 0.0
        %2080 = vmatpush2.msra.mxu0 0.0
        %2081 = vmatprep.subr.mxu0 0.0
        %2082 = vmatpush2.msra.mxu0 0.0
        %2083 = vmatprep.subr.mxu0 0.0
        %2084 = vmatpush2.msra.mxu0 0.0
        %2085 = vmatprep.subr.mxu0 0.0
        %2086 = vmatpush2.msra.mxu0 0.0
        %2087 = vmatprep.subr.mxu0 0.0
        %2088 = vmatpush2.msra.mxu0 0.0
        %2089 = vmatprep.subr.mxu0 0.0
        %2090 = vmatpush2.msra.mxu0 0.0
        %2091 = vmatprep.subr.mxu0 0.0
        %2092 = vmatpush2.msra.mxu0 0.0
        %2093 = vmatprep.mubr.f32.mxu0 0.0
        %2094 = vmatmul.mubr.f32.gmra.mxu0 %v2027
        %v2095 = vpop.f32.mrf.mxu0
        %v2096 = vadd.f32 %v2024, %v2095
        %v2097 = vpop.f32.mrf.mxu0
        %2098 = vdwg.mxu0
        %s2099 = scalar_lea.vmem %s8, 32
        %v2100 = vld [vmem:[%s2099] sm:$0xff]
        %v2101 = vld [vmem:[%s2099 + $0x8] sm:$0xff]
        %v2102 = vld [vmem:[%s2099 + $0x10] sm:$0xff]
        %v2103 = vld [vmem:[%s2099 + $0x18] sm:$0xff]
        %2105 = vrot.lane.b32.xlu0 %v2096, 96
        %v2106 = vpop.permute.xlu0 %2105
        %v2107 = vsel %vm798, %v2096, 0
        %v2109 = vsel %vm798, %v2106, 0
        %2111 = vmatprep.subr.mxu0 0.0
        %2112 = vmatpush1.xpose.msra.mxu0 0.0
        %2113 = vmatprep.subr.mxu0 0.0
        %2114 = vmatpush1.xpose.msra.mxu0 0.0
        %2115 = vmatprep.subr.mxu0 0.0
        %2116 = vmatpush1.xpose.msra.mxu0 0.0
        %2117 = vmatprep.subr.mxu0 0.0
        %2118 = vmatpush1.xpose.msra.mxu0 0.0
        %2119 = vmatprep.subr.mxu0 0.0
        %2120 = vmatpush1.xpose.msra.mxu0 0.0
        %2121 = vmatprep.subr.mxu0 0.0
        %2122 = vmatpush1.xpose.msra.mxu0 0.0
        %2123 = vmatprep.subr.mxu0 0.0
        %2124 = vmatpush1.xpose.msra.mxu0 0.0
        %2125 = vmatprep.subr.mxu0 0.0
        %2126 = vmatpush1.xpose.msra.mxu0 0.0
        %2127 = vmatprep.subr.mxu0 0.0
        %2128 = vmatpush1.xpose.msra.mxu0 0.0
        %2129 = vmatprep.subr.mxu0 0.0
        %2130 = vmatpush1.xpose.msra.mxu0 0.0
        %2131 = vmatprep.subr.mxu0 0.0
        %2132 = vmatpush1.xpose.msra.mxu0 0.0
        %2133 = vmatprep.subr.mxu0 0.0
        %2134 = vmatpush1.xpose.msra.mxu0 0.0
        %2135 = vmatprep.subr.mxu0 0.0
        %2136 = vmatpush1.xpose.msra.mxu0 0.0
        %2137 = vmatprep.subr.mxu0 0.0
        %2138 = vmatpush1.xpose.msra.mxu0 0.0
        %2139 = vmatprep.subr.mxu0 0.0
        %2140 = vmatpush1.xpose.msra.mxu0 0.0
        %2141 = vmatprep.subr.mxu0 0.0
        %2142 = vmatpush1.xpose.msra.mxu0 %v2109
        %2143 = vmatprep.subr.mxu0 0.0
        %2144 = vmatpush2.xpose.msra.mxu0 0.0
        %2145 = vmatprep.subr.mxu0 0.0
        %2146 = vmatpush2.xpose.msra.mxu0 0.0
        %2147 = vmatprep.subr.mxu0 0.0
        %2148 = vmatpush2.xpose.msra.mxu0 0.0
        %2149 = vmatprep.subr.mxu0 0.0
        %2150 = vmatpush2.xpose.msra.mxu0 0.0
        %2151 = vmatprep.subr.mxu0 0.0
        %2152 = vmatpush2.xpose.msra.mxu0 0.0
        %2153 = vmatprep.subr.mxu0 0.0
        %2154 = vmatpush2.xpose.msra.mxu0 0.0
        %2155 = vmatprep.subr.mxu0 0.0
        %2156 = vmatpush2.xpose.msra.mxu0 0.0
        %2157 = vmatprep.subr.mxu0 0.0
        %2158 = vmatpush2.xpose.msra.mxu0 0.0
        %2159 = vmatprep.subr.mxu0 0.0
        %2160 = vmatpush2.xpose.msra.mxu0 0.0
        %2161 = vmatprep.subr.mxu0 0.0
        %2162 = vmatpush2.xpose.msra.mxu0 0.0
        %2163 = vmatprep.subr.mxu0 0.0
        %2164 = vmatpush2.xpose.msra.mxu0 0.0
        %2165 = vmatprep.subr.mxu0 0.0
        %2166 = vmatpush2.xpose.msra.mxu0 0.0
        %2167 = vmatprep.subr.mxu0 0.0
        %2168 = vmatpush2.xpose.msra.mxu0 0.0
        %2169 = vmatprep.subr.mxu0 0.0
        %2170 = vmatpush2.xpose.msra.mxu0 0.0
        %2171 = vmatprep.subr.mxu0 0.0
        %2172 = vmatpush2.xpose.msra.mxu0 0.0
        %2173 = vmatprep.subr.mxu0 0.0
        %2174 = vmatpush2.xpose.msra.mxu0 0.0
        %2175 = vmatprep.mubr.f32.mxu0 0.0
        %2176 = vmatmul.mubr.f32.gmra.mxu0 %v2107
        %v2177 = vpop.f32.mrf.mxu0
        %v2178 = vadd.f32 0.0, %v2177
        %v2179 = vpop.f32.mrf.mxu0
        %2180 = vdwg.mxu0
        %v2181 = vmul.f32 %v2178, 0.35355338
        %v2182 = vadd.f32 %v2181, %v878
        %v2183 = vsel %vm798, %v2182, -inf
        %2184 = vmax.xlane.f32.xlu0 %v2183
        %v2185 = vpop.xlane.xlu0 %2184
        %v2186 = vsub.f32 %v2182, %v2185
        %v2187 = vmul.f32 %v2186, 1.442695
        %v2188 = vpow.pop %v2187
        %v2189 = vsel %vm798, %v2188, 0.0
        %2190 = vadd.xlane.f32.xlu0 %v2189
        %v2191 = vpop.xlane.xlu0 %2190
        %v2192 = vrcp.pop %v2191
        %v2193 = vmul.f32 %v2188, %v2192
        %2194 = vrot.lane.b32.xlu0 %v2096, 64
        %v2195 = vpop.permute.xlu0 %2194
        %v2198 = vsel %vm798, %v2193, 0
        %2200 = vmatprep.subr.mxu0 0.0
        %2201 = vmatpush1.msra.mxu0 0.0
        %2202 = vmatprep.subr.mxu0 0.0
        %2203 = vmatpush1.msra.mxu0 0.0
        %2204 = vmatprep.subr.mxu0 0.0
        %2205 = vmatpush1.msra.mxu0 0.0
        %2206 = vmatprep.subr.mxu0 0.0
        %2207 = vmatpush1.msra.mxu0 0.0
        %2208 = vmatprep.subr.mxu0 0.0
        %2209 = vmatpush1.msra.mxu0 0.0
        %2210 = vmatprep.subr.mxu0 0.0
        %2211 = vmatpush1.msra.mxu0 0.0
        %2212 = vmatprep.subr.mxu0 0.0
        %2213 = vmatpush1.msra.mxu0 0.0
        %2214 = vmatprep.subr.mxu0 0.0
        %2215 = vmatpush1.msra.mxu0 0.0
        %2216 = vmatprep.subr.mxu0 0.0
        %2217 = vmatpush1.msra.mxu0 0.0
        %2218 = vmatprep.subr.mxu0 0.0
        %2219 = vmatpush1.msra.mxu0 0.0
        %2220 = vmatprep.subr.mxu0 0.0
        %2221 = vmatpush1.msra.mxu0 0.0
        %2222 = vmatprep.subr.mxu0 0.0
        %2223 = vmatpush1.msra.mxu0 0.0
        %2224 = vmatprep.subr.mxu0 0.0
        %2225 = vmatpush1.msra.mxu0 0.0
        %2226 = vmatprep.subr.mxu0 0.0
        %2227 = vmatpush1.msra.mxu0 0.0
        %2228 = vmatprep.subr.mxu0 0.0
        %2229 = vmatpush1.msra.mxu0 0.0
        %2230 = vmatprep.subr.mxu0 0.0
        %2231 = vmatpush1.msra.mxu0 %v2195
        %2232 = vmatprep.subr.mxu0 0.0
        %2233 = vmatpush2.msra.mxu0 0.0
        %2234 = vmatprep.subr.mxu0 0.0
        %2235 = vmatpush2.msra.mxu0 0.0
        %2236 = vmatprep.subr.mxu0 0.0
        %2237 = vmatpush2.msra.mxu0 0.0
        %2238 = vmatprep.subr.mxu0 0.0
        %2239 = vmatpush2.msra.mxu0 0.0
        %2240 = vmatprep.subr.mxu0 0.0
        %2241 = vmatpush2.msra.mxu0 0.0
        %2242 = vmatprep.subr.mxu0 0.0
        %2243 = vmatpush2.msra.mxu0 0.0
        %2244 = vmatprep.subr.mxu0 0.0
        %2245 = vmatpush2.msra.mxu0 0.0
        %2246 = vmatprep.subr.mxu0 0.0
        %2247 = vmatpush2.msra.mxu0 0.0
        %2248 = vmatprep.subr.mxu0 0.0
        %2249 = vmatpush2.msra.mxu0 0.0
        %2250 = vmatprep.subr.mxu0 0.0
        %2251 = vmatpush2.msra.mxu0 0.0
        %2252 = vmatprep.subr.mxu0 0.0
        %2253 = vmatpush2.msra.mxu0 0.0
        %2254 = vmatprep.subr.mxu0 0.0
        %2255 = vmatpush2.msra.mxu0 0.0
        %2256 = vmatprep.subr.mxu0 0.0
        %2257 = vmatpush2.msra.mxu0 0.0
        %2258 = vmatprep.subr.mxu0 0.0
        %2259 = vmatpush2.msra.mxu0 0.0
        %2260 = vmatprep.subr.mxu0 0.0
        %2261 = vmatpush2.msra.mxu0 0.0
        %2262 = vmatprep.subr.mxu0 0.0
        %2263 = vmatpush2.msra.mxu0 0.0
        %2264 = vmatprep.mubr.f32.mxu0 0.0
        %2265 = vmatmul.mubr.f32.gmra.mxu0 %v2198
        %v2266 = vpop.f32.mrf.mxu0
        %v2267 = vadd.f32 0.0, %v2266
        %v2268 = vpop.f32.mrf.mxu0
        %2269 = vdwg.mxu0
        %2270 = vrot.lane.b32.xlu0 %v2096, 120
        %v2271 = vpop.permute.xlu0 %2270
        %2272 = vrot.lane.b32.xlu0 %v2096, 88
        %v2273 = vpop.permute.xlu0 %2272
        %v2274 = vsel %vm798, %v2271, 0
        %v2276 = vsel %vm798, %v2273, 0
        %2278 = vmatprep.subr.mxu0 0.0
        %2279 = vmatpush1.xpose.msra.mxu0 0.0
        %2280 = vmatprep.subr.mxu0 0.0
        %2281 = vmatpush1.xpose.msra.mxu0 0.0
        %2282 = vmatprep.subr.mxu0 0.0
        %2283 = vmatpush1.xpose.msra.mxu0 0.0
        %2284 = vmatprep.subr.mxu0 0.0
        %2285 = vmatpush1.xpose.msra.mxu0 0.0
        %2286 = vmatprep.subr.mxu0 0.0
        %2287 = vmatpush1.xpose.msra.mxu0 0.0
        %2288 = vmatprep.subr.mxu0 0.0
        %2289 = vmatpush1.xpose.msra.mxu0 0.0
        %2290 = vmatprep.subr.mxu0 0.0
        %2291 = vmatpush1.xpose.msra.mxu0 0.0
        %2292 = vmatprep.subr.mxu0 0.0
        %2293 = vmatpush1.xpose.msra.mxu0 0.0
        %2294 = vmatprep.subr.mxu0 0.0
        %2295 = vmatpush1.xpose.msra.mxu0 0.0
        %2296 = vmatprep.subr.mxu0 0.0
        %2297 = vmatpush1.xpose.msra.mxu0 0.0
        %2298 = vmatprep.subr.mxu0 0.0
        %2299 = vmatpush1.xpose.msra.mxu0 0.0
        %2300 = vmatprep.subr.mxu0 0.0
        %2301 = vmatpush1.xpose.msra.mxu0 0.0
        %2302 = vmatprep.subr.mxu0 0.0
        %2303 = vmatpush1.xpose.msra.mxu0 0.0
        %2304 = vmatprep.subr.mxu0 0.0
        %2305 = vmatpush1.xpose.msra.mxu0 0.0
        %2306 = vmatprep.subr.mxu0 0.0
        %2307 = vmatpush1.xpose.msra.mxu0 0.0
        %2308 = vmatprep.subr.mxu0 0.0
        %2309 = vmatpush1.xpose.msra.mxu0 %v2276
        %2310 = vmatprep.subr.mxu0 0.0
        %2311 = vmatpush2.xpose.msra.mxu0 0.0
        %2312 = vmatprep.subr.mxu0 0.0
        %2313 = vmatpush2.xpose.msra.mxu0 0.0
        %2314 = vmatprep.subr.mxu0 0.0
        %2315 = vmatpush2.xpose.msra.mxu0 0.0
        %2316 = vmatprep.subr.mxu0 0.0
        %2317 = vmatpush2.xpose.msra.mxu0 0.0
        %2318 = vmatprep.subr.mxu0 0.0
        %2319 = vmatpush2.xpose.msra.mxu0 0.0
        %2320 = vmatprep.subr.mxu0 0.0
        %2321 = vmatpush2.xpose.msra.mxu0 0.0
        %2322 = vmatprep.subr.mxu0 0.0
        %2323 = vmatpush2.xpose.msra.mxu0 0.0
        %2324 = vmatprep.subr.mxu0 0.0
        %2325 = vmatpush2.xpose.msra.mxu0 0.0
        %2326 = vmatprep.subr.mxu0 0.0
        %2327 = vmatpush2.xpose.msra.mxu0 0.0
        %2328 = vmatprep.subr.mxu0 0.0
        %2329 = vmatpush2.xpose.msra.mxu0 0.0
        %2330 = vmatprep.subr.mxu0 0.0
        %2331 = vmatpush2.xpose.msra.mxu0 0.0
        %2332 = vmatprep.subr.mxu0 0.0
        %2333 = vmatpush2.xpose.msra.mxu0 0.0
        %2334 = vmatprep.subr.mxu0 0.0
        %2335 = vmatpush2.xpose.msra.mxu0 0.0
        %2336 = vmatprep.subr.mxu0 0.0
        %2337 = vmatpush2.xpose.msra.mxu0 0.0
        %2338 = vmatprep.subr.mxu0 0.0
        %2339 = vmatpush2.xpose.msra.mxu0 0.0
        %2340 = vmatprep.subr.mxu0 0.0
        %2341 = vmatpush2.xpose.msra.mxu0 0.0
        %2342 = vmatprep.mubr.f32.mxu0 0.0
        %2343 = vmatmul.mubr.f32.gmra.mxu0 %v2274
        %v2344 = vpop.f32.mrf.mxu0
        %v2345 = vadd.f32 0.0, %v2344
        %v2346 = vpop.f32.mrf.mxu0
        %2347 = vdwg.mxu0
        %v2348 = vmul.f32 %v2345, 0.35355338
        %v2349 = vadd.f32 %v2348, %v878
        %v2350 = vsel %vm798, %v2349, -inf
        %2351 = vmax.xlane.f32.xlu0 %v2350
        %v2352 = vpop.xlane.xlu0 %2351
        %v2353 = vsub.f32 %v2349, %v2352
        %v2354 = vmul.f32 %v2353, 1.442695
        %v2355 = vpow.pop %v2354
        %v2356 = vsel %vm798, %v2355, 0.0
        %2357 = vadd.xlane.f32.xlu0 %v2356
        %v2358 = vpop.xlane.xlu0 %2357
        %v2359 = vrcp.pop %v2358
        %v2360 = vmul.f32 %v2355, %v2359
        %2361 = vrot.lane.b32.xlu0 %v2096, 56
        %v2362 = vpop.permute.xlu0 %2361
        %v2365 = vsel %vm798, %v2360, 0
        %2367 = vmatprep.subr.mxu0 0.0
        %2368 = vmatpush1.msra.mxu0 0.0
        %2369 = vmatprep.subr.mxu0 0.0
        %2370 = vmatpush1.msra.mxu0 0.0
        %2371 = vmatprep.subr.mxu0 0.0
        %2372 = vmatpush1.msra.mxu0 0.0
        %2373 = vmatprep.subr.mxu0 0.0
        %2374 = vmatpush1.msra.mxu0 0.0
        %2375 = vmatprep.subr.mxu0 0.0
        %2376 = vmatpush1.msra.mxu0 0.0
        %2377 = vmatprep.subr.mxu0 0.0
        %2378 = vmatpush1.msra.mxu0 0.0
        %2379 = vmatprep.subr.mxu0 0.0
        %2380 = vmatpush1.msra.mxu0 0.0
        %2381 = vmatprep.subr.mxu0 0.0
        %2382 = vmatpush1.msra.mxu0 0.0
        %2383 = vmatprep.subr.mxu0 0.0
        %2384 = vmatpush1.msra.mxu0 0.0
        %2385 = vmatprep.subr.mxu0 0.0
        %2386 = vmatpush1.msra.mxu0 0.0
        %2387 = vmatprep.subr.mxu0 0.0
        %2388 = vmatpush1.msra.mxu0 0.0
        %2389 = vmatprep.subr.mxu0 0.0
        %2390 = vmatpush1.msra.mxu0 0.0
        %2391 = vmatprep.subr.mxu0 0.0
        %2392 = vmatpush1.msra.mxu0 0.0
        %2393 = vmatprep.subr.mxu0 0.0
        %2394 = vmatpush1.msra.mxu0 0.0
        %2395 = vmatprep.subr.mxu0 0.0
        %2396 = vmatpush1.msra.mxu0 0.0
        %2397 = vmatprep.subr.mxu0 0.0
        %2398 = vmatpush1.msra.mxu0 %v2362
        %2399 = vmatprep.subr.mxu0 0.0
        %2400 = vmatpush2.msra.mxu0 0.0
        %2401 = vmatprep.subr.mxu0 0.0
        %2402 = vmatpush2.msra.mxu0 0.0
        %2403 = vmatprep.subr.mxu0 0.0
        %2404 = vmatpush2.msra.mxu0 0.0
        %2405 = vmatprep.subr.mxu0 0.0
        %2406 = vmatpush2.msra.mxu0 0.0
        %2407 = vmatprep.subr.mxu0 0.0
        %2408 = vmatpush2.msra.mxu0 0.0
        %2409 = vmatprep.subr.mxu0 0.0
        %2410 = vmatpush2.msra.mxu0 0.0
        %2411 = vmatprep.subr.mxu0 0.0
        %2412 = vmatpush2.msra.mxu0 0.0
        %2413 = vmatprep.subr.mxu0 0.0
        %2414 = vmatpush2.msra.mxu0 0.0
        %2415 = vmatprep.subr.mxu0 0.0
        %2416 = vmatpush2.msra.mxu0 0.0
        %2417 = vmatprep.subr.mxu0 0.0
        %2418 = vmatpush2.msra.mxu0 0.0
        %2419 = vmatprep.subr.mxu0 0.0
        %2420 = vmatpush2.msra.mxu0 0.0
        %2421 = vmatprep.subr.mxu0 0.0
        %2422 = vmatpush2.msra.mxu0 0.0
        %2423 = vmatprep.subr.mxu0 0.0
        %2424 = vmatpush2.msra.mxu0 0.0
        %2425 = vmatprep.subr.mxu0 0.0
        %2426 = vmatpush2.msra.mxu0 0.0
        %2427 = vmatprep.subr.mxu0 0.0
        %2428 = vmatpush2.msra.mxu0 0.0
        %2429 = vmatprep.subr.mxu0 0.0
        %2430 = vmatpush2.msra.mxu0 0.0
        %2431 = vmatprep.mubr.f32.mxu0 0.0
        %2432 = vmatmul.mubr.f32.gmra.mxu0 %v2365
        %v2433 = vpop.f32.mrf.mxu0
        %v2434 = vadd.f32 0.0, %v2433
        %v2435 = vpop.f32.mrf.mxu0
        %2436 = vdwg.mxu0
        %v2438 = vsel %vm798, %v2434, 0
        %2440 = vmatprep.subr.mxu0 0.0
        %2441 = vmatpush1.msra.mxu0 0.0
        %2442 = vmatprep.subr.mxu0 0.0
        %2443 = vmatpush1.msra.mxu0 0.0
        %2444 = vmatprep.subr.mxu0 0.0
        %2445 = vmatpush1.msra.mxu0 0.0
        %2446 = vmatprep.subr.mxu0 0.0
        %2447 = vmatpush1.msra.mxu0 0.0
        %2448 = vmatprep.subr.mxu0 0.0
        %2449 = vmatpush1.msra.mxu0 0.0
        %2450 = vmatprep.subr.mxu0 0.0
        %2451 = vmatpush1.msra.mxu0 0.0
        %2452 = vmatprep.subr.mxu0 0.0
        %2453 = vmatpush1.msra.mxu0 0.0
        %2454 = vmatprep.subr.mxu0 0.0
        %2455 = vmatpush1.msra.mxu0 0.0
        %2456 = vmatprep.subr.mxu0 0.0
        %2457 = vmatpush1.msra.mxu0 0.0
        %2458 = vmatprep.subr.mxu0 0.0
        %2459 = vmatpush1.msra.mxu0 0.0
        %2460 = vmatprep.subr.mxu0 0.0
        %2461 = vmatpush1.msra.mxu0 0.0
        %2462 = vmatprep.subr.mxu0 0.0
        %2463 = vmatpush1.msra.mxu0 0.0
        %2464 = vmatprep.subr.mxu0 0.0
        %2465 = vmatpush1.msra.mxu0 0.0
        %2466 = vmatprep.subr.mxu0 0.0
        %2467 = vmatpush1.msra.mxu0 0.0
        %2468 = vmatprep.subr.mxu0 0.0
        %2469 = vmatpush1.msra.mxu0 0.0
        %2470 = vmatprep.subr.mxu0 0.0
        %2471 = vmatpush1.msra.mxu0 %v2101
        %2472 = vmatprep.subr.mxu0 0.0
        %2473 = vmatpush2.msra.mxu0 0.0
        %2474 = vmatprep.subr.mxu0 0.0
        %2475 = vmatpush2.msra.mxu0 0.0
        %2476 = vmatprep.subr.mxu0 0.0
        %2477 = vmatpush2.msra.mxu0 0.0
        %2478 = vmatprep.subr.mxu0 0.0
        %2479 = vmatpush2.msra.mxu0 0.0
        %2480 = vmatprep.subr.mxu0 0.0
        %2481 = vmatpush2.msra.mxu0 0.0
        %2482 = vmatprep.subr.mxu0 0.0
        %2483 = vmatpush2.msra.mxu0 0.0
        %2484 = vmatprep.subr.mxu0 0.0
        %2485 = vmatpush2.msra.mxu0 0.0
        %2486 = vmatprep.subr.mxu0 0.0
        %2487 = vmatpush2.msra.mxu0 0.0
        %2488 = vmatprep.subr.mxu0 0.0
        %2489 = vmatpush2.msra.mxu0 0.0
        %2490 = vmatprep.subr.mxu0 0.0
        %2491 = vmatpush2.msra.mxu0 0.0
        %2492 = vmatprep.subr.mxu0 0.0
        %2493 = vmatpush2.msra.mxu0 0.0
        %2494 = vmatprep.subr.mxu0 0.0
        %2495 = vmatpush2.msra.mxu0 0.0
        %2496 = vmatprep.subr.mxu0 0.0
        %2497 = vmatpush2.msra.mxu0 0.0
        %2498 = vmatprep.subr.mxu0 0.0
        %2499 = vmatpush2.msra.mxu0 0.0
        %2500 = vmatprep.subr.mxu0 0.0
        %2501 = vmatpush2.msra.mxu0 0.0
        %2502 = vmatprep.subr.mxu0 0.0
        %2503 = vmatpush2.msra.mxu0 0.0
        %2504 = vmatprep.mubr.f32.mxu0 0.0
        %2505 = vmatmul.mubr.f32.gmra.mxu0 %v2438
        %v2506 = vpop.f32.mrf.mxu0
        %v2507 = vadd.f32 0.0, %v2506
        %v2508 = vpop.f32.mrf.mxu0
        %2509 = vdwg.mxu0
        %v2511 = vsel %vm798, %v2267, 0
        %2513 = vmatprep.subr.mxu0 0.0
        %2514 = vmatpush1.msra.mxu0 0.0
        %2515 = vmatprep.subr.mxu0 0.0
        %2516 = vmatpush1.msra.mxu0 0.0
        %2517 = vmatprep.subr.mxu0 0.0
        %2518 = vmatpush1.msra.mxu0 0.0
        %2519 = vmatprep.subr.mxu0 0.0
        %2520 = vmatpush1.msra.mxu0 0.0
        %2521 = vmatprep.subr.mxu0 0.0
        %2522 = vmatpush1.msra.mxu0 0.0
        %2523 = vmatprep.subr.mxu0 0.0
        %2524 = vmatpush1.msra.mxu0 0.0
        %2525 = vmatprep.subr.mxu0 0.0
        %2526 = vmatpush1.msra.mxu0 0.0
        %2527 = vmatprep.subr.mxu0 0.0
        %2528 = vmatpush1.msra.mxu0 0.0
        %2529 = vmatprep.subr.mxu0 0.0
        %2530 = vmatpush1.msra.mxu0 0.0
        %2531 = vmatprep.subr.mxu0 0.0
        %2532 = vmatpush1.msra.mxu0 0.0
        %2533 = vmatprep.subr.mxu0 0.0
        %2534 = vmatpush1.msra.mxu0 0.0
        %2535 = vmatprep.subr.mxu0 0.0
        %2536 = vmatpush1.msra.mxu0 0.0
        %2537 = vmatprep.subr.mxu0 0.0
        %2538 = vmatpush1.msra.mxu0 0.0
        %2539 = vmatprep.subr.mxu0 0.0
        %2540 = vmatpush1.msra.mxu0 0.0
        %2541 = vmatprep.subr.mxu0 0.0
        %2542 = vmatpush1.msra.mxu0 0.0
        %2543 = vmatprep.subr.mxu0 0.0
        %2544 = vmatpush1.msra.mxu0 %v2100
        %2545 = vmatprep.subr.mxu0 0.0
        %2546 = vmatpush2.msra.mxu0 0.0
        %2547 = vmatprep.subr.mxu0 0.0
        %2548 = vmatpush2.msra.mxu0 0.0
        %2549 = vmatprep.subr.mxu0 0.0
        %2550 = vmatpush2.msra.mxu0 0.0
        %2551 = vmatprep.subr.mxu0 0.0
        %2552 = vmatpush2.msra.mxu0 0.0
        %2553 = vmatprep.subr.mxu0 0.0
        %2554 = vmatpush2.msra.mxu0 0.0
        %2555 = vmatprep.subr.mxu0 0.0
        %2556 = vmatpush2.msra.mxu0 0.0
        %2557 = vmatprep.subr.mxu0 0.0
        %2558 = vmatpush2.msra.mxu0 0.0
        %2559 = vmatprep.subr.mxu0 0.0
        %2560 = vmatpush2.msra.mxu0 0.0
        %2561 = vmatprep.subr.mxu0 0.0
        %2562 = vmatpush2.msra.mxu0 0.0
        %2563 = vmatprep.subr.mxu0 0.0
        %2564 = vmatpush2.msra.mxu0 0.0
        %2565 = vmatprep.subr.mxu0 0.0
        %2566 = vmatpush2.msra.mxu0 0.0
        %2567 = vmatprep.subr.mxu0 0.0
        %2568 = vmatpush2.msra.mxu0 0.0
        %2569 = vmatprep.subr.mxu0 0.0
        %2570 = vmatpush2.msra.mxu0 0.0
        %2571 = vmatprep.subr.mxu0 0.0
        %2572 = vmatpush2.msra.mxu0 0.0
        %2573 = vmatprep.subr.mxu0 0.0
        %2574 = vmatpush2.msra.mxu0 0.0
        %2575 = vmatprep.subr.mxu0 0.0
        %2576 = vmatpush2.msra.mxu0 0.0
        %2577 = vmatprep.mubr.f32.mxu0 0.0
        %2578 = vmatmul.mubr.f32.gmra.mxu0 %v2511
        %v2579 = vpop.f32.mrf.mxu0
        %v2580 = vadd.f32 %v2507, %v2579
        %v2581 = vpop.f32.mrf.mxu0
        %2582 = vdwg.mxu0
        %2583 = vrot.lane.b32.xlu0 %v2096, 112
        %v2584 = vpop.permute.xlu0 %2583
        %2585 = vrot.lane.b32.xlu0 %v2096, 80
        %v2586 = vpop.permute.xlu0 %2585
        %v2587 = vsel %vm798, %v2584, 0
        %v2589 = vsel %vm798, %v2586, 0
        %2591 = vmatprep.subr.mxu0 0.0
        %2592 = vmatpush1.xpose.msra.mxu0 0.0
        %2593 = vmatprep.subr.mxu0 0.0
        %2594 = vmatpush1.xpose.msra.mxu0 0.0
        %2595 = vmatprep.subr.mxu0 0.0
        %2596 = vmatpush1.xpose.msra.mxu0 0.0
        %2597 = vmatprep.subr.mxu0 0.0
        %2598 = vmatpush1.xpose.msra.mxu0 0.0
        %2599 = vmatprep.subr.mxu0 0.0
        %2600 = vmatpush1.xpose.msra.mxu0 0.0
        %2601 = vmatprep.subr.mxu0 0.0
        %2602 = vmatpush1.xpose.msra.mxu0 0.0
        %2603 = vmatprep.subr.mxu0 0.0
        %2604 = vmatpush1.xpose.msra.mxu0 0.0
        %2605 = vmatprep.subr.mxu0 0.0
        %2606 = vmatpush1.xpose.msra.mxu0 0.0
        %2607 = vmatprep.subr.mxu0 0.0
        %2608 = vmatpush1.xpose.msra.mxu0 0.0
        %2609 = vmatprep.subr.mxu0 0.0
        %2610 = vmatpush1.xpose.msra.mxu0 0.0
        %2611 = vmatprep.subr.mxu0 0.0
        %2612 = vmatpush1.xpose.msra.mxu0 0.0
        %2613 = vmatprep.subr.mxu0 0.0
        %2614 = vmatpush1.xpose.msra.mxu0 0.0
        %2615 = vmatprep.subr.mxu0 0.0
        %2616 = vmatpush1.xpose.msra.mxu0 0.0
        %2617 = vmatprep.subr.mxu0 0.0
        %2618 = vmatpush1.xpose.msra.mxu0 0.0
        %2619 = vmatprep.subr.mxu0 0.0
        %2620 = vmatpush1.xpose.msra.mxu0 0.0
        %2621 = vmatprep.subr.mxu0 0.0
        %2622 = vmatpush1.xpose.msra.mxu0 %v2589
        %2623 = vmatprep.subr.mxu0 0.0
        %2624 = vmatpush2.xpose.msra.mxu0 0.0
        %2625 = vmatprep.subr.mxu0 0.0
        %2626 = vmatpush2.xpose.msra.mxu0 0.0
        %2627 = vmatprep.subr.mxu0 0.0
        %2628 = vmatpush2.xpose.msra.mxu0 0.0
        %2629 = vmatprep.subr.mxu0 0.0
        %2630 = vmatpush2.xpose.msra.mxu0 0.0
        %2631 = vmatprep.subr.mxu0 0.0
        %2632 = vmatpush2.xpose.msra.mxu0 0.0
        %2633 = vmatprep.subr.mxu0 0.0
        %2634 = vmatpush2.xpose.msra.mxu0 0.0
        %2635 = vmatprep.subr.mxu0 0.0
        %2636 = vmatpush2.xpose.msra.mxu0 0.0
        %2637 = vmatprep.subr.mxu0 0.0
        %2638 = vmatpush2.xpose.msra.mxu0 0.0
        %2639 = vmatprep.subr.mxu0 0.0
        %2640 = vmatpush2.xpose.msra.mxu0 0.0
        %2641 = vmatprep.subr.mxu0 0.0
        %2642 = vmatpush2.xpose.msra.mxu0 0.0
        %2643 = vmatprep.subr.mxu0 0.0
        %2644 = vmatpush2.xpose.msra.mxu0 0.0
        %2645 = vmatprep.subr.mxu0 0.0
        %2646 = vmatpush2.xpose.msra.mxu0 0.0
        %2647 = vmatprep.subr.mxu0 0.0
        %2648 = vmatpush2.xpose.msra.mxu0 0.0
        %2649 = vmatprep.subr.mxu0 0.0
        %2650 = vmatpush2.xpose.msra.mxu0 0.0
        %2651 = vmatprep.subr.mxu0 0.0
        %2652 = vmatpush2.xpose.msra.mxu0 0.0
        %2653 = vmatprep.subr.mxu0 0.0
        %2654 = vmatpush2.xpose.msra.mxu0 0.0
        %2655 = vmatprep.mubr.f32.mxu0 0.0
        %2656 = vmatmul.mubr.f32.gmra.mxu0 %v2587
        %v2657 = vpop.f32.mrf.mxu0
        %v2658 = vadd.f32 0.0, %v2657
        %v2659 = vpop.f32.mrf.mxu0
        %2660 = vdwg.mxu0
        %v2661 = vmul.f32 %v2658, 0.35355338
        %v2662 = vadd.f32 %v2661, %v878
        %v2663 = vsel %vm798, %v2662, -inf
        %2664 = vmax.xlane.f32.xlu0 %v2663
        %v2665 = vpop.xlane.xlu0 %2664
        %v2666 = vsub.f32 %v2662, %v2665
        %v2667 = vmul.f32 %v2666, 1.442695
        %v2668 = vpow.pop %v2667
        %v2669 = vsel %vm798, %v2668, 0.0
        %2670 = vadd.xlane.f32.xlu0 %v2669
        %v2671 = vpop.xlane.xlu0 %2670
        %v2672 = vrcp.pop %v2671
        %v2673 = vmul.f32 %v2668, %v2672
        %2674 = vrot.lane.b32.xlu0 %v2096, 48
        %v2675 = vpop.permute.xlu0 %2674
        %v2678 = vsel %vm798, %v2673, 0
        %2680 = vmatprep.subr.mxu0 0.0
        %2681 = vmatpush1.msra.mxu0 0.0
        %2682 = vmatprep.subr.mxu0 0.0
        %2683 = vmatpush1.msra.mxu0 0.0
        %2684 = vmatprep.subr.mxu0 0.0
        %2685 = vmatpush1.msra.mxu0 0.0
        %2686 = vmatprep.subr.mxu0 0.0
        %2687 = vmatpush1.msra.mxu0 0.0
        %2688 = vmatprep.subr.mxu0 0.0
        %2689 = vmatpush1.msra.mxu0 0.0
        %2690 = vmatprep.subr.mxu0 0.0
        %2691 = vmatpush1.msra.mxu0 0.0
        %2692 = vmatprep.subr.mxu0 0.0
        %2693 = vmatpush1.msra.mxu0 0.0
        %2694 = vmatprep.subr.mxu0 0.0
        %2695 = vmatpush1.msra.mxu0 0.0
        %2696 = vmatprep.subr.mxu0 0.0
        %2697 = vmatpush1.msra.mxu0 0.0
        %2698 = vmatprep.subr.mxu0 0.0
        %2699 = vmatpush1.msra.mxu0 0.0
        %2700 = vmatprep.subr.mxu0 0.0
        %2701 = vmatpush1.msra.mxu0 0.0
        %2702 = vmatprep.subr.mxu0 0.0
        %2703 = vmatpush1.msra.mxu0 0.0
        %2704 = vmatprep.subr.mxu0 0.0
        %2705 = vmatpush1.msra.mxu0 0.0
        %2706 = vmatprep.subr.mxu0 0.0
        %2707 = vmatpush1.msra.mxu0 0.0
        %2708 = vmatprep.subr.mxu0 0.0
        %2709 = vmatpush1.msra.mxu0 0.0
        %2710 = vmatprep.subr.mxu0 0.0
        %2711 = vmatpush1.msra.mxu0 %v2675
        %2712 = vmatprep.subr.mxu0 0.0
        %2713 = vmatpush2.msra.mxu0 0.0
        %2714 = vmatprep.subr.mxu0 0.0
        %2715 = vmatpush2.msra.mxu0 0.0
        %2716 = vmatprep.subr.mxu0 0.0
        %2717 = vmatpush2.msra.mxu0 0.0
        %2718 = vmatprep.subr.mxu0 0.0
        %2719 = vmatpush2.msra.mxu0 0.0
        %2720 = vmatprep.subr.mxu0 0.0
        %2721 = vmatpush2.msra.mxu0 0.0
        %2722 = vmatprep.subr.mxu0 0.0
        %2723 = vmatpush2.msra.mxu0 0.0
        %2724 = vmatprep.subr.mxu0 0.0
        %2725 = vmatpush2.msra.mxu0 0.0
        %2726 = vmatprep.subr.mxu0 0.0
        %2727 = vmatpush2.msra.mxu0 0.0
        %2728 = vmatprep.subr.mxu0 0.0
        %2729 = vmatpush2.msra.mxu0 0.0
        %2730 = vmatprep.subr.mxu0 0.0
        %2731 = vmatpush2.msra.mxu0 0.0
        %2732 = vmatprep.subr.mxu0 0.0
        %2733 = vmatpush2.msra.mxu0 0.0
        %2734 = vmatprep.subr.mxu0 0.0
        %2735 = vmatpush2.msra.mxu0 0.0
        %2736 = vmatprep.subr.mxu0 0.0
        %2737 = vmatpush2.msra.mxu0 0.0
        %2738 = vmatprep.subr.mxu0 0.0
        %2739 = vmatpush2.msra.mxu0 0.0
        %2740 = vmatprep.subr.mxu0 0.0
        %2741 = vmatpush2.msra.mxu0 0.0
        %2742 = vmatprep.subr.mxu0 0.0
        %2743 = vmatpush2.msra.mxu0 0.0
        %2744 = vmatprep.mubr.f32.mxu0 0.0
        %2745 = vmatmul.mubr.f32.gmra.mxu0 %v2678
        %v2746 = vpop.f32.mrf.mxu0
        %v2747 = vadd.f32 0.0, %v2746
        %v2748 = vpop.f32.mrf.mxu0
        %2749 = vdwg.mxu0
        %v2751 = vsel %vm798, %v2747, 0
        %2753 = vmatprep.subr.mxu0 0.0
        %2754 = vmatpush1.msra.mxu0 0.0
        %2755 = vmatprep.subr.mxu0 0.0
        %2756 = vmatpush1.msra.mxu0 0.0
        %2757 = vmatprep.subr.mxu0 0.0
        %2758 = vmatpush1.msra.mxu0 0.0
        %2759 = vmatprep.subr.mxu0 0.0
        %2760 = vmatpush1.msra.mxu0 0.0
        %2761 = vmatprep.subr.mxu0 0.0
        %2762 = vmatpush1.msra.mxu0 0.0
        %2763 = vmatprep.subr.mxu0 0.0
        %2764 = vmatpush1.msra.mxu0 0.0
        %2765 = vmatprep.subr.mxu0 0.0
        %2766 = vmatpush1.msra.mxu0 0.0
        %2767 = vmatprep.subr.mxu0 0.0
        %2768 = vmatpush1.msra.mxu0 0.0
        %2769 = vmatprep.subr.mxu0 0.0
        %2770 = vmatpush1.msra.mxu0 0.0
        %2771 = vmatprep.subr.mxu0 0.0
        %2772 = vmatpush1.msra.mxu0 0.0
        %2773 = vmatprep.subr.mxu0 0.0
        %2774 = vmatpush1.msra.mxu0 0.0
        %2775 = vmatprep.subr.mxu0 0.0
        %2776 = vmatpush1.msra.mxu0 0.0
        %2777 = vmatprep.subr.mxu0 0.0
        %2778 = vmatpush1.msra.mxu0 0.0
        %2779 = vmatprep.subr.mxu0 0.0
        %2780 = vmatpush1.msra.mxu0 0.0
        %2781 = vmatprep.subr.mxu0 0.0
        %2782 = vmatpush1.msra.mxu0 0.0
        %2783 = vmatprep.subr.mxu0 0.0
        %2784 = vmatpush1.msra.mxu0 %v2102
        %2785 = vmatprep.subr.mxu0 0.0
        %2786 = vmatpush2.msra.mxu0 0.0
        %2787 = vmatprep.subr.mxu0 0.0
        %2788 = vmatpush2.msra.mxu0 0.0
        %2789 = vmatprep.subr.mxu0 0.0
        %2790 = vmatpush2.msra.mxu0 0.0
        %2791 = vmatprep.subr.mxu0 0.0
        %2792 = vmatpush2.msra.mxu0 0.0
        %2793 = vmatprep.subr.mxu0 0.0
        %2794 = vmatpush2.msra.mxu0 0.0
        %2795 = vmatprep.subr.mxu0 0.0
        %2796 = vmatpush2.msra.mxu0 0.0
        %2797 = vmatprep.subr.mxu0 0.0
        %2798 = vmatpush2.msra.mxu0 0.0
        %2799 = vmatprep.subr.mxu0 0.0
        %2800 = vmatpush2.msra.mxu0 0.0
        %2801 = vmatprep.subr.mxu0 0.0
        %2802 = vmatpush2.msra.mxu0 0.0
        %2803 = vmatprep.subr.mxu0 0.0
        %2804 = vmatpush2.msra.mxu0 0.0
        %2805 = vmatprep.subr.mxu0 0.0
        %2806 = vmatpush2.msra.mxu0 0.0
        %2807 = vmatprep.subr.mxu0 0.0
        %2808 = vmatpush2.msra.mxu0 0.0
        %2809 = vmatprep.subr.mxu0 0.0
        %2810 = vmatpush2.msra.mxu0 0.0
        %2811 = vmatprep.subr.mxu0 0.0
        %2812 = vmatpush2.msra.mxu0 0.0
        %2813 = vmatprep.subr.mxu0 0.0
        %2814 = vmatpush2.msra.mxu0 0.0
        %2815 = vmatprep.subr.mxu0 0.0
        %2816 = vmatpush2.msra.mxu0 0.0
        %2817 = vmatprep.mubr.f32.mxu0 0.0
        %2818 = vmatmul.mubr.f32.gmra.mxu0 %v2751
        %v2819 = vpop.f32.mrf.mxu0
        %v2820 = vadd.f32 0.0, %v2819
        %v2821 = vpop.f32.mrf.mxu0
        %2822 = vdwg.mxu0
        %v2823 = vadd.f32 %v2580, %v2820
        %2824 = vrot.lane.b32.xlu0 %v2096, 104
        %v2825 = vpop.permute.xlu0 %2824
        %2826 = vrot.lane.b32.xlu0 %v2096, 72
        %v2827 = vpop.permute.xlu0 %2826
        %v2828 = vsel %vm798, %v2825, 0
        %v2830 = vsel %vm798, %v2827, 0
        %2832 = vmatprep.subr.mxu0 0.0
        %2833 = vmatpush1.xpose.msra.mxu0 0.0
        %2834 = vmatprep.subr.mxu0 0.0
        %2835 = vmatpush1.xpose.msra.mxu0 0.0
        %2836 = vmatprep.subr.mxu0 0.0
        %2837 = vmatpush1.xpose.msra.mxu0 0.0
        %2838 = vmatprep.subr.mxu0 0.0
        %2839 = vmatpush1.xpose.msra.mxu0 0.0
        %2840 = vmatprep.subr.mxu0 0.0
        %2841 = vmatpush1.xpose.msra.mxu0 0.0
        %2842 = vmatprep.subr.mxu0 0.0
        %2843 = vmatpush1.xpose.msra.mxu0 0.0
        %2844 = vmatprep.subr.mxu0 0.0
        %2845 = vmatpush1.xpose.msra.mxu0 0.0
        %2846 = vmatprep.subr.mxu0 0.0
        %2847 = vmatpush1.xpose.msra.mxu0 0.0
        %2848 = vmatprep.subr.mxu0 0.0
        %2849 = vmatpush1.xpose.msra.mxu0 0.0
        %2850 = vmatprep.subr.mxu0 0.0
        %2851 = vmatpush1.xpose.msra.mxu0 0.0
        %2852 = vmatprep.subr.mxu0 0.0
        %2853 = vmatpush1.xpose.msra.mxu0 0.0
        %2854 = vmatprep.subr.mxu0 0.0
        %2855 = vmatpush1.xpose.msra.mxu0 0.0
        %2856 = vmatprep.subr.mxu0 0.0
        %2857 = vmatpush1.xpose.msra.mxu0 0.0
        %2858 = vmatprep.subr.mxu0 0.0
        %2859 = vmatpush1.xpose.msra.mxu0 0.0
        %2860 = vmatprep.subr.mxu0 0.0
        %2861 = vmatpush1.xpose.msra.mxu0 0.0
        %2862 = vmatprep.subr.mxu0 0.0
        %2863 = vmatpush1.xpose.msra.mxu0 %v2830
        %2864 = vmatprep.subr.mxu0 0.0
        %2865 = vmatpush2.xpose.msra.mxu0 0.0
        %2866 = vmatprep.subr.mxu0 0.0
        %2867 = vmatpush2.xpose.msra.mxu0 0.0
        %2868 = vmatprep.subr.mxu0 0.0
        %2869 = vmatpush2.xpose.msra.mxu0 0.0
        %2870 = vmatprep.subr.mxu0 0.0
        %2871 = vmatpush2.xpose.msra.mxu0 0.0
        %2872 = vmatprep.subr.mxu0 0.0
        %2873 = vmatpush2.xpose.msra.mxu0 0.0
        %2874 = vmatprep.subr.mxu0 0.0
        %2875 = vmatpush2.xpose.msra.mxu0 0.0
        %2876 = vmatprep.subr.mxu0 0.0
        %2877 = vmatpush2.xpose.msra.mxu0 0.0
        %2878 = vmatprep.subr.mxu0 0.0
        %2879 = vmatpush2.xpose.msra.mxu0 0.0
        %2880 = vmatprep.subr.mxu0 0.0
        %2881 = vmatpush2.xpose.msra.mxu0 0.0
        %2882 = vmatprep.subr.mxu0 0.0
        %2883 = vmatpush2.xpose.msra.mxu0 0.0
        %2884 = vmatprep.subr.mxu0 0.0
        %2885 = vmatpush2.xpose.msra.mxu0 0.0
        %2886 = vmatprep.subr.mxu0 0.0
        %2887 = vmatpush2.xpose.msra.mxu0 0.0
        %2888 = vmatprep.subr.mxu0 0.0
        %2889 = vmatpush2.xpose.msra.mxu0 0.0
        %2890 = vmatprep.subr.mxu0 0.0
        %2891 = vmatpush2.xpose.msra.mxu0 0.0
        %2892 = vmatprep.subr.mxu0 0.0
        %2893 = vmatpush2.xpose.msra.mxu0 0.0
        %2894 = vmatprep.subr.mxu0 0.0
        %2895 = vmatpush2.xpose.msra.mxu0 0.0
        %2896 = vmatprep.mubr.f32.mxu0 0.0
        %2897 = vmatmul.mubr.f32.gmra.mxu0 %v2828
        %v2898 = vpop.f32.mrf.mxu0
        %v2899 = vadd.f32 0.0, %v2898
        %v2900 = vpop.f32.mrf.mxu0
        %2901 = vdwg.mxu0
        %v2902 = vmul.f32 %v2899, 0.35355338
        %v2903 = vadd.f32 %v2902, %v878
        %v2904 = vsel %vm798, %v2903, -inf
        %2905 = vmax.xlane.f32.xlu0 %v2904
        %v2906 = vpop.xlane.xlu0 %2905
        %v2907 = vsub.f32 %v2903, %v2906
        %v2908 = vmul.f32 %v2907, 1.442695
        %v2909 = vpow.pop %v2908
        %v2910 = vsel %vm798, %v2909, 0.0
        %2911 = vadd.xlane.f32.xlu0 %v2910
        %v2912 = vpop.xlane.xlu0 %2911
        %v2913 = vrcp.pop %v2912
        %v2914 = vmul.f32 %v2909, %v2913
        %2915 = vrot.lane.b32.xlu0 %v2096, 40
        %v2916 = vpop.permute.xlu0 %2915
        %v2919 = vsel %vm798, %v2914, 0
        %2921 = vmatprep.subr.mxu0 0.0
        %2922 = vmatpush1.msra.mxu0 0.0
        %2923 = vmatprep.subr.mxu0 0.0
        %2924 = vmatpush1.msra.mxu0 0.0
        %2925 = vmatprep.subr.mxu0 0.0
        %2926 = vmatpush1.msra.mxu0 0.0
        %2927 = vmatprep.subr.mxu0 0.0
        %2928 = vmatpush1.msra.mxu0 0.0
        %2929 = vmatprep.subr.mxu0 0.0
        %2930 = vmatpush1.msra.mxu0 0.0
        %2931 = vmatprep.subr.mxu0 0.0
        %2932 = vmatpush1.msra.mxu0 0.0
        %2933 = vmatprep.subr.mxu0 0.0
        %2934 = vmatpush1.msra.mxu0 0.0
        %2935 = vmatprep.subr.mxu0 0.0
        %2936 = vmatpush1.msra.mxu0 0.0
        %2937 = vmatprep.subr.mxu0 0.0
        %2938 = vmatpush1.msra.mxu0 0.0
        %2939 = vmatprep.subr.mxu0 0.0
        %2940 = vmatpush1.msra.mxu0 0.0
        %2941 = vmatprep.subr.mxu0 0.0
        %2942 = vmatpush1.msra.mxu0 0.0
        %2943 = vmatprep.subr.mxu0 0.0
        %2944 = vmatpush1.msra.mxu0 0.0
        %2945 = vmatprep.subr.mxu0 0.0
        %2946 = vmatpush1.msra.mxu0 0.0
        %2947 = vmatprep.subr.mxu0 0.0
        %2948 = vmatpush1.msra.mxu0 0.0
        %2949 = vmatprep.subr.mxu0 0.0
        %2950 = vmatpush1.msra.mxu0 0.0
        %2951 = vmatprep.subr.mxu0 0.0
        %2952 = vmatpush1.msra.mxu0 %v2916
        %2953 = vmatprep.subr.mxu0 0.0
        %2954 = vmatpush2.msra.mxu0 0.0
        %2955 = vmatprep.subr.mxu0 0.0
        %2956 = vmatpush2.msra.mxu0 0.0
        %2957 = vmatprep.subr.mxu0 0.0
        %2958 = vmatpush2.msra.mxu0 0.0
        %2959 = vmatprep.subr.mxu0 0.0
        %2960 = vmatpush2.msra.mxu0 0.0
        %2961 = vmatprep.subr.mxu0 0.0
        %2962 = vmatpush2.msra.mxu0 0.0
        %2963 = vmatprep.subr.mxu0 0.0
        %2964 = vmatpush2.msra.mxu0 0.0
        %2965 = vmatprep.subr.mxu0 0.0
        %2966 = vmatpush2.msra.mxu0 0.0
        %2967 = vmatprep.subr.mxu0 0.0
        %2968 = vmatpush2.msra.mxu0 0.0
        %2969 = vmatprep.subr.mxu0 0.0
        %2970 = vmatpush2.msra.mxu0 0.0
        %2971 = vmatprep.subr.mxu0 0.0
        %2972 = vmatpush2.msra.mxu0 0.0
        %2973 = vmatprep.subr.mxu0 0.0
        %2974 = vmatpush2.msra.mxu0 0.0
        %2975 = vmatprep.subr.mxu0 0.0
        %2976 = vmatpush2.msra.mxu0 0.0
        %2977 = vmatprep.subr.mxu0 0.0
        %2978 = vmatpush2.msra.mxu0 0.0
        %2979 = vmatprep.subr.mxu0 0.0
        %2980 = vmatpush2.msra.mxu0 0.0
        %2981 = vmatprep.subr.mxu0 0.0
        %2982 = vmatpush2.msra.mxu0 0.0
        %2983 = vmatprep.subr.mxu0 0.0
        %2984 = vmatpush2.msra.mxu0 0.0
        %2985 = vmatprep.mubr.f32.mxu0 0.0
        %2986 = vmatmul.mubr.f32.gmra.mxu0 %v2919
        %v2987 = vpop.f32.mrf.mxu0
        %v2988 = vadd.f32 0.0, %v2987
        %v2989 = vpop.f32.mrf.mxu0
        %2990 = vdwg.mxu0
        %v2992 = vsel %vm798, %v2988, 0
        %2994 = vmatprep.subr.mxu0 0.0
        %2995 = vmatpush1.msra.mxu0 0.0
        %2996 = vmatprep.subr.mxu0 0.0
        %2997 = vmatpush1.msra.mxu0 0.0
        %2998 = vmatprep.subr.mxu0 0.0
        %2999 = vmatpush1.msra.mxu0 0.0
        %3000 = vmatprep.subr.mxu0 0.0
        %3001 = vmatpush1.msra.mxu0 0.0
        %3002 = vmatprep.subr.mxu0 0.0
        %3003 = vmatpush1.msra.mxu0 0.0
        %3004 = vmatprep.subr.mxu0 0.0
        %3005 = vmatpush1.msra.mxu0 0.0
        %3006 = vmatprep.subr.mxu0 0.0
        %3007 = vmatpush1.msra.mxu0 0.0
        %3008 = vmatprep.subr.mxu0 0.0
        %3009 = vmatpush1.msra.mxu0 0.0
        %3010 = vmatprep.subr.mxu0 0.0
        %3011 = vmatpush1.msra.mxu0 0.0
        %3012 = vmatprep.subr.mxu0 0.0
        %3013 = vmatpush1.msra.mxu0 0.0
        %3014 = vmatprep.subr.mxu0 0.0
        %3015 = vmatpush1.msra.mxu0 0.0
        %3016 = vmatprep.subr.mxu0 0.0
        %3017 = vmatpush1.msra.mxu0 0.0
        %3018 = vmatprep.subr.mxu0 0.0
        %3019 = vmatpush1.msra.mxu0 0.0
        %3020 = vmatprep.subr.mxu0 0.0
        %3021 = vmatpush1.msra.mxu0 0.0
        %3022 = vmatprep.subr.mxu0 0.0
        %3023 = vmatpush1.msra.mxu0 0.0
        %3024 = vmatprep.subr.mxu0 0.0
        %3025 = vmatpush1.msra.mxu0 %v2103
        %3026 = vmatprep.subr.mxu0 0.0
        %3027 = vmatpush2.msra.mxu0 0.0
        %3028 = vmatprep.subr.mxu0 0.0
        %3029 = vmatpush2.msra.mxu0 0.0
        %3030 = vmatprep.subr.mxu0 0.0
        %3031 = vmatpush2.msra.mxu0 0.0
        %3032 = vmatprep.subr.mxu0 0.0
        %3033 = vmatpush2.msra.mxu0 0.0
        %3034 = vmatprep.subr.mxu0 0.0
        %3035 = vmatpush2.msra.mxu0 0.0
        %3036 = vmatprep.subr.mxu0 0.0
        %3037 = vmatpush2.msra.mxu0 0.0
        %3038 = vmatprep.subr.mxu0 0.0
        %3039 = vmatpush2.msra.mxu0 0.0
        %3040 = vmatprep.subr.mxu0 0.0
        %3041 = vmatpush2.msra.mxu0 0.0
        %3042 = vmatprep.subr.mxu0 0.0
        %3043 = vmatpush2.msra.mxu0 0.0
        %3044 = vmatprep.subr.mxu0 0.0
        %3045 = vmatpush2.msra.mxu0 0.0
        %3046 = vmatprep.subr.mxu0 0.0
        %3047 = vmatpush2.msra.mxu0 0.0
        %3048 = vmatprep.subr.mxu0 0.0
        %3049 = vmatpush2.msra.mxu0 0.0
        %3050 = vmatprep.subr.mxu0 0.0
        %3051 = vmatpush2.msra.mxu0 0.0
        %3052 = vmatprep.subr.mxu0 0.0
        %3053 = vmatpush2.msra.mxu0 0.0
        %3054 = vmatprep.subr.mxu0 0.0
        %3055 = vmatpush2.msra.mxu0 0.0
        %3056 = vmatprep.subr.mxu0 0.0
        %3057 = vmatpush2.msra.mxu0 0.0
        %3058 = vmatprep.mubr.f32.mxu0 0.0
        %3059 = vmatmul.mubr.f32.gmra.mxu0 %v2992
        %v3060 = vpop.f32.mrf.mxu0
        %v3061 = vadd.f32 0.0, %v3060
        %v3062 = vpop.f32.mrf.mxu0
        %3063 = vdwg.mxu0
        %v3064 = vadd.f32 %v2823, %v3061
        %v3065 = vadd.f32 %v2012, %v3064
        %s3066 = scalar_lea.vmem %s9, 1
        %v3067 = vld [vmem:[%s3066] sm:$0x1]
        %v3069 = vlaneseq
        %v3070 = vshrl.u32 %v3069, 7
        %v3071 = vsub.s32 0, %v3070
        %v3072 = vrot.slane %v3067, %v3071
        %v3074 = vadd.f32 %v3065, %v3072
        %s3075 = scalar_lea.vmem %s10, 1
        %v3076 = vld [vmem:[%s3075] sm:$0x1]
        %s3077 = scalar_lea.vmem %s11, 1
        %v3078 = vld [vmem:[%s3077] sm:$0x1]
        %v3079 = vsel %vm675, %v3074, 0.0
        %3080 = vadd.xlane.f32.xlu0 %v3079
        %v3081 = vpop.xlane.xlu0 %3080
        %v3082 = vmul.f32 %v3081, %v679
        %v3083 = vsub.f32 %v3074, %v3082
        %v3084 = vmul.f32 %v3083, %v3083
        %v3085 = vsel %vm675, %v3084, 0.0
        %3086 = vadd.xlane.f32.xlu0 %v3085
        %v3087 = vpop.xlane.xlu0 %3086
        %v3088 = vmul.f32 %v3087, %v679
        %v3089 = vadd.f32 %v3088, 1e-12
        %v3090 = vrsqrt.pop %v3089
        %v3091 = vmul.f32 %v3083, %v3090
        %v3093 = vlaneseq
        %v3094 = vshrl.u32 %v3093, 7
        %v3095 = vsub.s32 0, %v3094
        %v3096 = vrot.slane %v3076, %v3095
        %v3098 = vmul.f32 %v3091, %v3096
        %v3100 = vlaneseq
        %v3101 = vshrl.u32 %v3100, 7
        %v3102 = vsub.s32 0, %v3101
        %v3103 = vrot.slane %v3078, %v3102
        %v3105 = vadd.f32 %v3098, %v3103
        %s3106 = scalar_lea.vmem %s12, 32
        %v3107 = vld [vmem:[%s3106] sm:$0xff]
        %v3108 = vld [vmem:[%s3106 + $0x8] sm:$0xff]
        %v3109 = vld [vmem:[%s3106 + $0x10] sm:$0xff]
        %v3110 = vld [vmem:[%s3106 + $0x18] sm:$0xff]
        %s3111 = scalar_lea.vmem %s13, 1
        %v3112 = vld [vmem:[%s3111] sm:$0x1]
        %v3114 = vlaneseq
        %v3115 = vshrl.u32 %v3114, 7
        %v3116 = vsub.s32 0, %v3115
        %v3117 = vrot.slane %v3112, %v3116
        %v3120 = vsel %vm675, %v3105, 0
        %3122 = vmatprep.subr.mxu0 0.0
        %3123 = vmatpush1.msra.mxu0 0.0
        %3124 = vmatprep.subr.mxu0 0.0
        %3125 = vmatpush1.msra.mxu0 0.0
        %3126 = vmatprep.subr.mxu0 0.0
        %3127 = vmatpush1.msra.mxu0 0.0
        %3128 = vmatprep.subr.mxu0 0.0
        %3129 = vmatpush1.msra.mxu0 0.0
        %3130 = vmatprep.subr.mxu0 0.0
        %3131 = vmatpush1.msra.mxu0 0.0
        %3132 = vmatprep.subr.mxu0 0.0
        %3133 = vmatpush1.msra.mxu0 0.0
        %3134 = vmatprep.subr.mxu0 0.0
        %3135 = vmatpush1.msra.mxu0 0.0
        %3136 = vmatprep.subr.mxu0 0.0
        %3137 = vmatpush1.msra.mxu0 0.0
        %3138 = vmatprep.subr.mxu0 0.0
        %3139 = vmatpush1.msra.mxu0 0.0
        %3140 = vmatprep.subr.mxu0 0.0
        %3141 = vmatpush1.msra.mxu0 0.0
        %3142 = vmatprep.subr.mxu0 0.0
        %3143 = vmatpush1.msra.mxu0 0.0
        %3144 = vmatprep.subr.mxu0 0.0
        %3145 = vmatpush1.msra.mxu0 0.0
        %3146 = vmatprep.subr.mxu0 0.0
        %3147 = vmatpush1.msra.mxu0 %v3110
        %3148 = vmatprep.subr.mxu0 0.0
        %3149 = vmatpush1.msra.mxu0 %v3109
        %3150 = vmatprep.subr.mxu0 0.0
        %3151 = vmatpush1.msra.mxu0 %v3108
        %3152 = vmatprep.subr.mxu0 0.0
        %3153 = vmatpush1.msra.mxu0 %v3107
        %3154 = vmatprep.subr.mxu0 0.0
        %3155 = vmatpush2.msra.mxu0 0.0
        %3156 = vmatprep.subr.mxu0 0.0
        %3157 = vmatpush2.msra.mxu0 0.0
        %3158 = vmatprep.subr.mxu0 0.0
        %3159 = vmatpush2.msra.mxu0 0.0
        %3160 = vmatprep.subr.mxu0 0.0
        %3161 = vmatpush2.msra.mxu0 0.0
        %3162 = vmatprep.subr.mxu0 0.0
        %3163 = vmatpush2.msra.mxu0 0.0
        %3164 = vmatprep.subr.mxu0 0.0
        %3165 = vmatpush2.msra.mxu0 0.0
        %3166 = vmatprep.subr.mxu0 0.0
        %3167 = vmatpush2.msra.mxu0 0.0
        %3168 = vmatprep.subr.mxu0 0.0
        %3169 = vmatpush2.msra.mxu0 0.0
        %3170 = vmatprep.subr.mxu0 0.0
        %3171 = vmatpush2.msra.mxu0 0.0
        %3172 = vmatprep.subr.mxu0 0.0
        %3173 = vmatpush2.msra.mxu0 0.0
        %3174 = vmatprep.subr.mxu0 0.0
        %3175 = vmatpush2.msra.mxu0 0.0
        %3176 = vmatprep.subr.mxu0 0.0
        %3177 = vmatpush2.msra.mxu0 0.0
        %3178 = vmatprep.subr.mxu0 0.0
        %3179 = vmatpush2.msra.mxu0 0.0
        %3180 = vmatprep.subr.mxu0 0.0
        %3181 = vmatpush2.msra.mxu0 0.0
        %3182 = vmatprep.subr.mxu0 0.0
        %3183 = vmatpush2.msra.mxu0 0.0
        %3184 = vmatprep.subr.mxu0 0.0
        %3185 = vmatpush2.msra.mxu0 0.0
        %3186 = vmatprep.mubr.f32.mxu0 0.0
        %3187 = vmatmul.mubr.f32.gmra.mxu0 %v3120
        %v3188 = vpop.f32.mrf.mxu0
        %v3189 = vadd.f32 %v3117, %v3188
        %v3190 = vpop.f32.mrf.mxu0
        %3191 = vdwg.mxu0
        %v3192 = vmul.f32 %v3189, %v3189
        %v3193 = vmul.f32 %v3189, %v3192
        %v3194 = vmul.f32 %v3193, 0.044715
        %v3195 = vadd.f32 %v3189, %v3194
        %v3196 = vmul.f32 %v3195, 0.7978846
        %v3197 = vtanh.pop %v3196
        %v3198 = vadd.f32 %v3197, 1.0
        %v3199 = vmul.f32 %v3198, 0.5
        %v3200 = vmul.f32 %v3189, %v3199
        %s3201 = scalar_lea.vmem %s14, 64
        %v3202 = vld [vmem:[%s3201] sm:$0xff]
        %v3203 = vld [vmem:[%s3201 + $0x8] sm:$0xff]
        %v3204 = vld [vmem:[%s3201 + $0x10] sm:$0xff]
        %v3205 = vld [vmem:[%s3201 + $0x18] sm:$0xff]
        %v3206 = vld [vmem:[%s3201 + $0x20] sm:$0xff]
        %v3207 = vld [vmem:[%s3201 + $0x28] sm:$0xff]
        %v3208 = vld [vmem:[%s3201 + $0x30] sm:$0xff]
        %v3209 = vld [vmem:[%s3201 + $0x38] sm:$0xff]
        %s3210 = scalar_lea.vmem %s15, 1
        %v3211 = vld [vmem:[%s3210] sm:$0x1]
        %v3213 = vlaneseq
        %v3214 = vshrl.u32 %v3213, 7
        %v3215 = vsub.s32 0, %v3214
        %v3216 = vrot.slane %v3211, %v3215
        %v3219 = vsel %vm1909, %v3200, 0
        %3221 = vmatprep.subr.mxu0 0.0
        %3222 = vmatpush1.msra.mxu0 0.0
        %3223 = vmatprep.subr.mxu0 0.0
        %3224 = vmatpush1.msra.mxu0 0.0
        %3225 = vmatprep.subr.mxu0 0.0
        %3226 = vmatpush1.msra.mxu0 0.0
        %3227 = vmatprep.subr.mxu0 0.0
        %3228 = vmatpush1.msra.mxu0 0.0
        %3229 = vmatprep.subr.mxu0 0.0
        %3230 = vmatpush1.msra.mxu0 0.0
        %3231 = vmatprep.subr.mxu0 0.0
        %3232 = vmatpush1.msra.mxu0 0.0
        %3233 = vmatprep.subr.mxu0 0.0
        %3234 = vmatpush1.msra.mxu0 0.0
        %3235 = vmatprep.subr.mxu0 0.0
        %3236 = vmatpush1.msra.mxu0 0.0
        %3237 = vmatprep.subr.mxu0 0.0
        %3238 = vmatpush1.msra.mxu0 %v3209
        %3239 = vmatprep.subr.mxu0 0.0
        %3240 = vmatpush1.msra.mxu0 %v3208
        %3241 = vmatprep.subr.mxu0 0.0
        %3242 = vmatpush1.msra.mxu0 %v3207
        %3243 = vmatprep.subr.mxu0 0.0
        %3244 = vmatpush1.msra.mxu0 %v3206
        %3245 = vmatprep.subr.mxu0 0.0
        %3246 = vmatpush1.msra.mxu0 %v3205
        %3247 = vmatprep.subr.mxu0 0.0
        %3248 = vmatpush1.msra.mxu0 %v3204
        %3249 = vmatprep.subr.mxu0 0.0
        %3250 = vmatpush1.msra.mxu0 %v3203
        %3251 = vmatprep.subr.mxu0 0.0
        %3252 = vmatpush1.msra.mxu0 %v3202
        %3253 = vmatprep.subr.mxu0 0.0
        %3254 = vmatpush2.msra.mxu0 0.0
        %3255 = vmatprep.subr.mxu0 0.0
        %3256 = vmatpush2.msra.mxu0 0.0
        %3257 = vmatprep.subr.mxu0 0.0
        %3258 = vmatpush2.msra.mxu0 0.0
        %3259 = vmatprep.subr.mxu0 0.0
        %3260 = vmatpush2.msra.mxu0 0.0
        %3261 = vmatprep.subr.mxu0 0.0
        %3262 = vmatpush2.msra.mxu0 0.0
        %3263 = vmatprep.subr.mxu0 0.0
        %3264 = vmatpush2.msra.mxu0 0.0
        %3265 = vmatprep.subr.mxu0 0.0
        %3266 = vmatpush2.msra.mxu0 0.0
        %3267 = vmatprep.subr.mxu0 0.0
        %3268 = vmatpush2.msra.mxu0 0.0
        %3269 = vmatprep.subr.mxu0 0.0
        %3270 = vmatpush2.msra.mxu0 0.0
        %3271 = vmatprep.subr.mxu0 0.0
        %3272 = vmatpush2.msra.mxu0 0.0
        %3273 = vmatprep.subr.mxu0 0.0
        %3274 = vmatpush2.msra.mxu0 0.0
        %3275 = vmatprep.subr.mxu0 0.0
        %3276 = vmatpush2.msra.mxu0 0.0
        %3277 = vmatprep.subr.mxu0 0.0
        %3278 = vmatpush2.msra.mxu0 0.0
        %3279 = vmatprep.subr.mxu0 0.0
        %3280 = vmatpush2.msra.mxu0 0.0
        %3281 = vmatprep.subr.mxu0 0.0
        %3282 = vmatpush2.msra.mxu0 0.0
        %3283 = vmatprep.subr.mxu0 0.0
        %3284 = vmatpush2.msra.mxu0 0.0
        %3285 = vmatprep.mubr.f32.mxu0 0.0
        %3286 = vmatmul.mubr.f32.gmra.mxu0 %v3219
        %v3287 = vpop.f32.mrf.mxu0
        %v3288 = vadd.f32 %v3216, %v3287
        %v3289 = vpop.f32.mrf.mxu0
        %3290 = vdwg.mxu0
        %v3291 = vadd.f32 %v3105, %v3288
        %s3292 = scalar_lea.vmem %s16, 1
        %v3293 = vld [vmem:[%s3292] sm:$0x1]
        %s3294 = scalar_lea.vmem %s17, 1
        %v3295 = vld [vmem:[%s3294] sm:$0x1]
        %v3296 = vsel %vm675, %v3291, 0.0
        %3297 = vadd.xlane.f32.xlu0 %v3296
        %v3298 = vpop.xlane.xlu0 %3297
        %v3299 = vmul.f32 %v3298, %v679
        %v3300 = vsub.f32 %v3291, %v3299
        %v3301 = vmul.f32 %v3300, %v3300
        %v3302 = vsel %vm675, %v3301, 0.0
        %3303 = vadd.xlane.f32.xlu0 %v3302
        %v3304 = vpop.xlane.xlu0 %3303
        %v3305 = vmul.f32 %v3304, %v679
        %v3306 = vadd.f32 %v3305, 1e-12
        %v3307 = vrsqrt.pop %v3306
        %v3308 = vmul.f32 %v3300, %v3307
        %v3310 = vlaneseq
        %v3311 = vshrl.u32 %v3310, 7
        %v3312 = vsub.s32 0, %v3311
        %v3313 = vrot.slane %v3293, %v3312
        %v3315 = vmul.f32 %v3308, %v3313
        %v3317 = vlaneseq
        %v3318 = vshrl.u32 %v3317, 7
        %v3319 = vsub.s32 0, %v3318
        %v3320 = vrot.slane %v3295, %v3319
        %v3322 = vadd.f32 %v3315, %v3320
        %v3323 = vld [vmem:[%s667] sm:$0xff]
        %3325 = vset.pattern.permute.xlu0 0
        %3326 = vperm.xlu0 %3325, %v3323
        %v3327 = vpop.permute.xlu0 %3326
        %v3329 = vmul.f32 %v3322, %v3327
        %v3330 = vadd.f32 %v3329, 1.0
        %v3331 = vld [vmem:[%s671] sm:$0xff]
        %3333 = vset.pattern.permute.xlu0 0
        %3334 = vperm.xlu0 %3333, %v3331
        %v3335 = vpop.permute.xlu0 %3334
        %v3337 = vmul.f32 %v3322, %v3335
        %v3338 = vadd.f32 %v3337, 1.0
        %v3339 = vsel %vm675, %v3330, -inf
        %v3340 = vrot.slane %v3339, 4
        %v3341 = vmax.f32 %v3339, %v3340
        %v3342 = vrot.slane %v3341, 2
        %v3343 = vmax.f32 %v3341, %v3342
        %v3344 = vrot.slane %v3343, 1
        %v3345 = vmax.f32 %v3343, %v3344
        %v3346 = vsub.f32 %v3345, 1.0
        %v3347 = vsel %vm675, %v3338, -inf
        %v3348 = vrot.slane %v3347, 4
        %v3349 = vmax.f32 %v3347, %v3348
        %v3350 = vrot.slane %v3349, 2
        %v3351 = vmax.f32 %v3349, %v3350
        %v3352 = vrot.slane %v3351, 1
        %v3353 = vmax.f32 %v3351, %v3352
        %v3354 = vsub.f32 %v3353, 1.0
        %v3355 = vld [vmem:[%s18] sm:$0xff]
        %v3356 = vld [vmem:[%s18 + $0x8] sm:$0xff]
        %v3357 = vld [vmem:[%s18 + $0x10] sm:$0xff]
        %v3358 = vld [vmem:[%s18 + $0x18] sm:$0xff]
        %v3359 = vld [vmem:[%s18 + $0x20] sm:$0xff]
        %v3360 = vld [vmem:[%s18 + $0x28] sm:$0xff]
        %v3361 = vld [vmem:[%s18 + $0x30] sm:$0xff]
        %v3362 = vld [vmem:[%s18 + $0x38] sm:$0xff]
        %v3364 = vsel %vm675, %v3354, 0
        %3366 = vmatprep.subr.mxu0 0.0
        %3367 = vmatpush1.msra.mxu0 0.0
        %3368 = vmatprep.subr.mxu0 0.0
        %3369 = vmatpush1.msra.mxu0 0.0
        %3370 = vmatprep.subr.mxu0 0.0
        %3371 = vmatpush1.msra.mxu0 0.0
        %3372 = vmatprep.subr.mxu0 0.0
        %3373 = vmatpush1.msra.mxu0 0.0
        %3374 = vmatprep.subr.mxu0 0.0
        %3375 = vmatpush1.msra.mxu0 0.0
        %3376 = vmatprep.subr.mxu0 0.0
        %3377 = vmatpush1.msra.mxu0 0.0
        %3378 = vmatprep.subr.mxu0 0.0
        %3379 = vmatpush1.msra.mxu0 0.0
        %3380 = vmatprep.subr.mxu0 0.0
        %3381 = vmatpush1.msra.mxu0 0.0
        %3382 = vmatprep.subr.mxu0 0.0
        %3383 = vmatpush1.msra.mxu0 0.0
        %3384 = vmatprep.subr.mxu0 0.0
        %3385 = vmatpush1.msra.mxu0 0.0
        %3386 = vmatprep.subr.mxu0 0.0
        %3387 = vmatpush1.msra.mxu0 0.0
        %3388 = vmatprep.subr.mxu0 0.0
        %3389 = vmatpush1.msra.mxu0 0.0
        %3390 = vmatprep.subr.mxu0 0.0
        %3391 = vmatpush1.msra.mxu0 %v3362
        %3392 = vmatprep.subr.mxu0 0.0
        %3393 = vmatpush1.msra.mxu0 %v3361
        %3394 = vmatprep.subr.mxu0 0.0
        %3395 = vmatpush1.msra.mxu0 %v3360
        %3396 = vmatprep.subr.mxu0 0.0
        %3397 = vmatpush1.msra.mxu0 %v3359
        %3398 = vmatprep.subr.mxu0 0.0
        %3399 = vmatpush2.msra.mxu0 0.0
        %3400 = vmatprep.subr.mxu0 0.0
        %3401 = vmatpush2.msra.mxu0 0.0
        %3402 = vmatprep.subr.mxu0 0.0
        %3403 = vmatpush2.msra.mxu0 0.0
        %3404 = vmatprep.subr.mxu0 0.0
        %3405 = vmatpush2.msra.mxu0 0.0
        %3406 = vmatprep.subr.mxu0 0.0
        %3407 = vmatpush2.msra.mxu0 0.0
        %3408 = vmatprep.subr.mxu0 0.0
        %3409 = vmatpush2.msra.mxu0 0.0
        %3410 = vmatprep.subr.mxu0 0.0
        %3411 = vmatpush2.msra.mxu0 0.0
        %3412 = vmatprep.subr.mxu0 0.0
        %3413 = vmatpush2.msra.mxu0 0.0
        %3414 = vmatprep.subr.mxu0 0.0
        %3415 = vmatpush2.msra.mxu0 0.0
        %3416 = vmatprep.subr.mxu0 0.0
        %3417 = vmatpush2.msra.mxu0 0.0
        %3418 = vmatprep.subr.mxu0 0.0
        %3419 = vmatpush2.msra.mxu0 0.0
        %3420 = vmatprep.subr.mxu0 0.0
        %3421 = vmatpush2.msra.mxu0 0.0
        %3422 = vmatprep.subr.mxu0 0.0
        %3423 = vmatpush2.msra.mxu0 0.0
        %3424 = vmatprep.subr.mxu0 0.0
        %3425 = vmatpush2.msra.mxu0 0.0
        %3426 = vmatprep.subr.mxu0 0.0
        %3427 = vmatpush2.msra.mxu0 0.0
        %3428 = vmatprep.subr.mxu0 0.0
        %3429 = vmatpush2.msra.mxu0 0.0
        %3430 = vmatprep.mubr.f32.mxu0 0.0
        %3431 = vmatmul.mubr.f32.gmra.mxu0 %v3364
        %v3432 = vpop.f32.mrf.mxu0
        %v3433 = vadd.f32 0.0, %v3432
        %v3434 = vpop.f32.mrf.mxu0
        %3435 = vdwg.mxu0
        %v3437 = vsel %vm675, %v3346, 0
        %3439 = vmatprep.subr.mxu0 0.0
        %3440 = vmatpush1.msra.mxu0 0.0
        %3441 = vmatprep.subr.mxu0 0.0
        %3442 = vmatpush1.msra.mxu0 0.0
        %3443 = vmatprep.subr.mxu0 0.0
        %3444 = vmatpush1.msra.mxu0 0.0
        %3445 = vmatprep.subr.mxu0 0.0
        %3446 = vmatpush1.msra.mxu0 0.0
        %3447 = vmatprep.subr.mxu0 0.0
        %3448 = vmatpush1.msra.mxu0 0.0
        %3449 = vmatprep.subr.mxu0 0.0
        %3450 = vmatpush1.msra.mxu0 0.0
        %3451 = vmatprep.subr.mxu0 0.0
        %3452 = vmatpush1.msra.mxu0 0.0
        %3453 = vmatprep.subr.mxu0 0.0
        %3454 = vmatpush1.msra.mxu0 0.0
        %3455 = vmatprep.subr.mxu0 0.0
        %3456 = vmatpush1.msra.mxu0 0.0
        %3457 = vmatprep.subr.mxu0 0.0
        %3458 = vmatpush1.msra.mxu0 0.0
        %3459 = vmatprep.subr.mxu0 0.0
        %3460 = vmatpush1.msra.mxu0 0.0
        %3461 = vmatprep.subr.mxu0 0.0
        %3462 = vmatpush1.msra.mxu0 0.0
        %3463 = vmatprep.subr.mxu0 0.0
        %3464 = vmatpush1.msra.mxu0 %v3358
        %3465 = vmatprep.subr.mxu0 0.0
        %3466 = vmatpush1.msra.mxu0 %v3357
        %3467 = vmatprep.subr.mxu0 0.0
        %3468 = vmatpush1.msra.mxu0 %v3356
        %3469 = vmatprep.subr.mxu0 0.0
        %3470 = vmatpush1.msra.mxu0 %v3355
        %3471 = vmatprep.subr.mxu0 0.0
        %3472 = vmatpush2.msra.mxu0 0.0
        %3473 = vmatprep.subr.mxu0 0.0
        %3474 = vmatpush2.msra.mxu0 0.0
        %3475 = vmatprep.subr.mxu0 0.0
        %3476 = vmatpush2.msra.mxu0 0.0
        %3477 = vmatprep.subr.mxu0 0.0
        %3478 = vmatpush2.msra.mxu0 0.0
        %3479 = vmatprep.subr.mxu0 0.0
        %3480 = vmatpush2.msra.mxu0 0.0
        %3481 = vmatprep.subr.mxu0 0.0
        %3482 = vmatpush2.msra.mxu0 0.0
        %3483 = vmatprep.subr.mxu0 0.0
        %3484 = vmatpush2.msra.mxu0 0.0
        %3485 = vmatprep.subr.mxu0 0.0
        %3486 = vmatpush2.msra.mxu0 0.0
        %3487 = vmatprep.subr.mxu0 0.0
        %3488 = vmatpush2.msra.mxu0 0.0
        %3489 = vmatprep.subr.mxu0 0.0
        %3490 = vmatpush2.msra.mxu0 0.0
        %3491 = vmatprep.subr.mxu0 0.0
        %3492 = vmatpush2.msra.mxu0 0.0
        %3493 = vmatprep.subr.mxu0 0.0
        %3494 = vmatpush2.msra.mxu0 0.0
        %3495 = vmatprep.subr.mxu0 0.0
        %3496 = vmatpush2.msra.mxu0 0.0
        %3497 = vmatprep.subr.mxu0 0.0
        %3498 = vmatpush2.msra.mxu0 0.0
        %3499 = vmatprep.subr.mxu0 0.0
        %3500 = vmatpush2.msra.mxu0 0.0
        %3501 = vmatprep.subr.mxu0 0.0
        %3502 = vmatpush2.msra.mxu0 0.0
        %3503 = vmatprep.mubr.f32.mxu0 0.0
        %3504 = vmatmul.mubr.f32.gmra.mxu0 %v3437
        %v3505 = vpop.f32.mrf.mxu0
        %v3506 = vadd.f32 %v3433, %v3505
        %v3507 = vpop.f32.mrf.mxu0
        %3508 = vdwg.mxu0
        %v3509 = vld [vmem:[%s19] sm:$0x1]
        %v3510 = vadd.f32 %v3506, %v3509
        %vm3511 = vcmask 57344
        %v3512 = vsel %vm3511, %v3510, -inf
        %3513 = vmax.xlane.f32.xlu0 %v3512
        %v3514 = vpop.xlane.xlu0 %3513
        %v3515 = vsub.f32 %v3510, %v3514
        %v3516 = vmul.f32 %v3515, 1.442695
        %v3517 = vpow.pop %v3516
        %v3518 = vsel %vm3511, %v3517, 0.0
        %3519 = vadd.xlane.f32.xlu0 %v3518
        %v3520 = vpop.xlane.xlu0 %3519
        %v3521 = vrcp.pop %v3520
        %v3522 = vmul.f32 %v3517, %v3521
        %3523 = vst.msk [vmem:[%s656] sm:$0x1] %vm3511, %v3522
        %s3524 = sand.u32 %s482, 1
        %s3525 = scalar_lea.sflag [#allocation3], %s3524
        %s3526 = sand.u32 %s482, 1
        %s3527 = scalar_lea.vmem [#allocation2], %s3526
        // Predicated region
        $region101: #{discriminator_forward.1} parent=99 // pred_check
          %p3528 = pneg %p492
        $region102: #{discriminator_forward.1} parent=99 // pred_check_branch
          %3530 = sbr.rel (%p3528) target = $region104
        $region103: #{discriminator_forward.1} parent=99 // pred_region
          %s3532 = ssub.s32 16, 16
          %3533 = vsyncadd %s3525, %s3532
          %s3534 = smul.addr %s34, 16
          %s3535 = scalar_lea.hbm %s20, %s3534
          %s3537 = sshll.u32 %s3527, 4
          %s3538 = int_to_ptr.vmem [resolvable:$true] %s3537
          %3540 = dma.vmem_to_hbm [thread:$0]  %s3538, 16, %s3535, %s3525
        $region104: #{discriminator_forward.1} parent=99 // pred_fallthru
          _
      $region100: #{discriminator_forward.1} parent=5 // pred_fallthru
        _
      %p3541 = scmp.le.s32.totalorder 2, %s29
      // Predicated region
      $region105: #{discriminator_forward.1} parent=5 // pred_check
        %p3542 = pneg %p3541
      $region106: #{discriminator_forward.1} parent=5 // pred_check_branch
        %3544 = sbr.rel (%p3542) target = $region108
      $region107: #{discriminator_forward.1} parent=5 // pred_region
        %s3545 = ssub.s32 %s29, 2
        // Predicated region
        $region109: #{discriminator_forward.1} parent=107 // pred_check
          %p3546 = pneg %p498
        $region110: #{discriminator_forward.1} parent=107 // pred_check_branch
          %3548 = sbr.rel (%p3546) target = $region112
        $region111: #{discriminator_forward.1} parent=107 // pred_region
          %s3549 = sand.u32 %s483, 1
          %s3550 = scalar_lea.sflag [#allocation3], %s3549
          %s3551 = sand.u32 %s483, 1
          %s3552 = scalar_lea.vmem [#allocation2], %s3551
          %3553 = dma.done %s3550, 16
        $region112: #{discriminator_forward.1} parent=107 // pred_fallthru
          _
      $region108: #{discriminator_forward.1} parent=5 // pred_fallthru
        _
    $region6: #{discriminator_forward.1} parent=1 // loop_footer
      %s33 = sadd.s32 1, %s29
    $region7: #{discriminator_forward.1} parent=1 // loop_footer_branch
      %28 = sbr.rel target = $region3
    $region8: #{discriminator_forward.1} parent=1 // loop_exit
      _
    %3554 = vsyncpa [#allocation3], 1
    %s3555 = scalar_lea.sflag [#allocation3], 1
    %3556 = vsyncpa %s3555, 1

</llo_original>
